<compile_context>
chip_gen: v5e
topology: v5e:2x2
jax: 0.10.0
libtpu: 0.0.40
codegen_flags: <defaults>
</compile_context>

<pallas_src>
import functools

import jax
import jax.numpy as jnp
from jax import lax
from jax.experimental import pallas as pl
from jax.experimental.pallas import tpu as pltpu

T_SPIKE = 4.0
BN_EPS = 1e-5


def _spike(x):
    # eval-mode MultiSpike_norm4: round(clamp(x, 0, 4)) / 4
    return jnp.round(jnp.clip(x, 0.0, T_SPIKE)) * (1.0 / T_SPIKE)


# ---------------------------------------------------------------------------
# Kernel 1: SepConv_Spike branch (+ residual), one batch image per grid step.
#   spike1 -> pwconv1+BN -> spike2 -> dwconv3x3+BN -> spike3 -> pwconv2+BN -> +x
# The 3x3 depthwise conv (padding=1) is done on the flat (N, Cm) activation
# via a zero-padded VMEM scratch + 9 shifted taps; row-wrap columns are masked
# with an iota-based column mask, so no HBM pad pass and no scatter ops.
# ---------------------------------------------------------------------------
def _sepconv_kernel(x_ref, w1_ref, b1_ref, wd_ref, sd_ref, bd_ref,
                    w2_ref, b2_ref, o_ref, hp_ref, *, H, W):
    N = H * W
    x = x_ref[0]                                                    # (N, C) f32

    # spike1 + pwconv1 (+ folded BN)  -- bf16 activations on the MXU
    xs = _spike(x).astype(jnp.bfloat16)
    h1 = jnp.dot(xs, w1_ref[...], preferred_element_type=jnp.float32) + b1_ref[...]
    h1 = _spike(h1)                                                 # (N, Cm), spike2

    # depthwise 3x3 conv, padding=1: VMEM-only halo.
    pad = W + 1
    hp_ref[...] = jnp.zeros_like(hp_ref)
    hp_ref[pad:pad + N, :] = h1
    wd = wd_ref[...]                                                # (3, 3, Cm)
    col = lax.broadcasted_iota(jnp.int32, (N, 1), 0) % W            # column of each token
    acc = jnp.zeros(h1.shape, jnp.float32)
    for ky in range(3):
        for kx in range(3):
            sx = kx - 1
            start = ky * W + kx                  # == pad + (ky-1)*W + (kx-1)
            tap = hp_ref[start:start + N, :]
            if sx != 0:                          # mask columns that wrapped rows
                valid = (col + sx >= 0) & (col + sx < W)
                tap = jnp.where(valid, tap, 0.0)
            acc = acc + tap * wd[ky, kx]
    h2 = acc * sd_ref[...] + bd_ref[...]         # folded dwconv BN

    # spike3 + pwconv2 (+ folded BN); residual folded into the epilogue write
    h2s = _spike(h2).astype(jnp.bfloat16)
    y = jnp.dot(h2s, w2_ref[...], preferred_element_type=jnp.float32) + b2_ref[...]
    o_ref[0] = (x + y).astype(o_ref.dtype)


def sepconv_block(x, p, *, H, W):
    B, N, C = x.shape
    Cm = p['pw1_w'].shape[1]
    kernel = functools.partial(_sepconv_kernel, H=H, W=W)
    return pl.pallas_call(
        kernel,
        out_shape=jax.ShapeDtypeStruct((B, N, C), jnp.float32),
        grid_spec=pltpu.PrefetchScalarGridSpec(
            num_scalar_prefetch=0,
            grid=(B,),
            in_specs=[
                pl.BlockSpec((1, N, C), lambda b: (b, 0, 0)),
                pl.BlockSpec((C, Cm), lambda b: (0, 0)),
                pl.BlockSpec((1, Cm), lambda b: (0, 0)),
                pl.BlockSpec((3, 3, Cm), lambda b: (0, 0, 0)),
                pl.BlockSpec((1, Cm), lambda b: (0, 0)),
                pl.BlockSpec((1, Cm), lambda b: (0, 0)),
                pl.BlockSpec((Cm, C), lambda b: (0, 0)),
                pl.BlockSpec((1, C), lambda b: (0, 0)),
            ],
            out_specs=pl.BlockSpec((1, N, C), lambda b: (b, 0, 0)),
            scratch_shapes=[pltpu.VMEM((N + 2 * W + 2, Cm), jnp.float32)],
        ),
        compiler_params=pltpu.CompilerParams(dimension_semantics=("parallel",)),
    )(x, p['pw1_w'], p['pw1_b'], p['dw_w'], p['dw_s'], p['dw_b'],
      p['pw2_w'], p['pw2_b'])


# ---------------------------------------------------------------------------
# Kernel 2: MS_Attention_linear branch (+ residual), one batch per grid step.
# q/k/v convs fused into a single (C, 6C) matmul; linear attention uses
# associativity  (q k^T) v == q (k^T v)  so the contraction runs over N and
# the N x N matrix never exists.
# ---------------------------------------------------------------------------
def _attn_kernel(x_ref, wqkv_ref, bqkv_ref, wproj_ref, bproj_ref,
                 o_ref, qkv_ref, a_ref, *, num_heads, scale2):
    x = x_ref[0]                                                    # (N, C) f32
    C = x.shape[-1]
    Cv = a_ref.shape[-1]
    Ch = C // num_heads
    Cvh = Cv // num_heads

    # head_spike + fused q/k/v 1x1 convs (+ folded BN): one read of x, one matmul
    xs = _spike(x).astype(jnp.bfloat16)
    qkv_ref[...] = jnp.dot(xs, wqkv_ref[...],
                           preferred_element_type=jnp.float32) + bqkv_ref[...]

    # per-head spiking linear attention (tiny dots, kept in f32)
    for h in range(num_heads):
        qh = _spike(qkv_ref[:, h * Ch:(h + 1) * Ch])                # (N, Ch)
        kh = _spike(qkv_ref[:, C + h * Ch:C + (h + 1) * Ch])        # (N, Ch)
        vh = _spike(qkv_ref[:, 2 * C + h * Cvh:2 * C + (h + 1) * Cvh])  # (N, Cvh)
        kv = jnp.dot(kh.T, vh, preferred_element_type=jnp.float32)  # (Ch, Cvh)
        ah = jnp.dot(qh, kv, preferred_element_type=jnp.float32) * scale2
        a_ref[:, h * Cvh:(h + 1) * Cvh] = _spike(ah)                # attn_spike

    # proj conv (+ folded BN); residual folded into the epilogue write
    proj = jnp.dot(a_ref[...].astype(jnp.bfloat16), wproj_ref[...],
                   preferred_element_type=jnp.float32) + bproj_ref[...]
    o_ref[0] = (x + proj).astype(o_ref.dtype)


def attention_block(x, p, *, num_heads, scale2):
    B, N, C = x.shape
    C6 = p['qkv_w'].shape[1]
    Cv = p['proj_w'].shape[0]
    kernel = functools.partial(_attn_kernel, num_heads=num_heads, scale2=scale2)
    return pl.pallas_call(
        kernel,
        out_shape=jax.ShapeDtypeStruct((B, N, C), jnp.float32),
        grid_spec=pltpu.PrefetchScalarGridSpec(
            num_scalar_prefetch=0,
            grid=(B,),
            in_specs=[
                pl.BlockSpec((1, N, C), lambda b: (b, 0, 0)),
                pl.BlockSpec((C, C6), lambda b: (0, 0)),
                pl.BlockSpec((1, C6), lambda b: (0, 0)),
                pl.BlockSpec((Cv, C), lambda b: (0, 0)),
                pl.BlockSpec((1, C), lambda b: (0, 0)),
            ],
            out_specs=pl.BlockSpec((1, N, C), lambda b: (b, 0, 0)),
            scratch_shapes=[pltpu.VMEM((N, C6), jnp.float32),
                            pltpu.VMEM((N, Cv), jnp.float32)],
        ),
        compiler_params=pltpu.CompilerParams(dimension_semantics=("parallel",)),
    )(x, p['qkv_w'], p['qkv_b'], p['proj_w'], p['proj_b'])


# ---------------------------------------------------------------------------
# Kernel 3: MS_MLP branch (+ residual), token-tiled; the (tm, 4C) hidden
# activation never round-trips HBM.
# ---------------------------------------------------------------------------
def _mlp_kernel(x_ref, w1_ref, b1_ref, w2_ref, b2_ref, o_ref):
    x = x_ref[...]                                                  # (tm, C) f32
    h = jnp.dot(_spike(x).astype(jnp.bfloat16), w1_ref[...],
                preferred_element_type=jnp.float32) + b1_ref[...]
    y = jnp.dot(_spike(h).astype(jnp.bfloat16), w2_ref[...],
                preferred_element_type=jnp.float32) + b2_ref[...]
    o_ref[...] = (x + y).astype(o_ref.dtype)


def mlp_block(x, p, *, tm=512):
    M, C = x.shape
    Hd = p['fc1_w'].shape[1]
    tm = min(tm, M)
    grid = (pl.cdiv(M, tm),)   # partial last tile handled by masked block writes
    return pl.pallas_call(
        _mlp_kernel,
        out_shape=jax.ShapeDtypeStruct((M, C), jnp.float32),
        grid_spec=pltpu.PrefetchScalarGridSpec(
            num_scalar_prefetch=0,
            grid=grid,
            in_specs=[
                pl.BlockSpec((tm, C), lambda i: (i, 0)),
                pl.BlockSpec((C, Hd), lambda i: (0, 0)),
                pl.BlockSpec((1, Hd), lambda i: (0, 0)),
                pl.BlockSpec((Hd, C), lambda i: (0, 0)),
                pl.BlockSpec((1, C), lambda i: (0, 0)),
            ],
            out_specs=pl.BlockSpec((tm, C), lambda i: (i, 0)),
        ),
        compiler_params=pltpu.CompilerParams(dimension_semantics=("parallel",)),
    )(x, p['fc1_w'], p['fc1_b'], p['fc2_w'], p['fc2_b'])


# ---------------------------------------------------------------------------
# Deterministic parameter construction + BatchNorm folding (plain JAX glue)
# ---------------------------------------------------------------------------
def _bn_params(key, ch):
    k1, k2, k3, k4 = jax.random.split(key, 4)
    gamma = 1.0 + 0.1 * jax.random.normal(k1, (ch,), jnp.float32)
    beta = 0.1 * jax.random.normal(k2, (ch,), jnp.float32)
    mean = 0.1 * jax.random.normal(k3, (ch,), jnp.float32)
    var = 0.5 + 0.5 * jnp.abs(jax.random.normal(k4, (ch,), jnp.float32))
    return gamma, beta, mean, var


def _fold_1x1(w_oi, conv_bias, bn):
    """Fold 1x1 Conv + BatchNorm into (Cin, Cout) weight and (1, Cout) bias."""
    gamma, beta, mean, var = bn
    scale = gamma / jnp.sqrt(var + BN_EPS)
    wt = (w_oi * scale[:, None]).T                                  # (Cin, Cout)
    cb = conv_bias if conv_bias is not None else 0.0
    b = ((cb - mean) * scale + beta)[None, :]                       # (1, Cout)
    return wt.astype(jnp.float32), b.astype(jnp.float32)


def init_params(key, dim):
    med = 2 * dim          # SepConv expansion_ratio=2
    c_v = 4 * dim          # attention lamda_ratio=4
    hidden = 4 * dim       # mlp_ratio=4
    ks = iter(jax.random.split(key, 32))

    def cw(cout, cin):
        return 0.1 * jax.random.normal(next(ks), (cout, cin), jnp.float32)

    p = {}
    # --- SepConv_Spike (kernel_size=3, padding=1, bias=False) ---
    w, b = _fold_1x1(cw(med, dim), None, _bn_params(next(ks), med))
    p['pw1_w'], p['pw1_b'] = w.astype(jnp.bfloat16), b
    dw = 0.1 * jax.random.normal(next(ks), (med, 3, 3), jnp.float32)
    p['dw_w'] = jnp.transpose(dw, (1, 2, 0))                        # (3, 3, med)
    g, be, m, v = _bn_params(next(ks), med)
    s = g / jnp.sqrt(v + BN_EPS)
    p['dw_s'] = s.reshape(1, med)
    p['dw_b'] = (be - m * s).reshape(1, med)
    w, b = _fold_1x1(cw(dim, med), None, _bn_params(next(ks), dim))
    p['pw2_w'], p['pw2_b'] = w.astype(jnp.bfloat16), b
    # --- MS_Attention_linear: q/k/v fused into one (dim, 6*dim) matmul ---
    wq, bq = _fold_1x1(cw(dim, dim), None, _bn_params(next(ks), dim))
    wk, bk = _fold_1x1(cw(dim, dim), None, _bn_params(next(ks), dim))
    wv, bv = _fold_1x1(cw(c_v, dim), None, _bn_params(next(ks), c_v))
    p['qkv_w'] = jnp.concatenate([wq, wk, wv], axis=1).astype(jnp.bfloat16)
    p['qkv_b'] = jnp.concatenate([bq, bk, bv], axis=1)
    w, b = _fold_1x1(cw(dim, c_v), None, _bn_params(next(ks), dim))
    p['proj_w'], p['proj_b'] = w.astype(jnp.bfloat16), b
    # --- MS_MLP (Conv1d bias=True) ---
    w, b = _fold_1x1(cw(hidden, dim),
                     0.1 * jax.random.normal(next(ks), (hidden,), jnp.float32),
                     _bn_params(next(ks), hidden))
    p['fc1_w'], p['fc1_b'] = w.astype(jnp.bfloat16), b
    w, b = _fold_1x1(cw(dim, hidden),
                     0.1 * jax.random.normal(next(ks), (dim,), jnp.float32),
                     _bn_params(next(ks), dim))
    p['fc2_w'], p['fc2_b'] = w.astype(jnp.bfloat16), b
    return p


# ---------------------------------------------------------------------------
# Full block forward: x = x + SepConv(x); x = x + Attn(x); x = x + MLP(x)
# (residual adds happen inside the kernels)
# ---------------------------------------------------------------------------
def ms_block_spike_sepconv(x_nchw, params, *, num_heads):
    B, C, H, W = x_nchw.shape
    N = H * W
    scale2 = 2.0 * float(C // num_heads) ** (-0.5)

    x = jnp.transpose(x_nchw, (0, 2, 3, 1)).reshape(B, N, C).astype(jnp.float32)
    x1 = sepconv_block(x, params, H=H, W=W)                          # + residual inside
    x2 = attention_block(x1, params, num_heads=num_heads, scale2=scale2)
    x3 = mlp_block(x2.reshape(B * N, C), params)
    return x3.reshape(B, H, W, C).transpose(0, 3, 1, 2)              # back to NCHW


if __name__ == "__main__":
    key = jax.random.PRNGKey(0)
    kx, kp = jax.random.split(key)
    B, C, H, W = 2, 32, 8, 8          # dim=32, num_heads=4 -> head_dim=8, N=64
    num_heads = 4
    x = jax.random.normal(kx, (B, C, H, W), jnp.float32)
    params = init_params(kp, C)

    fwd = jax.jit(functools.partial(ms_block_spike_sepconv, num_heads=num_heads))
    out = fwd(x, params)
    jax.block_until_ready(out)
    assert out.shape == (B, C, H, W) and out.dtype == jnp.float32
    print("KERNEL_OK")
</pallas_src>

<mosaic_0001>
module attributes {stable_mosaic.version = 11 : i64} {
  func.func @_sepconv_kernel(%arg0: i32, %arg1: memref<1x64x32xf32, #tpu.memory_space<vmem>>, %arg2: memref<32x64xbf16, #tpu.memory_space<vmem>>, %arg3: memref<1x64xf32, #tpu.memory_space<vmem>>, %arg4: memref<3x3x64xf32, #tpu.memory_space<vmem>>, %arg5: memref<1x64xf32, #tpu.memory_space<vmem>>, %arg6: memref<1x64xf32, #tpu.memory_space<vmem>>, %arg7: memref<64x32xbf16, #tpu.memory_space<vmem>>, %arg8: memref<1x32xf32, #tpu.memory_space<vmem>>, %arg9: memref<1x64x32xf32, #tpu.memory_space<vmem>>, %arg10: memref<82x64xf32, #tpu.memory_space<vmem>>) attributes {dimension_semantics = [#tpu.dimension_semantics<parallel>], iteration_bounds = array<i64: 2>, scalar_prefetch = 0 : i64, scratch_operands = 1 : i64, tpu.core_type = #tpu.core_type<tc>, window_params = [{transform_indices = @transform_0, window_bounds = array<i64: 1, 64, 32>}, {pipeline_mode = #tpu.pipeline_mode<synchronous>, transform_indices = @transform_1, window_bounds = array<i64: 32, 64>}, {pipeline_mode = #tpu.pipeline_mode<synchronous>, transform_indices = @transform_2, window_bounds = array<i64: 1, 64>}, {pipeline_mode = #tpu.pipeline_mode<synchronous>, transform_indices = @transform_3, window_bounds = array<i64: 3, 3, 64>}, {pipeline_mode = #tpu.pipeline_mode<synchronous>, transform_indices = @transform_4, window_bounds = array<i64: 1, 64>}, {pipeline_mode = #tpu.pipeline_mode<synchronous>, transform_indices = @transform_5, window_bounds = array<i64: 1, 64>}, {pipeline_mode = #tpu.pipeline_mode<synchronous>, transform_indices = @transform_6, window_bounds = array<i64: 64, 32>}, {pipeline_mode = #tpu.pipeline_mode<synchronous>, transform_indices = @transform_7, window_bounds = array<i64: 1, 32>}, {transform_indices = @transform_8, window_bounds = array<i64: 1, 64, 32>}]} {
    %c0 = arith.constant 0 : index
    %c0_0 = arith.constant 0 : index
    %c0_1 = arith.constant 0 : index
    %0 = vector.load %arg1[%c0, %c0_0, %c0_1] : memref<1x64x32xf32, #tpu.memory_space<vmem>>, vector<1x64x32xf32>
    %1 = vector.shape_cast %0 : vector<1x64x32xf32> to vector<64x32xf32>
    %cst = arith.constant 0.000000e+00 : f32
    %cst_2 = arith.constant 4.000000e+00 : f32
    %2 = vector.broadcast %cst : f32 to vector<64x32xf32>
    %3 = arith.maximumf %2, %1 : vector<64x32xf32>
    %4 = vector.broadcast %cst_2 : f32 to vector<64x32xf32>
    %5 = arith.minimumf %4, %3 : vector<64x32xf32>
    %6 = math.roundeven %5 : vector<64x32xf32>
    %cst_3 = arith.constant 2.500000e-01 : f32
    %7 = vector.broadcast %cst_3 : f32 to vector<64x32xf32>
    %8 = arith.mulf %6, %7 : vector<64x32xf32>
    %9 = arith.truncf %8 : vector<64x32xf32> to vector<64x32xbf16>
    %c0_4 = arith.constant 0 : index
    %c0_5 = arith.constant 0 : index
    %10 = vector.load %arg2[%c0_4, %c0_5] : memref<32x64xbf16, #tpu.memory_space<vmem>>, vector<32x64xbf16>
    %cst_6 = arith.constant dense<0.000000e+00> : vector<64x64xf32>
    %11 = tpu.matmul %9, %10, %cst_6 {dimension_numbers = #tpu.dot_dimension_numbers<[1], [0], [0], [1], [0, 0, 1, 1], [], []>} : vector<64x32xbf16>, vector<32x64xbf16>, vector<64x64xf32> -> vector<64x64xf32>
    %c0_7 = arith.constant 0 : index
    %c0_8 = arith.constant 0 : index
    %12 = vector.load %arg3[%c0_7, %c0_8] : memref<1x64xf32, #tpu.memory_space<vmem>>, vector<1x64xf32>
    %13 = vector.broadcast %12 : vector<1x64xf32> to vector<64x64xf32>
    %14 = arith.addf %11, %13 : vector<64x64xf32>
    %cst_9 = arith.constant 0.000000e+00 : f32
    %cst_10 = arith.constant 4.000000e+00 : f32
    %15 = vector.broadcast %cst_9 : f32 to vector<64x64xf32>
    %16 = arith.maximumf %15, %14 : vector<64x64xf32>
    %17 = vector.broadcast %cst_10 : f32 to vector<64x64xf32>
    %18 = arith.minimumf %17, %16 : vector<64x64xf32>
    %19 = math.roundeven %18 : vector<64x64xf32>
    %cst_11 = arith.constant 2.500000e-01 : f32
    %20 = vector.broadcast %cst_11 : f32 to vector<64x64xf32>
    %21 = arith.mulf %19, %20 : vector<64x64xf32>
    %cst_12 = arith.constant 0.000000e+00 : f32
    %22 = vector.broadcast %cst_12 : f32 to vector<82x64xf32>
    %c0_13 = arith.constant 0 : index
    %c0_14 = arith.constant 0 : index
    %23 = vector.load %arg10[%c0_13, %c0_14] : memref<82x64xf32, #tpu.memory_space<vmem>>, vector<82x64xf32>
    tpu.vector_store %arg10[%c0_13, %c0_14], %22 {strides = array<i32>} : memref<82x64xf32, #tpu.memory_space<vmem>>, vector<82x64xf32>,
    %c9 = arith.constant 9 : index
    %c0_15 = arith.constant 0 : index
    %24 = vector.load %arg10[%c9, %c0_15] : memref<82x64xf32, #tpu.memory_space<vmem>>, vector<64x64xf32>
    tpu.vector_store %arg10[%c9, %c0_15], %21 {strides = array<i32>} : memref<82x64xf32, #tpu.memory_space<vmem>>, vector<64x64xf32>,
    %c0_16 = arith.constant 0 : index
    %c0_17 = arith.constant 0 : index
    %c0_18 = arith.constant 0 : index
    %25 = vector.load %arg4[%c0_16, %c0_17, %c0_18] : memref<3x3x64xf32, #tpu.memory_space<vmem>>, vector<3x3x64xf32>
    %26 = tpu.iota {dimensions = array<i32: 0>} : vector<64x1xi32>
    %c8_i32 = arith.constant 8 : i32
    %c0_i32 = arith.constant 0 : i32
    %27 = arith.cmpi eq, %c8_i32, %c0_i32 : i32
    %c1_i32 = arith.constant 1 : i32
    %28 = arith.select %27, %c1_i32, %c8_i32 : i32
    %29 = vector.broadcast %28 : i32 to vector<64x1xi32>
    %30 = arith.remsi %26, %29 : vector<64x1xi32>
    %c0_i32_19 = arith.constant 0 : i32
    %31 = vector.broadcast %c0_i32_19 : i32 to vector<64x1xi32>
    %32 = arith.cmpi ne, %30, %31 : vector<64x1xi32>
    %c0_i32_20 = arith.constant 0 : i32
    %33 = vector.broadcast %c0_i32_20 : i32 to vector<64x1xi32>
    %34 = arith.cmpi slt, %30, %33 : vector<64x1xi32>
    %c0_i32_21 = arith.constant 0 : i32
    %35 = arith.cmpi slt, %28, %c0_i32_21 : i32
    %36 = vector.broadcast %35 : i1 to vector<64x1xi1>
    %37 = vector.broadcast %36 : vector<64x1xi1> to vector<64x1xi1>
    %38 = arith.xori %34, %37 : vector<64x1xi1>
    %39 = arith.andi %38, %32 : vector<64x1xi1>
    %40 = vector.broadcast %28 : i32 to vector<64x1xi32>
    %41 = arith.addi %30, %40 : vector<64x1xi32>
    %42 = arith.select %39, %41, %30 : vector<64x1xi1>, vector<64x1xi32>
    %cst_22 = arith.constant 0.000000e+00 : f32
    %43 = vector.broadcast %cst_22 : f32 to vector<64x64xf32>
    %c0_23 = arith.constant 0 : index
    %c0_24 = arith.constant 0 : index
    %44 = vector.load %arg10[%c0_23, %c0_24] : memref<82x64xf32, #tpu.memory_space<vmem>>, vector<64x64xf32>
    %c-1_i32 = arith.constant -1 : i32
    %45 = vector.broadcast %c-1_i32 : i32 to vector<64x1xi32>
    %46 = arith.addi %42, %45 : vector<64x1xi32>
    %c0_i32_25 = arith.constant 0 : i32
    %47 = vector.broadcast %c0_i32_25 : i32 to vector<64x1xi32>
    %48 = arith.cmpi sge, %46, %47 : vector<64x1xi32>
    %c-1_i32_26 = arith.constant -1 : i32
    %49 = vector.broadcast %c-1_i32_26 : i32 to vector<64x1xi32>
    %50 = arith.addi %42, %49 : vector<64x1xi32>
    %c8_i32_27 = arith.constant 8 : i32
    %51 = vector.broadcast %c8_i32_27 : i32 to vector<64x1xi32>
    %52 = arith.cmpi slt, %50, %51 : vector<64x1xi32>
    %53 = arith.andi %48, %52 : vector<64x1xi1>
    %cst_28 = arith.constant 0.000000e+00 : f32
    %54 = vector.shape_cast %53 : vector<64x1xi1> to vector<64x1xi1>
    %55 = vector.broadcast %54 : vector<64x1xi1> to vector<64x64xi1>
    %56 = vector.broadcast %cst_28 : f32 to vector<64x64xf32>
    %57 = arith.select %55, %44, %56 : vector<64x64xi1>, vector<64x64xf32>
    %58 = vector.extract_strided_slice %25 {offsets = [0, 0, 0], sizes = [1, 1, 64], strides = [1, 1, 1]} : vector<3x3x64xf32> to vector<1x1x64xf32>
    %59 = vector.shape_cast %58 : vector<1x1x64xf32> to vector<64xf32>
    %60 = vector.shape_cast %59 : vector<64xf32> to vector<1x64xf32>
    %61 = vector.broadcast %60 : vector<1x64xf32> to vector<64x64xf32>
    %62 = arith.mulf %57, %61 : vector<64x64xf32>
    %63 = arith.addf %43, %62 : vector<64x64xf32>
    %c1 = arith.constant 1 : index
    %c0_29 = arith.constant 0 : index
    %64 = vector.load %arg10[%c1, %c0_29] : memref<82x64xf32, #tpu.memory_space<vmem>>, vector<64x64xf32>
    %65 = vector.extract_strided_slice %25 {offsets = [0, 1, 0], sizes = [1, 1, 64], strides = [1, 1, 1]} : vector<3x3x64xf32> to vector<1x1x64xf32>
    %66 = vector.shape_cast %65 : vector<1x1x64xf32> to vector<64xf32>
    %67 = vector.shape_cast %66 : vector<64xf32> to vector<1x64xf32>
    %68 = vector.broadcast %67 : vector<1x64xf32> to vector<64x64xf32>
    %69 = arith.mulf %64, %68 : vector<64x64xf32>
    %70 = arith.addf %63, %69 : vector<64x64xf32>
    %c2 = arith.constant 2 : index
    %c0_30 = arith.constant 0 : index
    %71 = vector.load %arg10[%c2, %c0_30] : memref<82x64xf32, #tpu.memory_space<vmem>>, vector<64x64xf32>
    %c1_i32_31 = arith.constant 1 : i32
    %72 = vector.broadcast %c1_i32_31 : i32 to vector<64x1xi32>
    %73 = arith.addi %42, %72 : vector<64x1xi32>
    %c0_i32_32 = arith.constant 0 : i32
    %74 = vector.broadcast %c0_i32_32 : i32 to vector<64x1xi32>
    %75 = arith.cmpi sge, %73, %74 : vector<64x1xi32>
    %c1_i32_33 = arith.constant 1 : i32
    %76 = vector.broadcast %c1_i32_33 : i32 to vector<64x1xi32>
    %77 = arith.addi %42, %76 : vector<64x1xi32>
    %c8_i32_34 = arith.constant 8 : i32
    %78 = vector.broadcast %c8_i32_34 : i32 to vector<64x1xi32>
    %79 = arith.cmpi slt, %77, %78 : vector<64x1xi32>
    %80 = arith.andi %75, %79 : vector<64x1xi1>
    %cst_35 = arith.constant 0.000000e+00 : f32
    %81 = vector.shape_cast %80 : vector<64x1xi1> to vector<64x1xi1>
    %82 = vector.broadcast %81 : vector<64x1xi1> to vector<64x64xi1>
    %83 = vector.broadcast %cst_35 : f32 to vector<64x64xf32>
    %84 = arith.select %82, %71, %83 : vector<64x64xi1>, vector<64x64xf32>
    %85 = vector.extract_strided_slice %25 {offsets = [0, 2, 0], sizes = [1, 1, 64], strides = [1, 1, 1]} : vector<3x3x64xf32> to vector<1x1x64xf32>
    %86 = vector.shape_cast %85 : vector<1x1x64xf32> to vector<64xf32>
    %87 = vector.shape_cast %86 : vector<64xf32> to vector<1x64xf32>
    %88 = vector.broadcast %87 : vector<1x64xf32> to vector<64x64xf32>
    %89 = arith.mulf %84, %88 : vector<64x64xf32>
    %90 = arith.addf %70, %89 : vector<64x64xf32>
    %c8 = arith.constant 8 : index
    %c0_36 = arith.constant 0 : index
    %91 = vector.load %arg10[%c8, %c0_36] : memref<82x64xf32, #tpu.memory_space<vmem>>, vector<64x64xf32>
    %c-1_i32_37 = arith.constant -1 : i32
    %92 = vector.broadcast %c-1_i32_37 : i32 to vector<64x1xi32>
    %93 = arith.addi %42, %92 : vector<64x1xi32>
    %c0_i32_38 = arith.constant 0 : i32
    %94 = vector.broadcast %c0_i32_38 : i32 to vector<64x1xi32>
    %95 = arith.cmpi sge, %93, %94 : vector<64x1xi32>
    %c-1_i32_39 = arith.constant -1 : i32
    %96 = vector.broadcast %c-1_i32_39 : i32 to vector<64x1xi32>
    %97 = arith.addi %42, %96 : vector<64x1xi32>
    %c8_i32_40 = arith.constant 8 : i32
    %98 = vector.broadcast %c8_i32_40 : i32 to vector<64x1xi32>
    %99 = arith.cmpi slt, %97, %98 : vector<64x1xi32>
    %100 = arith.andi %95, %99 : vector<64x1xi1>
    %cst_41 = arith.constant 0.000000e+00 : f32
    %101 = vector.shape_cast %100 : vector<64x1xi1> to vector<64x1xi1>
    %102 = vector.broadcast %101 : vector<64x1xi1> to vector<64x64xi1>
    %103 = vector.broadcast %cst_41 : f32 to vector<64x64xf32>
    %104 = arith.select %102, %91, %103 : vector<64x64xi1>, vector<64x64xf32>
    %105 = vector.extract_strided_slice %25 {offsets = [1, 0, 0], sizes = [1, 1, 64], strides = [1, 1, 1]} : vector<3x3x64xf32> to vector<1x1x64xf32>
    %106 = vector.shape_cast %105 : vector<1x1x64xf32> to vector<64xf32>
    %107 = vector.shape_cast %106 : vector<64xf32> to vector<1x64xf32>
    %108 = vector.broadcast %107 : vector<1x64xf32> to vector<64x64xf32>
    %109 = arith.mulf %104, %108 : vector<64x64xf32>
    %110 = arith.addf %90, %109 : vector<64x64xf32>
    %c9_42 = arith.constant 9 : index
    %c0_43 = arith.constant 0 : index
    %111 = vector.load %arg10[%c9_42, %c0_43] : memref<82x64xf32, #tpu.memory_space<vmem>>, vector<64x64xf32>
    %112 = vector.extract_strided_slice %25 {offsets = [1, 1, 0], sizes = [1, 1, 64], strides = [1, 1, 1]} : vector<3x3x64xf32> to vector<1x1x64xf32>
    %113 = vector.shape_cast %112 : vector<1x1x64xf32> to vector<64xf32>
    %114 = vector.shape_cast %113 : vector<64xf32> to vector<1x64xf32>
    %115 = vector.broadcast %114 : vector<1x64xf32> to vector<64x64xf32>
    %116 = arith.mulf %111, %115 : vector<64x64xf32>
    %117 = arith.addf %110, %116 : vector<64x64xf32>
    %c10 = arith.constant 10 : index
    %c0_44 = arith.constant 0 : index
    %118 = vector.load %arg10[%c10, %c0_44] : memref<82x64xf32, #tpu.memory_space<vmem>>, vector<64x64xf32>
    %c1_i32_45 = arith.constant 1 : i32
    %119 = vector.broadcast %c1_i32_45 : i32 to vector<64x1xi32>
    %120 = arith.addi %42, %119 : vector<64x1xi32>
    %c0_i32_46 = arith.constant 0 : i32
    %121 = vector.broadcast %c0_i32_46 : i32 to vector<64x1xi32>
    %122 = arith.cmpi sge, %120, %121 : vector<64x1xi32>
    %c1_i32_47 = arith.constant 1 : i32
    %123 = vector.broadcast %c1_i32_47 : i32 to vector<64x1xi32>
    %124 = arith.addi %42, %123 : vector<64x1xi32>
    %c8_i32_48 = arith.constant 8 : i32
    %125 = vector.broadcast %c8_i32_48 : i32 to vector<64x1xi32>
    %126 = arith.cmpi slt, %124, %125 : vector<64x1xi32>
    %127 = arith.andi %122, %126 : vector<64x1xi1>
    %cst_49 = arith.constant 0.000000e+00 : f32
    %128 = vector.shape_cast %127 : vector<64x1xi1> to vector<64x1xi1>
    %129 = vector.broadcast %128 : vector<64x1xi1> to vector<64x64xi1>
    %130 = vector.broadcast %cst_49 : f32 to vector<64x64xf32>
    %131 = arith.select %129, %118, %130 : vector<64x64xi1>, vector<64x64xf32>
    %132 = vector.extract_strided_slice %25 {offsets = [1, 2, 0], sizes = [1, 1, 64], strides = [1, 1, 1]} : vector<3x3x64xf32> to vector<1x1x64xf32>
    %133 = vector.shape_cast %132 : vector<1x1x64xf32> to vector<64xf32>
    %134 = vector.shape_cast %133 : vector<64xf32> to vector<1x64xf32>
    %135 = vector.broadcast %134 : vector<1x64xf32> to vector<64x64xf32>
    %136 = arith.mulf %131, %135 : vector<64x64xf32>
    %137 = arith.addf %117, %136 : vector<64x64xf32>
    %c16 = arith.constant 16 : index
    %c0_50 = arith.constant 0 : index
    %138 = vector.load %arg10[%c16, %c0_50] : memref<82x64xf32, #tpu.memory_space<vmem>>, vector<64x64xf32>
    %c-1_i32_51 = arith.constant -1 : i32
    %139 = vector.broadcast %c-1_i32_51 : i32 to vector<64x1xi32>
    %140 = arith.addi %42, %139 : vector<64x1xi32>
    %c0_i32_52 = arith.constant 0 : i32
    %141 = vector.broadcast %c0_i32_52 : i32 to vector<64x1xi32>
    %142 = arith.cmpi sge, %140, %141 : vector<64x1xi32>
    %c-1_i32_53 = arith.constant -1 : i32
    %143 = vector.broadcast %c-1_i32_53 : i32 to vector<64x1xi32>
    %144 = arith.addi %42, %143 : vector<64x1xi32>
    %c8_i32_54 = arith.constant 8 : i32
    %145 = vector.broadcast %c8_i32_54 : i32 to vector<64x1xi32>
    %146 = arith.cmpi slt, %144, %145 : vector<64x1xi32>
    %147 = arith.andi %142, %146 : vector<64x1xi1>
    %cst_55 = arith.constant 0.000000e+00 : f32
    %148 = vector.shape_cast %147 : vector<64x1xi1> to vector<64x1xi1>
    %149 = vector.broadcast %148 : vector<64x1xi1> to vector<64x64xi1>
    %150 = vector.broadcast %cst_55 : f32 to vector<64x64xf32>
    %151 = arith.select %149, %138, %150 : vector<64x64xi1>, vector<64x64xf32>
    %152 = vector.extract_strided_slice %25 {offsets = [2, 0, 0], sizes = [1, 1, 64], strides = [1, 1, 1]} : vector<3x3x64xf32> to vector<1x1x64xf32>
    %153 = vector.shape_cast %152 : vector<1x1x64xf32> to vector<64xf32>
    %154 = vector.shape_cast %153 : vector<64xf32> to vector<1x64xf32>
    %155 = vector.broadcast %154 : vector<1x64xf32> to vector<64x64xf32>
    %156 = arith.mulf %151, %155 : vector<64x64xf32>
    %157 = arith.addf %137, %156 : vector<64x64xf32>
    %c17 = arith.constant 17 : index
    %c0_56 = arith.constant 0 : index
    %158 = vector.load %arg10[%c17, %c0_56] : memref<82x64xf32, #tpu.memory_space<vmem>>, vector<64x64xf32>
    %159 = vector.extract_strided_slice %25 {offsets = [2, 1, 0], sizes = [1, 1, 64], strides = [1, 1, 1]} : vector<3x3x64xf32> to vector<1x1x64xf32>
    %160 = vector.shape_cast %159 : vector<1x1x64xf32> to vector<64xf32>
    %161 = vector.shape_cast %160 : vector<64xf32> to vector<1x64xf32>
    %162 = vector.broadcast %161 : vector<1x64xf32> to vector<64x64xf32>
    %163 = arith.mulf %158, %162 : vector<64x64xf32>
    %164 = arith.addf %157, %163 : vector<64x64xf32>
    %c18 = arith.constant 18 : index
    %c0_57 = arith.constant 0 : index
    %165 = vector.load %arg10[%c18, %c0_57] : memref<82x64xf32, #tpu.memory_space<vmem>>, vector<64x64xf32>
    %c1_i32_58 = arith.constant 1 : i32
    %166 = vector.broadcast %c1_i32_58 : i32 to vector<64x1xi32>
    %167 = arith.addi %42, %166 : vector<64x1xi32>
    %c0_i32_59 = arith.constant 0 : i32
    %168 = vector.broadcast %c0_i32_59 : i32 to vector<64x1xi32>
    %169 = arith.cmpi sge, %167, %168 : vector<64x1xi32>
    %c1_i32_60 = arith.constant 1 : i32
    %170 = vector.broadcast %c1_i32_60 : i32 to vector<64x1xi32>
    %171 = arith.addi %42, %170 : vector<64x1xi32>
    %c8_i32_61 = arith.constant 8 : i32
    %172 = vector.broadcast %c8_i32_61 : i32 to vector<64x1xi32>
    %173 = arith.cmpi slt, %171, %172 : vector<64x1xi32>
    %174 = arith.andi %169, %173 : vector<64x1xi1>
    %cst_62 = arith.constant 0.000000e+00 : f32
    %175 = vector.shape_cast %174 : vector<64x1xi1> to vector<64x1xi1>
    %176 = vector.broadcast %175 : vector<64x1xi1> to vector<64x64xi1>
    %177 = vector.broadcast %cst_62 : f32 to vector<64x64xf32>
    %178 = arith.select %176, %165, %177 : vector<64x64xi1>, vector<64x64xf32>
    %179 = vector.extract_strided_slice %25 {offsets = [2, 2, 0], sizes = [1, 1, 64], strides = [1, 1, 1]} : vector<3x3x64xf32> to vector<1x1x64xf32>
    %180 = vector.shape_cast %179 : vector<1x1x64xf32> to vector<64xf32>
    %181 = vector.shape_cast %180 : vector<64xf32> to vector<1x64xf32>
    %182 = vector.broadcast %181 : vector<1x64xf32> to vector<64x64xf32>
    %183 = arith.mulf %178, %182 : vector<64x64xf32>
    %184 = arith.addf %164, %183 : vector<64x64xf32>
    %c0_63 = arith.constant 0 : index
    %c0_64 = arith.constant 0 : index
    %185 = vector.load %arg5[%c0_63, %c0_64] : memref<1x64xf32, #tpu.memory_space<vmem>>, vector<1x64xf32>
    %186 = vector.broadcast %185 : vector<1x64xf32> to vector<64x64xf32>
    %187 = arith.mulf %184, %186 : vector<64x64xf32>
    %c0_65 = arith.constant 0 : index
    %c0_66 = arith.constant 0 : index
    %188 = vector.load %arg6[%c0_65, %c0_66] : memref<1x64xf32, #tpu.memory_space<vmem>>, vector<1x64xf32>
    %189 = vector.broadcast %188 : vector<1x64xf32> to vector<64x64xf32>
    %190 = arith.addf %187, %189 : vector<64x64xf32>
    %cst_67 = arith.constant 0.000000e+00 : f32
    %cst_68 = arith.constant 4.000000e+00 : f32
    %191 = vector.broadcast %cst_67 : f32 to vector<64x64xf32>
    %192 = arith.maximumf %191, %190 : vector<64x64xf32>
    %193 = vector.broadcast %cst_68 : f32 to vector<64x64xf32>
    %194 = arith.minimumf %193, %192 : vector<64x64xf32>
    %195 = math.roundeven %194 : vector<64x64xf32>
    %cst_69 = arith.constant 2.500000e-01 : f32
    %196 = vector.broadcast %cst_69 : f32 to vector<64x64xf32>
    %197 = arith.mulf %195, %196 : vector<64x64xf32>
    %198 = arith.truncf %197 : vector<64x64xf32> to vector<64x64xbf16>
    %c0_70 = arith.constant 0 : index
    %c0_71 = arith.constant 0 : index
    %199 = vector.load %arg7[%c0_70, %c0_71] : memref<64x32xbf16, #tpu.memory_space<vmem>>, vector<64x32xbf16>
    %cst_72 = arith.constant dense<0.000000e+00> : vector<64x32xf32>
    %200 = tpu.matmul %198, %199, %cst_72 {dimension_numbers = #tpu.dot_dimension_numbers<[1], [0], [0], [1], [0, 0, 1, 1], [], []>} : vector<64x64xbf16>, vector<64x32xbf16>, vector<64x32xf32> -> vector<64x32xf32>
    %c0_73 = arith.constant 0 : index
    %c0_74 = arith.constant 0 : index
    %201 = vector.load %arg8[%c0_73, %c0_74] : memref<1x32xf32, #tpu.memory_space<vmem>>, vector<1x32xf32>
    %202 = vector.broadcast %201 : vector<1x32xf32> to vector<64x32xf32>
    %203 = arith.addf %200, %202 : vector<64x32xf32>
    %204 = arith.addf %1, %203 : vector<64x32xf32>
    %c0_75 = arith.constant 0 : index
    %c0_76 = arith.constant 0 : index
    %c0_77 = arith.constant 0 : index
    %205 = vector.load %arg9[%c0_75, %c0_76, %c0_77] : memref<1x64x32xf32, #tpu.memory_space<vmem>>, vector<1x64x32xf32>
    %206 = vector.shape_cast %205 : vector<1x64x32xf32> to vector<64x32xf32>
    %207 = vector.shape_cast %204 : vector<64x32xf32> to vector<1x64x32xf32>
    tpu.vector_store %arg9[%c0_75, %c0_76, %c0_77], %207 {strides = array<i32>} : memref<1x64x32xf32, #tpu.memory_space<vmem>>, vector<1x64x32xf32>,
    return
  }
  func.func @transform_0(%arg0: i32) -> (i32, i32, i32) {
    %c0_i32 = arith.constant 0 : i32
    %c0_i32_0 = arith.constant 0 : i32
    %c0_i32_1 = arith.constant 0 : i32
    return %arg0, %c0_i32, %c0_i32_0 : i32, i32, i32
  }
  func.func @transform_1(%arg0: i32) -> (i32, i32) {
    %c0_i32 = arith.constant 0 : i32
    %c0_i32_0 = arith.constant 0 : i32
    %c0_i32_1 = arith.constant 0 : i32
    return %c0_i32, %c0_i32_0 : i32, i32
  }
  func.func @transform_2(%arg0: i32) -> (i32, i32) {
    %c0_i32 = arith.constant 0 : i32
    %c0_i32_0 = arith.constant 0 : i32
    %c0_i32_1 = arith.constant 0 : i32
    return %c0_i32, %c0_i32_0 : i32, i32
  }
  func.func @transform_3(%arg0: i32) -> (i32, i32, i32) {
    %c0_i32 = arith.constant 0 : i32
    %c0_i32_0 = arith.constant 0 : i32
    %c0_i32_1 = arith.constant 0 : i32
    %c0_i32_2 = arith.constant 0 : i32
    return %c0_i32, %c0_i32_0, %c0_i32_1 : i32, i32, i32
  }
  func.func @transform_4(%arg0: i32) -> (i32, i32) {
    %c0_i32 = arith.constant 0 : i32
    %c0_i32_0 = arith.constant 0 : i32
    %c0_i32_1 = arith.constant 0 : i32
    return %c0_i32, %c0_i32_0 : i32, i32
  }
  func.func @transform_5(%arg0: i32) -> (i32, i32) {
    %c0_i32 = arith.constant 0 : i32
    %c0_i32_0 = arith.constant 0 : i32
    %c0_i32_1 = arith.constant 0 : i32
    return %c0_i32, %c0_i32_0 : i32, i32
  }
  func.func @transform_6(%arg0: i32) -> (i32, i32) {
    %c0_i32 = arith.constant 0 : i32
    %c0_i32_0 = arith.constant 0 : i32
    %c0_i32_1 = arith.constant 0 : i32
    return %c0_i32, %c0_i32_0 : i32, i32
  }
  func.func @transform_7(%arg0: i32) -> (i32, i32) {
    %c0_i32 = arith.constant 0 : i32
    %c0_i32_0 = arith.constant 0 : i32
    %c0_i32_1 = arith.constant 0 : i32
    return %c0_i32, %c0_i32_0 : i32, i32
  }
  func.func @transform_8(%arg0: i32) -> (i32, i32, i32) {
    %c0_i32 = arith.constant 0 : i32
    %c0_i32_0 = arith.constant 0 : i32
    %c0_i32_1 = arith.constant 0 : i32
    return %arg0, %c0_i32, %c0_i32_0 : i32, i32, i32
  }
}

module attributes {stable_mosaic.version = 11 : i64} {
  func.func @_attn_kernel(%arg0: i32, %arg1: memref<1x64x32xf32, #tpu.memory_space<vmem>>, %arg2: memref<32x192xbf16, #tpu.memory_space<vmem>>, %arg3: memref<1x192xf32, #tpu.memory_space<vmem>>, %arg4: memref<128x32xbf16, #tpu.memory_space<vmem>>, %arg5: memref<1x32xf32, #tpu.memory_space<vmem>>, %arg6: memref<1x64x32xf32, #tpu.memory_space<vmem>>, %arg7: memref<64x192xf32, #tpu.memory_space<vmem>>, %arg8: memref<64x128xf32, #tpu.memory_space<vmem>>) attributes {dimension_semantics = [#tpu.dimension_semantics<parallel>], iteration_bounds = array<i64: 2>, scalar_prefetch = 0 : i64, scratch_operands = 2 : i64, tpu.core_type = #tpu.core_type<tc>, window_params = [{transform_indices = @transform_0, window_bounds = array<i64: 1, 64, 32>}, {pipeline_mode = #tpu.pipeline_mode<synchronous>, transform_indices = @transform_1, window_bounds = array<i64: 32, 192>}, {pipeline_mode = #tpu.pipeline_mode<synchronous>, transform_indices = @transform_2, window_bounds = array<i64: 1, 192>}, {pipeline_mode = #tpu.pipeline_mode<synchronous>, transform_indices = @transform_3, window_bounds = array<i64: 128, 32>}, {pipeline_mode = #tpu.pipeline_mode<synchronous>, transform_indices = @transform_4, window_bounds = array<i64: 1, 32>}, {transform_indices = @transform_5, window_bounds = array<i64: 1, 64, 32>}]} {
    %c0 = arith.constant 0 : index
    %c0_0 = arith.constant 0 : index
    %c0_1 = arith.constant 0 : index
    %0 = vector.load %arg1[%c0, %c0_0, %c0_1] : memref<1x64x32xf32, #tpu.memory_space<vmem>>, vector<1x64x32xf32>
    %1 = vector.shape_cast %0 : vector<1x64x32xf32> to vector<64x32xf32>
    %cst = arith.constant 0.000000e+00 : f32
    %cst_2 = arith.constant 4.000000e+00 : f32
    %2 = vector.broadcast %cst : f32 to vector<64x32xf32>
    %3 = arith.maximumf %2, %1 : vector<64x32xf32>
    %4 = vector.broadcast %cst_2 : f32 to vector<64x32xf32>
    %5 = arith.minimumf %4, %3 : vector<64x32xf32>
    %6 = math.roundeven %5 : vector<64x32xf32>
    %cst_3 = arith.constant 2.500000e-01 : f32
    %7 = vector.broadcast %cst_3 : f32 to vector<64x32xf32>
    %8 = arith.mulf %6, %7 : vector<64x32xf32>
    %9 = arith.truncf %8 : vector<64x32xf32> to vector<64x32xbf16>
    %c0_4 = arith.constant 0 : index
    %c0_5 = arith.constant 0 : index
    %10 = vector.load %arg2[%c0_4, %c0_5] : memref<32x192xbf16, #tpu.memory_space<vmem>>, vector<32x192xbf16>
    %cst_6 = arith.constant dense<0.000000e+00> : vector<64x192xf32>
    %11 = tpu.matmul %9, %10, %cst_6 {dimension_numbers = #tpu.dot_dimension_numbers<[1], [0], [0], [1], [0, 0, 1, 1], [], []>} : vector<64x32xbf16>, vector<32x192xbf16>, vector<64x192xf32> -> vector<64x192xf32>
    %c0_7 = arith.constant 0 : index
    %c0_8 = arith.constant 0 : index
    %12 = vector.load %arg3[%c0_7, %c0_8] : memref<1x192xf32, #tpu.memory_space<vmem>>, vector<1x192xf32>
    %13 = vector.broadcast %12 : vector<1x192xf32> to vector<64x192xf32>
    %14 = arith.addf %11, %13 : vector<64x192xf32>
    %c0_9 = arith.constant 0 : index
    %c0_10 = arith.constant 0 : index
    %15 = vector.load %arg7[%c0_9, %c0_10] : memref<64x192xf32, #tpu.memory_space<vmem>>, vector<64x192xf32>
    tpu.vector_store %arg7[%c0_9, %c0_10], %14 {strides = array<i32>} : memref<64x192xf32, #tpu.memory_space<vmem>>, vector<64x192xf32>,
    %c0_11 = arith.constant 0 : index
    %c0_12 = arith.constant 0 : index
    %16 = vector.load %arg7[%c0_11, %c0_12] : memref<64x192xf32, #tpu.memory_space<vmem>>, vector<64x8xf32>
    %cst_13 = arith.constant 0.000000e+00 : f32
    %cst_14 = arith.constant 4.000000e+00 : f32
    %17 = vector.broadcast %cst_13 : f32 to vector<64x8xf32>
    %18 = arith.maximumf %17, %16 : vector<64x8xf32>
    %19 = vector.broadcast %cst_14 : f32 to vector<64x8xf32>
    %20 = arith.minimumf %19, %18 : vector<64x8xf32>
    %21 = math.roundeven %20 : vector<64x8xf32>
    %cst_15 = arith.constant 2.500000e-01 : f32
    %22 = vector.broadcast %cst_15 : f32 to vector<64x8xf32>
    %23 = arith.mulf %21, %22 : vector<64x8xf32>
    %c0_16 = arith.constant 0 : index
    %c32 = arith.constant 32 : index
    %24 = vector.load %arg7[%c0_16, %c32] : memref<64x192xf32, #tpu.memory_space<vmem>>, vector<64x8xf32>
    %cst_17 = arith.constant 0.000000e+00 : f32
    %cst_18 = arith.constant 4.000000e+00 : f32
    %25 = vector.broadcast %cst_17 : f32 to vector<64x8xf32>
    %26 = arith.maximumf %25, %24 : vector<64x8xf32>
    %27 = vector.broadcast %cst_18 : f32 to vector<64x8xf32>
    %28 = arith.minimumf %27, %26 : vector<64x8xf32>
    %29 = math.roundeven %28 : vector<64x8xf32>
    %cst_19 = arith.constant 2.500000e-01 : f32
    %30 = vector.broadcast %cst_19 : f32 to vector<64x8xf32>
    %31 = arith.mulf %29, %30 : vector<64x8xf32>
    %c0_20 = arith.constant 0 : index
    %c64 = arith.constant 64 : index
    %32 = vector.load %arg7[%c0_20, %c64] : memref<64x192xf32, #tpu.memory_space<vmem>>, vector<64x32xf32>
    %cst_21 = arith.constant 0.000000e+00 : f32
    %cst_22 = arith.constant 4.000000e+00 : f32
    %33 = vector.broadcast %cst_21 : f32 to vector<64x32xf32>
    %34 = arith.maximumf %33, %32 : vector<64x32xf32>
    %35 = vector.broadcast %cst_22 : f32 to vector<64x32xf32>
    %36 = arith.minimumf %35, %34 : vector<64x32xf32>
    %37 = math.roundeven %36 : vector<64x32xf32>
    %cst_23 = arith.constant 2.500000e-01 : f32
    %38 = vector.broadcast %cst_23 : f32 to vector<64x32xf32>
    %39 = arith.mulf %37, %38 : vector<64x32xf32>
    %40 = tpu.transpose %31, [1, 0] : vector<64x8xf32> -> vector<8x64xf32>
    %cst_24 = arith.constant dense<0.000000e+00> : vector<8x32xf32>
    %41 = tpu.matmul %40, %39, %cst_24 {dimension_numbers = #tpu.dot_dimension_numbers<[1], [0], [0], [1], [0, 0, 1, 1], [], []>} : vector<8x64xf32>, vector<64x32xf32>, vector<8x32xf32> -> vector<8x32xf32>
    %cst_25 = arith.constant dense<0.000000e+00> : vector<64x32xf32>
    %42 = tpu.matmul %23, %41, %cst_25 {dimension_numbers = #tpu.dot_dimension_numbers<[1], [0], [0], [1], [0, 0, 1, 1], [], []>} : vector<64x8xf32>, vector<8x32xf32>, vector<64x32xf32> -> vector<64x32xf32>
    %cst_26 = arith.constant 0.707106769 : f32
    %43 = vector.broadcast %cst_26 : f32 to vector<64x32xf32>
    %44 = arith.mulf %42, %43 : vector<64x32xf32>
    %cst_27 = arith.constant 0.000000e+00 : f32
    %cst_28 = arith.constant 4.000000e+00 : f32
    %45 = vector.broadcast %cst_27 : f32 to vector<64x32xf32>
    %46 = arith.maximumf %45, %44 : vector<64x32xf32>
    %47 = vector.broadcast %cst_28 : f32 to vector<64x32xf32>
    %48 = arith.minimumf %47, %46 : vector<64x32xf32>
    %49 = math.roundeven %48 : vector<64x32xf32>
    %cst_29 = arith.constant 2.500000e-01 : f32
    %50 = vector.broadcast %cst_29 : f32 to vector<64x32xf32>
    %51 = arith.mulf %49, %50 : vector<64x32xf32>
    %c0_30 = arith.constant 0 : index
    %c0_31 = arith.constant 0 : index
    %52 = vector.load %arg8[%c0_30, %c0_31] : memref<64x128xf32, #tpu.memory_space<vmem>>, vector<64x32xf32>
    tpu.vector_store %arg8[%c0_30, %c0_31], %51 {strides = array<i32>} : memref<64x128xf32, #tpu.memory_space<vmem>>, vector<64x32xf32>,
    %c0_32 = arith.constant 0 : index
    %c8 = arith.constant 8 : index
    %53 = vector.load %arg7[%c0_32, %c8] : memref<64x192xf32, #tpu.memory_space<vmem>>, vector<64x8xf32>
    %cst_33 = arith.constant 0.000000e+00 : f32
    %cst_34 = arith.constant 4.000000e+00 : f32
    %54 = vector.broadcast %cst_33 : f32 to vector<64x8xf32>
    %55 = arith.maximumf %54, %53 : vector<64x8xf32>
    %56 = vector.broadcast %cst_34 : f32 to vector<64x8xf32>
    %57 = arith.minimumf %56, %55 : vector<64x8xf32>
    %58 = math.roundeven %57 : vector<64x8xf32>
    %cst_35 = arith.constant 2.500000e-01 : f32
    %59 = vector.broadcast %cst_35 : f32 to vector<64x8xf32>
    %60 = arith.mulf %58, %59 : vector<64x8xf32>
    %c0_36 = arith.constant 0 : index
    %c40 = arith.constant 40 : index
    %61 = vector.load %arg7[%c0_36, %c40] : memref<64x192xf32, #tpu.memory_space<vmem>>, vector<64x8xf32>
    %cst_37 = arith.constant 0.000000e+00 : f32
    %cst_38 = arith.constant 4.000000e+00 : f32
    %62 = vector.broadcast %cst_37 : f32 to vector<64x8xf32>
    %63 = arith.maximumf %62, %61 : vector<64x8xf32>
    %64 = vector.broadcast %cst_38 : f32 to vector<64x8xf32>
    %65 = arith.minimumf %64, %63 : vector<64x8xf32>
    %66 = math.roundeven %65 : vector<64x8xf32>
    %cst_39 = arith.constant 2.500000e-01 : f32
    %67 = vector.broadcast %cst_39 : f32 to vector<64x8xf32>
    %68 = arith.mulf %66, %67 : vector<64x8xf32>
    %c0_40 = arith.constant 0 : index
    %c96 = arith.constant 96 : index
    %69 = vector.load %arg7[%c0_40, %c96] : memref<64x192xf32, #tpu.memory_space<vmem>>, vector<64x32xf32>
    %cst_41 = arith.constant 0.000000e+00 : f32
    %cst_42 = arith.constant 4.000000e+00 : f32
    %70 = vector.broadcast %cst_41 : f32 to vector<64x32xf32>
    %71 = arith.maximumf %70, %69 : vector<64x32xf32>
    %72 = vector.broadcast %cst_42 : f32 to vector<64x32xf32>
    %73 = arith.minimumf %72, %71 : vector<64x32xf32>
    %74 = math.roundeven %73 : vector<64x32xf32>
    %cst_43 = arith.constant 2.500000e-01 : f32
    %75 = vector.broadcast %cst_43 : f32 to vector<64x32xf32>
    %76 = arith.mulf %74, %75 : vector<64x32xf32>
    %77 = tpu.transpose %68, [1, 0] : vector<64x8xf32> -> vector<8x64xf32>
    %cst_44 = arith.constant dense<0.000000e+00> : vector<8x32xf32>
    %78 = tpu.matmul %77, %76, %cst_44 {dimension_numbers = #tpu.dot_dimension_numbers<[1], [0], [0], [1], [0, 0, 1, 1], [], []>} : vector<8x64xf32>, vector<64x32xf32>, vector<8x32xf32> -> vector<8x32xf32>
    %cst_45 = arith.constant dense<0.000000e+00> : vector<64x32xf32>
    %79 = tpu.matmul %60, %78, %cst_45 {dimension_numbers = #tpu.dot_dimension_numbers<[1], [0], [0], [1], [0, 0, 1, 1], [], []>} : vector<64x8xf32>, vector<8x32xf32>, vector<64x32xf32> -> vector<64x32xf32>
    %cst_46 = arith.constant 0.707106769 : f32
    %80 = vector.broadcast %cst_46 : f32 to vector<64x32xf32>
    %81 = arith.mulf %79, %80 : vector<64x32xf32>
    %cst_47 = arith.constant 0.000000e+00 : f32
    %cst_48 = arith.constant 4.000000e+00 : f32
    %82 = vector.broadcast %cst_47 : f32 to vector<64x32xf32>
    %83 = arith.maximumf %82, %81 : vector<64x32xf32>
    %84 = vector.broadcast %cst_48 : f32 to vector<64x32xf32>
    %85 = arith.minimumf %84, %83 : vector<64x32xf32>
    %86 = math.roundeven %85 : vector<64x32xf32>
    %cst_49 = arith.constant 2.500000e-01 : f32
    %87 = vector.broadcast %cst_49 : f32 to vector<64x32xf32>
    %88 = arith.mulf %86, %87 : vector<64x32xf32>
    %c0_50 = arith.constant 0 : index
    %c32_51 = arith.constant 32 : index
    %89 = vector.load %arg8[%c0_50, %c32_51] : memref<64x128xf32, #tpu.memory_space<vmem>>, vector<64x32xf32>
    tpu.vector_store %arg8[%c0_50, %c32_51], %88 {strides = array<i32>} : memref<64x128xf32, #tpu.memory_space<vmem>>, vector<64x32xf32>,
    %c0_52 = arith.constant 0 : index
    %c16 = arith.constant 16 : index
    %90 = vector.load %arg7[%c0_52, %c16] : memref<64x192xf32, #tpu.memory_space<vmem>>, vector<64x8xf32>
    %cst_53 = arith.constant 0.000000e+00 : f32
    %cst_54 = arith.constant 4.000000e+00 : f32
    %91 = vector.broadcast %cst_53 : f32 to vector<64x8xf32>
    %92 = arith.maximumf %91, %90 : vector<64x8xf32>
    %93 = vector.broadcast %cst_54 : f32 to vector<64x8xf32>
    %94 = arith.minimumf %93, %92 : vector<64x8xf32>
    %95 = math.roundeven %94 : vector<64x8xf32>
    %cst_55 = arith.constant 2.500000e-01 : f32
    %96 = vector.broadcast %cst_55 : f32 to vector<64x8xf32>
    %97 = arith.mulf %95, %96 : vector<64x8xf32>
    %c0_56 = arith.constant 0 : index
    %c48 = arith.constant 48 : index
    %98 = vector.load %arg7[%c0_56, %c48] : memref<64x192xf32, #tpu.memory_space<vmem>>, vector<64x8xf32>
    %cst_57 = arith.constant 0.000000e+00 : f32
    %cst_58 = arith.constant 4.000000e+00 : f32
    %99 = vector.broadcast %cst_57 : f32 to vector<64x8xf32>
    %100 = arith.maximumf %99, %98 : vector<64x8xf32>
    %101 = vector.broadcast %cst_58 : f32 to vector<64x8xf32>
    %102 = arith.minimumf %101, %100 : vector<64x8xf32>
    %103 = math.roundeven %102 : vector<64x8xf32>
    %cst_59 = arith.constant 2.500000e-01 : f32
    %104 = vector.broadcast %cst_59 : f32 to vector<64x8xf32>
    %105 = arith.mulf %103, %104 : vector<64x8xf32>
    %c0_60 = arith.constant 0 : index
    %c128 = arith.constant 128 : index
    %106 = vector.load %arg7[%c0_60, %c128] : memref<64x192xf32, #tpu.memory_space<vmem>>, vector<64x32xf32>
    %cst_61 = arith.constant 0.000000e+00 : f32
    %cst_62 = arith.constant 4.000000e+00 : f32
    %107 = vector.broadcast %cst_61 : f32 to vector<64x32xf32>
    %108 = arith.maximumf %107, %106 : vector<64x32xf32>
    %109 = vector.broadcast %cst_62 : f32 to vector<64x32xf32>
    %110 = arith.minimumf %109, %108 : vector<64x32xf32>
    %111 = math.roundeven %110 : vector<64x32xf32>
    %cst_63 = arith.constant 2.500000e-01 : f32
    %112 = vector.broadcast %cst_63 : f32 to vector<64x32xf32>
    %113 = arith.mulf %111, %112 : vector<64x32xf32>
    %114 = tpu.transpose %105, [1, 0] : vector<64x8xf32> -> vector<8x64xf32>
    %cst_64 = arith.constant dense<0.000000e+00> : vector<8x32xf32>
    %115 = tpu.matmul %114, %113, %cst_64 {dimension_numbers = #tpu.dot_dimension_numbers<[1], [0], [0], [1], [0, 0, 1, 1], [], []>} : vector<8x64xf32>, vector<64x32xf32>, vector<8x32xf32> -> vector<8x32xf32>
    %cst_65 = arith.constant dense<0.000000e+00> : vector<64x32xf32>
    %116 = tpu.matmul %97, %115, %cst_65 {dimension_numbers = #tpu.dot_dimension_numbers<[1], [0], [0], [1], [0, 0, 1, 1], [], []>} : vector<64x8xf32>, vector<8x32xf32>, vector<64x32xf32> -> vector<64x32xf32>
    %cst_66 = arith.constant 0.707106769 : f32
    %117 = vector.broadcast %cst_66 : f32 to vector<64x32xf32>
    %118 = arith.mulf %116, %117 : vector<64x32xf32>
    %cst_67 = arith.constant 0.000000e+00 : f32
    %cst_68 = arith.constant 4.000000e+00 : f32
    %119 = vector.broadcast %cst_67 : f32 to vector<64x32xf32>
    %120 = arith.maximumf %119, %118 : vector<64x32xf32>
    %121 = vector.broadcast %cst_68 : f32 to vector<64x32xf32>
    %122 = arith.minimumf %121, %120 : vector<64x32xf32>
    %123 = math.roundeven %122 : vector<64x32xf32>
    %cst_69 = arith.constant 2.500000e-01 : f32
    %124 = vector.broadcast %cst_69 : f32 to vector<64x32xf32>
    %125 = arith.mulf %123, %124 : vector<64x32xf32>
    %c0_70 = arith.constant 0 : index
    %c64_71 = arith.constant 64 : index
    %126 = vector.load %arg8[%c0_70, %c64_71] : memref<64x128xf32, #tpu.memory_space<vmem>>, vector<64x32xf32>
    tpu.vector_store %arg8[%c0_70, %c64_71], %125 {strides = array<i32>} : memref<64x128xf32, #tpu.memory_space<vmem>>, vector<64x32xf32>,
    %c0_72 = arith.constant 0 : index
    %c24 = arith.constant 24 : index
    %127 = vector.load %arg7[%c0_72, %c24] : memref<64x192xf32, #tpu.memory_space<vmem>>, vector<64x8xf32>
    %cst_73 = arith.constant 0.000000e+00 : f32
    %cst_74 = arith.constant 4.000000e+00 : f32
    %128 = vector.broadcast %cst_73 : f32 to vector<64x8xf32>
    %129 = arith.maximumf %128, %127 : vector<64x8xf32>
    %130 = vector.broadcast %cst_74 : f32 to vector<64x8xf32>
    %131 = arith.minimumf %130, %129 : vector<64x8xf32>
    %132 = math.roundeven %131 : vector<64x8xf32>
    %cst_75 = arith.constant 2.500000e-01 : f32
    %133 = vector.broadcast %cst_75 : f32 to vector<64x8xf32>
    %134 = arith.mulf %132, %133 : vector<64x8xf32>
    %c0_76 = arith.constant 0 : index
    %c56 = arith.constant 56 : index
    %135 = vector.load %arg7[%c0_76, %c56] : memref<64x192xf32, #tpu.memory_space<vmem>>, vector<64x8xf32>
    %cst_77 = arith.constant 0.000000e+00 : f32
    %cst_78 = arith.constant 4.000000e+00 : f32
    %136 = vector.broadcast %cst_77 : f32 to vector<64x8xf32>
    %137 = arith.maximumf %136, %135 : vector<64x8xf32>
    %138 = vector.broadcast %cst_78 : f32 to vector<64x8xf32>
    %139 = arith.minimumf %138, %137 : vector<64x8xf32>
    %140 = math.roundeven %139 : vector<64x8xf32>
    %cst_79 = arith.constant 2.500000e-01 : f32
    %141 = vector.broadcast %cst_79 : f32 to vector<64x8xf32>
    %142 = arith.mulf %140, %141 : vector<64x8xf32>
    %c0_80 = arith.constant 0 : index
    %c160 = arith.constant 160 : index
    %143 = vector.load %arg7[%c0_80, %c160] : memref<64x192xf32, #tpu.memory_space<vmem>>, vector<64x32xf32>
    %cst_81 = arith.constant 0.000000e+00 : f32
    %cst_82 = arith.constant 4.000000e+00 : f32
    %144 = vector.broadcast %cst_81 : f32 to vector<64x32xf32>
    %145 = arith.maximumf %144, %143 : vector<64x32xf32>
    %146 = vector.broadcast %cst_82 : f32 to vector<64x32xf32>
    %147 = arith.minimumf %146, %145 : vector<64x32xf32>
    %148 = math.roundeven %147 : vector<64x32xf32>
    %cst_83 = arith.constant 2.500000e-01 : f32
    %149 = vector.broadcast %cst_83 : f32 to vector<64x32xf32>
    %150 = arith.mulf %148, %149 : vector<64x32xf32>
    %151 = tpu.transpose %142, [1, 0] : vector<64x8xf32> -> vector<8x64xf32>
    %cst_84 = arith.constant dense<0.000000e+00> : vector<8x32xf32>
    %152 = tpu.matmul %151, %150, %cst_84 {dimension_numbers = #tpu.dot_dimension_numbers<[1], [0], [0], [1], [0, 0, 1, 1], [], []>} : vector<8x64xf32>, vector<64x32xf32>, vector<8x32xf32> -> vector<8x32xf32>
    %cst_85 = arith.constant dense<0.000000e+00> : vector<64x32xf32>
    %153 = tpu.matmul %134, %152, %cst_85 {dimension_numbers = #tpu.dot_dimension_numbers<[1], [0], [0], [1], [0, 0, 1, 1], [], []>} : vector<64x8xf32>, vector<8x32xf32>, vector<64x32xf32> -> vector<64x32xf32>
    %cst_86 = arith.constant 0.707106769 : f32
    %154 = vector.broadcast %cst_86 : f32 to vector<64x32xf32>
    %155 = arith.mulf %153, %154 : vector<64x32xf32>
    %cst_87 = arith.constant 0.000000e+00 : f32
    %cst_88 = arith.constant 4.000000e+00 : f32
    %156 = vector.broadcast %cst_87 : f32 to vector<64x32xf32>
    %157 = arith.maximumf %156, %155 : vector<64x32xf32>
    %158 = vector.broadcast %cst_88 : f32 to vector<64x32xf32>
    %159 = arith.minimumf %158, %157 : vector<64x32xf32>
    %160 = math.roundeven %159 : vector<64x32xf32>
    %cst_89 = arith.constant 2.500000e-01 : f32
    %161 = vector.broadcast %cst_89 : f32 to vector<64x32xf32>
    %162 = arith.mulf %160, %161 : vector<64x32xf32>
    %c0_90 = arith.constant 0 : index
    %c96_91 = arith.constant 96 : index
    %163 = vector.load %arg8[%c0_90, %c96_91] : memref<64x128xf32, #tpu.memory_space<vmem>>, vector<64x32xf32>
    tpu.vector_store %arg8[%c0_90, %c96_91], %162 {strides = array<i32>} : memref<64x128xf32, #tpu.memory_space<vmem>>, vector<64x32xf32>,
    %c0_92 = arith.constant 0 : index
    %c0_93 = arith.constant 0 : index
    %164 = vector.load %arg8[%c0_92, %c0_93] : memref<64x128xf32, #tpu.memory_space<vmem>>, vector<64x128xf32>
    %165 = arith.truncf %164 : vector<64x128xf32> to vector<64x128xbf16>
    %c0_94 = arith.constant 0 : index
    %c0_95 = arith.constant 0 : index
    %166 = vector.load %arg4[%c0_94, %c0_95] : memref<128x32xbf16, #tpu.memory_space<vmem>>, vector<128x32xbf16>
    %cst_96 = arith.constant dense<0.000000e+00> : vector<64x32xf32>
    %167 = tpu.matmul %165, %166, %cst_96 {dimension_numbers = #tpu.dot_dimension_numbers<[1], [0], [0], [1], [0, 0, 1, 1], [], []>} : vector<64x128xbf16>, vector<128x32xbf16>, vector<64x32xf32> -> vector<64x32xf32>
    %c0_97 = arith.constant 0 : index
    %c0_98 = arith.constant 0 : index
    %168 = vector.load %arg5[%c0_97, %c0_98] : memref<1x32xf32, #tpu.memory_space<vmem>>, vector<1x32xf32>
    %169 = vector.broadcast %168 : vector<1x32xf32> to vector<64x32xf32>
    %170 = arith.addf %167, %169 : vector<64x32xf32>
    %171 = arith.addf %1, %170 : vector<64x32xf32>
    %c0_99 = arith.constant 0 : index
    %c0_100 = arith.constant 0 : index
    %c0_101 = arith.constant 0 : index
    %172 = vector.load %arg6[%c0_99, %c0_100, %c0_101] : memref<1x64x32xf32, #tpu.memory_space<vmem>>, vector<1x64x32xf32>
    %173 = vector.shape_cast %172 : vector<1x64x32xf32> to vector<64x32xf32>
    %174 = vector.shape_cast %171 : vector<64x32xf32> to vector<1x64x32xf32>
    tpu.vector_store %arg6[%c0_99, %c0_100, %c0_101], %174 {strides = array<i32>} : memref<1x64x32xf32, #tpu.memory_space<vmem>>, vector<1x64x32xf32>,
    return
  }
  func.func @transform_0(%arg0: i32) -> (i32, i32, i32) {
    %c0_i32 = arith.constant 0 : i32
    %c0_i32_0 = arith.constant 0 : i32
    %c0_i32_1 = arith.constant 0 : i32
    return %arg0, %c0_i32, %c0_i32_0 : i32, i32, i32
  }
  func.func @transform_1(%arg0: i32) -> (i32, i32) {
    %c0_i32 = arith.constant 0 : i32
    %c0_i32_0 = arith.constant 0 : i32
    %c0_i32_1 = arith.constant 0 : i32
    return %c0_i32, %c0_i32_0 : i32, i32
  }
  func.func @transform_2(%arg0: i32) -> (i32, i32) {
    %c0_i32 = arith.constant 0 : i32
    %c0_i32_0 = arith.constant 0 : i32
    %c0_i32_1 = arith.constant 0 : i32
    return %c0_i32, %c0_i32_0 : i32, i32
  }
  func.func @transform_3(%arg0: i32) -> (i32, i32) {
    %c0_i32 = arith.constant 0 : i32
    %c0_i32_0 = arith.constant 0 : i32
    %c0_i32_1 = arith.constant 0 : i32
    return %c0_i32, %c0_i32_0 : i32, i32
  }
  func.func @transform_4(%arg0: i32) -> (i32, i32) {
    %c0_i32 = arith.constant 0 : i32
    %c0_i32_0 = arith.constant 0 : i32
    %c0_i32_1 = arith.constant 0 : i32
    return %c0_i32, %c0_i32_0 : i32, i32
  }
  func.func @transform_5(%arg0: i32) -> (i32, i32, i32) {
    %c0_i32 = arith.constant 0 : i32
    %c0_i32_0 = arith.constant 0 : i32
    %c0_i32_1 = arith.constant 0 : i32
    return %arg0, %c0_i32, %c0_i32_0 : i32, i32, i32
  }
}

module attributes {stable_mosaic.version = 11 : i64} {
  func.func @_mlp_kernel(%arg0: i32, %arg1: memref<128x32xf32, #tpu.memory_space<vmem>>, %arg2: memref<32x128xbf16, #tpu.memory_space<vmem>>, %arg3: memref<1x128xf32, #tpu.memory_space<vmem>>, %arg4: memref<128x32xbf16, #tpu.memory_space<vmem>>, %arg5: memref<1x32xf32, #tpu.memory_space<vmem>>, %arg6: memref<128x32xf32, #tpu.memory_space<vmem>>) attributes {dimension_semantics = [#tpu.dimension_semantics<parallel>], iteration_bounds = array<i64: 1>, scalar_prefetch = 0 : i64, scratch_operands = 0 : i64, tpu.core_type = #tpu.core_type<tc>, window_params = [{transform_indices = @transform_0, window_bounds = array<i64: 128, 32>}, {pipeline_mode = #tpu.pipeline_mode<synchronous>, transform_indices = @transform_1, window_bounds = array<i64: 32, 128>}, {pipeline_mode = #tpu.pipeline_mode<synchronous>, transform_indices = @transform_2, window_bounds = array<i64: 1, 128>}, {pipeline_mode = #tpu.pipeline_mode<synchronous>, transform_indices = @transform_3, window_bounds = array<i64: 128, 32>}, {pipeline_mode = #tpu.pipeline_mode<synchronous>, transform_indices = @transform_4, window_bounds = array<i64: 1, 32>}, {transform_indices = @transform_5, window_bounds = array<i64: 128, 32>}]} {
    %c0 = arith.constant 0 : index
    %c0_0 = arith.constant 0 : index
    %0 = vector.load %arg1[%c0, %c0_0] : memref<128x32xf32, #tpu.memory_space<vmem>>, vector<128x32xf32>
    %cst = arith.constant 0.000000e+00 : f32
    %cst_1 = arith.constant 4.000000e+00 : f32
    %1 = vector.broadcast %cst : f32 to vector<128x32xf32>
    %2 = arith.maximumf %1, %0 : vector<128x32xf32>
    %3 = vector.broadcast %cst_1 : f32 to vector<128x32xf32>
    %4 = arith.minimumf %3, %2 : vector<128x32xf32>
    %5 = math.roundeven %4 : vector<128x32xf32>
    %cst_2 = arith.constant 2.500000e-01 : f32
    %6 = vector.broadcast %cst_2 : f32 to vector<128x32xf32>
    %7 = arith.mulf %5, %6 : vector<128x32xf32>
    %8 = arith.truncf %7 : vector<128x32xf32> to vector<128x32xbf16>
    %c0_3 = arith.constant 0 : index
    %c0_4 = arith.constant 0 : index
    %9 = vector.load %arg2[%c0_3, %c0_4] : memref<32x128xbf16, #tpu.memory_space<vmem>>, vector<32x128xbf16>
    %cst_5 = arith.constant dense<0.000000e+00> : vector<128x128xf32>
    %10 = tpu.matmul %8, %9, %cst_5 {dimension_numbers = #tpu.dot_dimension_numbers<[1], [0], [0], [1], [0, 0, 1, 1], [], []>} : vector<128x32xbf16>, vector<32x128xbf16>, vector<128x128xf32> -> vector<128x128xf32>
    %c0_6 = arith.constant 0 : index
    %c0_7 = arith.constant 0 : index
    %11 = vector.load %arg3[%c0_6, %c0_7] : memref<1x128xf32, #tpu.memory_space<vmem>>, vector<1x128xf32>
    %12 = vector.broadcast %11 : vector<1x128xf32> to vector<128x128xf32>
    %13 = arith.addf %10, %12 : vector<128x128xf32>
    %cst_8 = arith.constant 0.000000e+00 : f32
    %cst_9 = arith.constant 4.000000e+00 : f32
    %14 = vector.broadcast %cst_8 : f32 to vector<128x128xf32>
    %15 = arith.maximumf %14, %13 : vector<128x128xf32>
    %16 = vector.broadcast %cst_9 : f32 to vector<128x128xf32>
    %17 = arith.minimumf %16, %15 : vector<128x128xf32>
    %18 = math.roundeven %17 : vector<128x128xf32>
    %cst_10 = arith.constant 2.500000e-01 : f32
    %19 = vector.broadcast %cst_10 : f32 to vector<128x128xf32>
    %20 = arith.mulf %18, %19 : vector<128x128xf32>
    %21 = arith.truncf %20 : vector<128x128xf32> to vector<128x128xbf16>
    %c0_11 = arith.constant 0 : index
    %c0_12 = arith.constant 0 : index
    %22 = vector.load %arg4[%c0_11, %c0_12] : memref<128x32xbf16, #tpu.memory_space<vmem>>, vector<128x32xbf16>
    %cst_13 = arith.constant dense<0.000000e+00> : vector<128x32xf32>
    %23 = tpu.matmul %21, %22, %cst_13 {dimension_numbers = #tpu.dot_dimension_numbers<[1], [0], [0], [1], [0, 0, 1, 1], [], []>} : vector<128x128xbf16>, vector<128x32xbf16>, vector<128x32xf32> -> vector<128x32xf32>
    %c0_14 = arith.constant 0 : index
    %c0_15 = arith.constant 0 : index
    %24 = vector.load %arg5[%c0_14, %c0_15] : memref<1x32xf32, #tpu.memory_space<vmem>>, vector<1x32xf32>
    %25 = vector.broadcast %24 : vector<1x32xf32> to vector<128x32xf32>
    %26 = arith.addf %23, %25 : vector<128x32xf32>
    %27 = arith.addf %0, %26 : vector<128x32xf32>
    %c0_16 = arith.constant 0 : index
    %c0_17 = arith.constant 0 : index
    %28 = vector.load %arg6[%c0_16, %c0_17] : memref<128x32xf32, #tpu.memory_space<vmem>>, vector<128x32xf32>
    tpu.vector_store %arg6[%c0_16, %c0_17], %27 {strides = array<i32>} : memref<128x32xf32, #tpu.memory_space<vmem>>, vector<128x32xf32>,
    return
  }
  func.func @transform_0(%arg0: i32) -> (i32, i32) {
    %c0_i32 = arith.constant 0 : i32
    %c0_i32_0 = arith.constant 0 : i32
    return %arg0, %c0_i32 : i32, i32
  }
  func.func @transform_1(%arg0: i32) -> (i32, i32) {
    %c0_i32 = arith.constant 0 : i32
    %c0_i32_0 = arith.constant 0 : i32
    %c0_i32_1 = arith.constant 0 : i32
    return %c0_i32, %c0_i32_0 : i32, i32
  }
  func.func @transform_2(%arg0: i32) -> (i32, i32) {
    %c0_i32 = arith.constant 0 : i32
    %c0_i32_0 = arith.constant 0 : i32
    %c0_i32_1 = arith.constant 0 : i32
    return %c0_i32, %c0_i32_0 : i32, i32
  }
  func.func @transform_3(%arg0: i32) -> (i32, i32) {
    %c0_i32 = arith.constant 0 : i32
    %c0_i32_0 = arith.constant 0 : i32
    %c0_i32_1 = arith.constant 0 : i32
    return %c0_i32, %c0_i32_0 : i32, i32
  }
  func.func @transform_4(%arg0: i32) -> (i32, i32) {
    %c0_i32 = arith.constant 0 : i32
    %c0_i32_0 = arith.constant 0 : i32
    %c0_i32_1 = arith.constant 0 : i32
    return %c0_i32, %c0_i32_0 : i32, i32
  }
  func.func @transform_5(%arg0: i32) -> (i32, i32) {
    %c0_i32 = arith.constant 0 : i32
    %c0_i32_0 = arith.constant 0 : i32
    return %arg0, %c0_i32 : i32, i32
  }
}

</mosaic_0001>

<llo_original>
// kernel: ms_block_spike_sepconv.5
$region0: #{ms_block_spike_sepconv.5}
  #allocation0 [shape = 'u32[]', space=smem, size = 0x4, offset = 0x4, fixed_abs, tag = 'smem constant byte address 0x4 - core index']
  #allocation1 [shape = 'u32[72,128]{1,0:T(1,128)}', space=vmem, size = 0x9000, scoped, tag = 'internal scratch']
  %s0 = inlined_call_operand.vmem [shape: f32[128,32], index: 0, kind: input, shape index: {}]
  %s1 = inlined_call_operand.vmem [shape: bf16[32,128], index: 1, kind: input, shape index: {}]
  %s2 = inlined_call_operand.vmem [shape: f32[1,128], index: 2, kind: input, shape index: {}]
  %s3 = inlined_call_operand.vmem [shape: bf16[128,32], index: 3, kind: input, shape index: {}]
  %s4 = inlined_call_operand.vmem [shape: f32[1,32], index: 4, kind: input, shape index: {}]
  %s5 = inlined_call_operand.hbm [shape: f32[128,32], index: 5, kind: output, shape index: {}]
  %s6 = sld [smem:[#allocation0]]
  $region30: #{ms_block_spike_sepconv.5} parent=0
    _
  %s8 = ssub.s32 1, %s6
  %s9 = scalar_select 0, %s8, %s6
  $region1: #{ms_block_spike_sepconv.5} parent=0
    #allocation2 [shape = 'u8[65536]{0}', space=vmem, size = 0x10000, scoped, tag = 'output window, operand 0, single buffered']
    #allocation3 [shape = 's32[1]{0}', space=sflag, size = 0x4, scoped, tag = 'scoped memory for ms_block_spike_sepconv.5']
    %10 = vsyncpa [#allocation3], 0
    // Predicated region
    $region2: #{ms_block_spike_sepconv.5} parent=1 // pred_check
      _
    $region3: #{ms_block_spike_sepconv.5} parent=1 // pred_check_branch
      %12 = sbr.rel (0) target = $region5
    $region4: #{ms_block_spike_sepconv.5} parent=1 // pred_region
      _
    $region5: #{ms_block_spike_sepconv.5} parent=1 // pred_fallthru
      _
    // Predicated region
    $region6: #{ms_block_spike_sepconv.5} parent=1 // pred_check
      _
    $region7: #{ms_block_spike_sepconv.5} parent=1 // pred_check_branch
      %14 = sbr.rel (0) target = $region9
    $region8: #{ms_block_spike_sepconv.5} parent=1 // pred_region
      _
    $region9: #{ms_block_spike_sepconv.5} parent=1 // pred_fallthru
      _
    // Predicated region
    $region10: #{ms_block_spike_sepconv.5} parent=1 // pred_check
      _
    $region11: #{ms_block_spike_sepconv.5} parent=1 // pred_check_branch
      %16 = sbr.rel (0) target = $region13
    $region12: #{ms_block_spike_sepconv.5} parent=1 // pred_region
      _
    $region13: #{ms_block_spike_sepconv.5} parent=1 // pred_fallthru
      _
    // Predicated region
    $region14: #{ms_block_spike_sepconv.5} parent=1 // pred_check
      _
    $region15: #{ms_block_spike_sepconv.5} parent=1 // pred_check_branch
      %18 = sbr.rel (0) target = $region17
    $region16: #{ms_block_spike_sepconv.5} parent=1 // pred_region
      _
    $region17: #{ms_block_spike_sepconv.5} parent=1 // pred_fallthru
      _
    // Predicated region
    $region18: #{ms_block_spike_sepconv.5} parent=1 // pred_check
      _
    $region19: #{ms_block_spike_sepconv.5} parent=1 // pred_check_branch
      %20 = sbr.rel (0) target = $region21
    $region20: #{ms_block_spike_sepconv.5} parent=1 // pred_region
      _
    $region21: #{ms_block_spike_sepconv.5} parent=1 // pred_fallthru
      _
    %v22 = vld [vmem:[%s0] sm:$0xff]
    %v23 = vld [vmem:[%s0 + $0x8] sm:$0xff]
    %v24 = vld [vmem:[%s0 + $0x10] sm:$0xff]
    %v25 = vld [vmem:[%s0 + $0x18] sm:$0xff]
    %v26 = vld [vmem:[%s0 + $0x20] sm:$0xff]
    %v27 = vld [vmem:[%s0 + $0x28] sm:$0xff]
    %v28 = vld [vmem:[%s0 + $0x30] sm:$0xff]
    %v29 = vld [vmem:[%s0 + $0x38] sm:$0xff]
    %v30 = vld [vmem:[%s0 + $0x40] sm:$0xff]
    %v31 = vld [vmem:[%s0 + $0x48] sm:$0xff]
    %v32 = vld [vmem:[%s0 + $0x50] sm:$0xff]
    %v33 = vld [vmem:[%s0 + $0x58] sm:$0xff]
    %v34 = vld [vmem:[%s0 + $0x60] sm:$0xff]
    %v35 = vld [vmem:[%s0 + $0x68] sm:$0xff]
    %v36 = vld [vmem:[%s0 + $0x70] sm:$0xff]
    %v37 = vld [vmem:[%s0 + $0x78] sm:$0xff]
    %v38 = vmax.f32 %v22, 0.0
    %v39 = vmax.f32 %v23, 0.0
    %v40 = vmax.f32 %v24, 0.0
    %v41 = vmax.f32 %v25, 0.0
    %v42 = vmax.f32 %v26, 0.0
    %v43 = vmax.f32 %v27, 0.0
    %v44 = vmax.f32 %v28, 0.0
    %v45 = vmax.f32 %v29, 0.0
    %v46 = vmax.f32 %v30, 0.0
    %v47 = vmax.f32 %v31, 0.0
    %v48 = vmax.f32 %v32, 0.0
    %v49 = vmax.f32 %v33, 0.0
    %v50 = vmax.f32 %v34, 0.0
    %v51 = vmax.f32 %v35, 0.0
    %v52 = vmax.f32 %v36, 0.0
    %v53 = vmax.f32 %v37, 0.0
    %v54 = vmin.f32 %v38, 4.0
    %v55 = vmin.f32 %v39, 4.0
    %v56 = vmin.f32 %v40, 4.0
    %v57 = vmin.f32 %v41, 4.0
    %v58 = vmin.f32 %v42, 4.0
    %v59 = vmin.f32 %v43, 4.0
    %v60 = vmin.f32 %v44, 4.0
    %v61 = vmin.f32 %v45, 4.0
    %v62 = vmin.f32 %v46, 4.0
    %v63 = vmin.f32 %v47, 4.0
    %v64 = vmin.f32 %v48, 4.0
    %v65 = vmin.f32 %v49, 4.0
    %v66 = vmin.f32 %v50, 4.0
    %v67 = vmin.f32 %v51, 4.0
    %v68 = vmin.f32 %v52, 4.0
    %v69 = vmin.f32 %v53, 4.0
    %v70 = vround.ne.pseudo %v54
    %v71 = vround.ne.pseudo %v55
    %v72 = vround.ne.pseudo %v56
    %v73 = vround.ne.pseudo %v57
    %v74 = vround.ne.pseudo %v58
    %v75 = vround.ne.pseudo %v59
    %v76 = vround.ne.pseudo %v60
    %v77 = vround.ne.pseudo %v61
    %v78 = vround.ne.pseudo %v62
    %v79 = vround.ne.pseudo %v63
    %v80 = vround.ne.pseudo %v64
    %v81 = vround.ne.pseudo %v65
    %v82 = vround.ne.pseudo %v66
    %v83 = vround.ne.pseudo %v67
    %v84 = vround.ne.pseudo %v68
    %v85 = vround.ne.pseudo %v69
    %v86 = vmul.f32 %v70, 0.25
    %v87 = vmul.f32 %v71, 0.25
    %v88 = vmul.f32 %v72, 0.25
    %v89 = vmul.f32 %v73, 0.25
    %v90 = vmul.f32 %v74, 0.25
    %v91 = vmul.f32 %v75, 0.25
    %v92 = vmul.f32 %v76, 0.25
    %v93 = vmul.f32 %v77, 0.25
    %v94 = vmul.f32 %v78, 0.25
    %v95 = vmul.f32 %v79, 0.25
    %v96 = vmul.f32 %v80, 0.25
    %v97 = vmul.f32 %v81, 0.25
    %v98 = vmul.f32 %v82, 0.25
    %v99 = vmul.f32 %v83, 0.25
    %v100 = vmul.f32 %v84, 0.25
    %v101 = vmul.f32 %v85, 0.25
    %v102 = vpack.c.bf16 %v87, %v86
    %v103 = vpack.c.bf16 %v89, %v88
    %v104 = vpack.c.bf16 %v91, %v90
    %v105 = vpack.c.bf16 %v93, %v92
    %v106 = vpack.c.bf16 %v95, %v94
    %v107 = vpack.c.bf16 %v97, %v96
    %v108 = vpack.c.bf16 %v99, %v98
    %v109 = vpack.c.bf16 %v101, %v100
    %v110 = vld [vmem:[%s1] sm:$0xf]
    %v111 = vld [vmem:[%s1 + $0x4] sm:$0xf]
    %v112 = vld [vmem:[%s1 + $0x8] sm:$0xf]
    %v113 = vld [vmem:[%s1 + $0xc] sm:$0xf]
    %v114 = vld [vmem:[%s2] sm:$0x1]
    %v116 = vperm.slane %v114, 0
    %v122 = vunpack.c.l.b16 %v110
    %v123 = vunpack.c.l.b16 %v111
    %v124 = vunpack.c.l.b16 %v112
    %v125 = vunpack.c.l.b16 %v113
    %v126 = vpack.c.b16 %v123, %v122
    %v127 = vpack.c.b16 %v125, %v124
    %vm130 = vcmask 261120
    %v132 = vsel %vm130, %v102, 0
    %v135 = vsel %vm130, %v103, 0
    %v138 = vsel %vm130, %v104, 0
    %v141 = vsel %vm130, %v105, 0
    %v144 = vsel %vm130, %v106, 0
    %v147 = vsel %vm130, %v107, 0
    %v150 = vsel %vm130, %v108, 0
    %v153 = vsel %vm130, %v109, 0
    %155 = vmatpush.bf16.msra.mxu0 0
    %156 = vmatpush.bf16.msra.mxu0 0
    %157 = vmatpush.bf16.msra.mxu0 0
    %158 = vmatpush.bf16.msra.mxu0 0
    %159 = vmatpush.bf16.msra.mxu0 0
    %160 = vmatpush.bf16.msra.mxu0 0
    %161 = vmatpush.bf16.msra.mxu0 %v127
    %162 = vmatpush.bf16.msra.mxu0 %v126
    %163 = vmatmul.bf16.gmra.mxu0 %v132
    %v164 = vpop.f32.mrf.mxu0
    %v165 = vadd.f32 %v116, %v164
    %v166 = vpop.f32.mrf.mxu0
    %v167 = vadd.f32 %v116, %v166
    %168 = vmatmul.bf16.gmra.mxu0 %v135
    %v169 = vpop.f32.mrf.mxu0
    %v170 = vadd.f32 %v116, %v169
    %v171 = vpop.f32.mrf.mxu0
    %v172 = vadd.f32 %v116, %v171
    %173 = vmatmul.bf16.gmra.mxu0 %v138
    %v174 = vpop.f32.mrf.mxu0
    %v175 = vadd.f32 %v116, %v174
    %v176 = vpop.f32.mrf.mxu0
    %v177 = vadd.f32 %v116, %v176
    %178 = vmatmul.bf16.gmra.mxu0 %v141
    %v179 = vpop.f32.mrf.mxu0
    %v180 = vadd.f32 %v116, %v179
    %v181 = vpop.f32.mrf.mxu0
    %v182 = vadd.f32 %v116, %v181
    %183 = vmatmul.bf16.gmra.mxu0 %v144
    %v184 = vpop.f32.mrf.mxu0
    %v185 = vadd.f32 %v116, %v184
    %v186 = vpop.f32.mrf.mxu0
    %v187 = vadd.f32 %v116, %v186
    %188 = vmatmul.bf16.gmra.mxu0 %v147
    %v189 = vpop.f32.mrf.mxu0
    %v190 = vadd.f32 %v116, %v189
    %v191 = vpop.f32.mrf.mxu0
    %v192 = vadd.f32 %v116, %v191
    %193 = vmatmul.bf16.gmra.mxu0 %v150
    %v194 = vpop.f32.mrf.mxu0
    %v195 = vadd.f32 %v116, %v194
    %v196 = vpop.f32.mrf.mxu0
    %v197 = vadd.f32 %v116, %v196
    %198 = vmatmul.bf16.gmra.mxu0 %v153
    %v199 = vpop.f32.mrf.mxu0
    %v200 = vadd.f32 %v116, %v199
    %v201 = vpop.f32.mrf.mxu0
    %v202 = vadd.f32 %v116, %v201
    %203 = vdwg.mxu0
    %v204 = vmax.f32 %v165, 0.0
    %v205 = vmax.f32 %v167, 0.0
    %v206 = vmax.f32 %v170, 0.0
    %v207 = vmax.f32 %v172, 0.0
    %v208 = vmax.f32 %v175, 0.0
    %v209 = vmax.f32 %v177, 0.0
    %v210 = vmax.f32 %v180, 0.0
    %v211 = vmax.f32 %v182, 0.0
    %v212 = vmax.f32 %v185, 0.0
    %v213 = vmax.f32 %v187, 0.0
    %v214 = vmax.f32 %v190, 0.0
    %v215 = vmax.f32 %v192, 0.0
    %v216 = vmax.f32 %v195, 0.0
    %v217 = vmax.f32 %v197, 0.0
    %v218 = vmax.f32 %v200, 0.0
    %v219 = vmax.f32 %v202, 0.0
    %v220 = vmin.f32 %v204, 4.0
    %v221 = vmin.f32 %v205, 4.0
    %v222 = vmin.f32 %v206, 4.0
    %v223 = vmin.f32 %v207, 4.0
    %v224 = vmin.f32 %v208, 4.0
    %v225 = vmin.f32 %v209, 4.0
    %v226 = vmin.f32 %v210, 4.0
    %v227 = vmin.f32 %v211, 4.0
    %v228 = vmin.f32 %v212, 4.0
    %v229 = vmin.f32 %v213, 4.0
    %v230 = vmin.f32 %v214, 4.0
    %v231 = vmin.f32 %v215, 4.0
    %v232 = vmin.f32 %v216, 4.0
    %v233 = vmin.f32 %v217, 4.0
    %v234 = vmin.f32 %v218, 4.0
    %v235 = vmin.f32 %v219, 4.0
    %v236 = vround.ne.pseudo %v220
    %v237 = vround.ne.pseudo %v221
    %v238 = vround.ne.pseudo %v222
    %v239 = vround.ne.pseudo %v223
    %v240 = vround.ne.pseudo %v224
    %v241 = vround.ne.pseudo %v225
    %v242 = vround.ne.pseudo %v226
    %v243 = vround.ne.pseudo %v227
    %v244 = vround.ne.pseudo %v228
    %v245 = vround.ne.pseudo %v229
    %v246 = vround.ne.pseudo %v230
    %v247 = vround.ne.pseudo %v231
    %v248 = vround.ne.pseudo %v232
    %v249 = vround.ne.pseudo %v233
    %v250 = vround.ne.pseudo %v234
    %v251 = vround.ne.pseudo %v235
    %v252 = vmul.f32 %v236, 0.25
    %v253 = vmul.f32 %v237, 0.25
    %v254 = vmul.f32 %v238, 0.25
    %v255 = vmul.f32 %v239, 0.25
    %v256 = vmul.f32 %v240, 0.25
    %v257 = vmul.f32 %v241, 0.25
    %v258 = vmul.f32 %v242, 0.25
    %v259 = vmul.f32 %v243, 0.25
    %v260 = vmul.f32 %v244, 0.25
    %v261 = vmul.f32 %v245, 0.25
    %v262 = vmul.f32 %v246, 0.25
    %v263 = vmul.f32 %v247, 0.25
    %v264 = vmul.f32 %v248, 0.25
    %v265 = vmul.f32 %v249, 0.25
    %v266 = vmul.f32 %v250, 0.25
    %v267 = vmul.f32 %v251, 0.25
    %v268 = vpack.c.bf16 %v253, %v252
    %v269 = vpack.c.bf16 %v255, %v254
    %v270 = vpack.c.bf16 %v257, %v256
    %v271 = vpack.c.bf16 %v259, %v258
    %v272 = vpack.c.bf16 %v261, %v260
    %v273 = vpack.c.bf16 %v263, %v262
    %v274 = vpack.c.bf16 %v265, %v264
    %v275 = vpack.c.bf16 %v267, %v266
    %v276 = vld [vmem:[%s3] sm:$0xf]
    %v277 = vld [vmem:[%s3 + $0x4] sm:$0xf]
    %v278 = vld [vmem:[%s3 + $0x8] sm:$0xf]
    %v279 = vld [vmem:[%s3 + $0xc] sm:$0xf]
    %v280 = vld [vmem:[%s3 + $0x10] sm:$0xf]
    %v281 = vld [vmem:[%s3 + $0x14] sm:$0xf]
    %v282 = vld [vmem:[%s3 + $0x18] sm:$0xf]
    %v283 = vld [vmem:[%s3 + $0x1c] sm:$0xf]
    %v284 = vld [vmem:[%s3 + $0x20] sm:$0xf]
    %v285 = vld [vmem:[%s3 + $0x24] sm:$0xf]
    %v286 = vld [vmem:[%s3 + $0x28] sm:$0xf]
    %v287 = vld [vmem:[%s3 + $0x2c] sm:$0xf]
    %v288 = vld [vmem:[%s3 + $0x30] sm:$0xf]
    %v289 = vld [vmem:[%s3 + $0x34] sm:$0xf]
    %v290 = vld [vmem:[%s3 + $0x38] sm:$0xf]
    %v291 = vld [vmem:[%s3 + $0x3c] sm:$0xf]
    %v292 = vld [vmem:[%s4] sm:$0x1]
    %v294 = vperm.slane %v292, 0
    %v312 = vunpack.c.l.b16 %v276
    %v313 = vunpack.c.l.b16 %v277
    %v314 = vunpack.c.l.b16 %v278
    %v315 = vunpack.c.l.b16 %v279
    %v316 = vunpack.c.l.b16 %v280
    %v317 = vunpack.c.l.b16 %v281
    %v318 = vunpack.c.l.b16 %v282
    %v319 = vunpack.c.l.b16 %v283
    %v320 = vunpack.c.l.b16 %v284
    %v321 = vunpack.c.l.b16 %v285
    %v322 = vunpack.c.l.b16 %v286
    %v323 = vunpack.c.l.b16 %v287
    %v324 = vunpack.c.l.b16 %v288
    %v325 = vunpack.c.l.b16 %v289
    %v326 = vunpack.c.l.b16 %v290
    %v327 = vunpack.c.l.b16 %v291
    %v328 = vpack.c.b16 %v313, %v312
    %v329 = vpack.c.b16 %v315, %v314
    %v330 = vpack.c.b16 %v317, %v316
    %v331 = vpack.c.b16 %v319, %v318
    %v332 = vpack.c.b16 %v321, %v320
    %v333 = vpack.c.b16 %v323, %v322
    %v334 = vpack.c.b16 %v325, %v324
    %v335 = vpack.c.b16 %v327, %v326
    %344 = vmatpush.bf16.msra.mxu0 %v335
    %345 = vmatpush.bf16.msra.mxu0 %v334
    %346 = vmatpush.bf16.msra.mxu0 %v333
    %347 = vmatpush.bf16.msra.mxu0 %v332
    %348 = vmatpush.bf16.msra.mxu0 %v331
    %349 = vmatpush.bf16.msra.mxu0 %v330
    %350 = vmatpush.bf16.msra.mxu0 %v329
    %351 = vmatpush.bf16.msra.mxu0 %v328
    %352 = vmatmul.bf16.gmra.mxu0 %v268
    %v353 = vpop.f32.mrf.mxu0
    %v354 = vadd.f32 %v294, %v353
    %v355 = vpop.f32.mrf.mxu0
    %v356 = vadd.f32 %v294, %v355
    %357 = vmatmul.bf16.gmra.mxu0 %v269
    %v358 = vpop.f32.mrf.mxu0
    %v359 = vadd.f32 %v294, %v358
    %v360 = vpop.f32.mrf.mxu0
    %v361 = vadd.f32 %v294, %v360
    %362 = vmatmul.bf16.gmra.mxu0 %v270
    %v363 = vpop.f32.mrf.mxu0
    %v364 = vadd.f32 %v294, %v363
    %v365 = vpop.f32.mrf.mxu0
    %v366 = vadd.f32 %v294, %v365
    %367 = vmatmul.bf16.gmra.mxu0 %v271
    %v368 = vpop.f32.mrf.mxu0
    %v369 = vadd.f32 %v294, %v368
    %v370 = vpop.f32.mrf.mxu0
    %v371 = vadd.f32 %v294, %v370
    %372 = vmatmul.bf16.gmra.mxu0 %v272
    %v373 = vpop.f32.mrf.mxu0
    %v374 = vadd.f32 %v294, %v373
    %v375 = vpop.f32.mrf.mxu0
    %v376 = vadd.f32 %v294, %v375
    %377 = vmatmul.bf16.gmra.mxu0 %v273
    %v378 = vpop.f32.mrf.mxu0
    %v379 = vadd.f32 %v294, %v378
    %v380 = vpop.f32.mrf.mxu0
    %v381 = vadd.f32 %v294, %v380
    %382 = vmatmul.bf16.gmra.mxu0 %v274
    %v383 = vpop.f32.mrf.mxu0
    %v384 = vadd.f32 %v294, %v383
    %v385 = vpop.f32.mrf.mxu0
    %v386 = vadd.f32 %v294, %v385
    %387 = vmatmul.bf16.gmra.mxu0 %v275
    %v388 = vpop.f32.mrf.mxu0
    %v389 = vadd.f32 %v294, %v388
    %v390 = vpop.f32.mrf.mxu0
    %v391 = vadd.f32 %v294, %v390
    %392 = vdwg.mxu0
    %v393 = vadd.f32 %v22, %v354
    %v394 = vadd.f32 %v23, %v356
    %v395 = vadd.f32 %v24, %v359
    %v396 = vadd.f32 %v25, %v361
    %v397 = vadd.f32 %v26, %v364
    %v398 = vadd.f32 %v27, %v366
    %v399 = vadd.f32 %v28, %v369
    %v400 = vadd.f32 %v29, %v371
    %v401 = vadd.f32 %v30, %v374
    %v402 = vadd.f32 %v31, %v376
    %v403 = vadd.f32 %v32, %v379
    %v404 = vadd.f32 %v33, %v381
    %v405 = vadd.f32 %v34, %v384
    %v406 = vadd.f32 %v35, %v386
    %v407 = vadd.f32 %v36, %v389
    %v408 = vadd.f32 %v37, %v391
    %409 = vst.msk [vmem:[#allocation2] sm:$0xff] %vm130, %v393
    %410 = vst.msk [vmem:[#allocation2 + $0x8] sm:$0xff] %vm130, %v394
    %411 = vst.msk [vmem:[#allocation2 + $0x10] sm:$0xff] %vm130, %v395
    %412 = vst.msk [vmem:[#allocation2 + $0x18] sm:$0xff] %vm130, %v396
    %413 = vst.msk [vmem:[#allocation2 + $0x20] sm:$0xff] %vm130, %v397
    %414 = vst.msk [vmem:[#allocation2 + $0x28] sm:$0xff] %vm130, %v398
    %415 = vst.msk [vmem:[#allocation2 + $0x30] sm:$0xff] %vm130, %v399
    %416 = vst.msk [vmem:[#allocation2 + $0x38] sm:$0xff] %vm130, %v400
    %417 = vst.msk [vmem:[#allocation2 + $0x40] sm:$0xff] %vm130, %v401
    %418 = vst.msk [vmem:[#allocation2 + $0x48] sm:$0xff] %vm130, %v402
    %419 = vst.msk [vmem:[#allocation2 + $0x50] sm:$0xff] %vm130, %v403
    %420 = vst.msk [vmem:[#allocation2 + $0x58] sm:$0xff] %vm130, %v404
    %421 = vst.msk [vmem:[#allocation2 + $0x60] sm:$0xff] %vm130, %v405
    %422 = vst.msk [vmem:[#allocation2 + $0x68] sm:$0xff] %vm130, %v406
    %423 = vst.msk [vmem:[#allocation2 + $0x70] sm:$0xff] %vm130, %v407
    %424 = vst.msk [vmem:[#allocation2 + $0x78] sm:$0xff] %vm130, %v408
    // Predicated region
    $region22: #{ms_block_spike_sepconv.5} parent=1 // pred_check
      _
    $region23: #{ms_block_spike_sepconv.5} parent=1 // pred_check_branch
      %426 = sbr.rel (0) target = $region25
    $region24: #{ms_block_spike_sepconv.5} parent=1 // pred_region
      %428 = vsyncadd [#allocation3], 0
      %s429 = sshll.u32 [#allocation2], 4
      %s430 = int_to_ptr.vmem [resolvable:$true] %s429
      %s431 = sshll.u32 %s5, 4
      %s432 = int_to_ptr.hbm [resolvable:$true] %s431
      %437 = dma.vmem_to_hbm [thread:$0]  %s430, 2048, %s432, [#allocation3], 128, 128, 8
    $region25: #{ms_block_spike_sepconv.5} parent=1 // pred_fallthru
      _
    // Predicated region
    $region26: #{ms_block_spike_sepconv.5} parent=1 // pred_check
      _
    $region27: #{ms_block_spike_sepconv.5} parent=1 // pred_check_branch
      %439 = sbr.rel (0) target = $region29
    $region28: #{ms_block_spike_sepconv.5} parent=1 // pred_region
      %441 = dma.done [#allocation3], 2048
    $region29: #{ms_block_spike_sepconv.5} parent=1 // pred_fallthru
      _
    %442 = vsyncpa [#allocation3], 1

// kernel: ms_block_spike_sepconv.3
$region0: #{ms_block_spike_sepconv.3}
  #allocation0 [shape = 'u32[]', space=smem, size = 0x4, offset = 0x4, fixed_abs, tag = 'smem constant byte address 0x4 - core index']
  #allocation1 [shape = 'u32[72,128]{1,0:T(1,128)}', space=vmem, size = 0x9000, scoped, tag = 'internal scratch']
  #allocation2 [shape = 'f32[82,64]{1,0:T(8,128)}', space=vmem, size = 0xb000, scoped, tag = 'scratch operand']
  %s0 = inlined_call_operand.hbm [shape: f32[2,64,32], index: 0, kind: input, shape index: {}]
  %s1 = inlined_call_operand.vmem [shape: bf16[32,64], index: 1, kind: input, shape index: {}]
  %s2 = inlined_call_operand.vmem [shape: f32[1,64], index: 2, kind: input, shape index: {}]
  %s3 = inlined_call_operand.vmem [shape: f32[3,3,64], index: 3, kind: input, shape index: {}]
  %s4 = inlined_call_operand.vmem [shape: f32[1,64], index: 4, kind: input, shape index: {}]
  %s5 = inlined_call_operand.vmem [shape: f32[1,64], index: 5, kind: input, shape index: {}]
  %s6 = inlined_call_operand.vmem [shape: bf16[64,32], index: 6, kind: input, shape index: {}]
  %s7 = inlined_call_operand.vmem [shape: f32[1,32], index: 7, kind: input, shape index: {}]
  %s8 = inlined_call_operand.vmem [shape: f32[2,64,32], index: 8, kind: output, shape index: {}]
  %s9 = sld [smem:[#allocation0]]
  $region69: #{ms_block_spike_sepconv.3} parent=0
    _
  %s11 = ssub.s32 1, %s9
  %s12 = scalar_select 0, %s11, %s9
  $region1: #{ms_block_spike_sepconv.3} parent=0
    #allocation3 [shape = 'u8[65536]{0}', space=vmem, size = 0x10000, scoped, tag = 'input window, operand 0']
    #allocation4 [shape = 's32[2]{0}', space=sflag, size = 0x8, scoped, tag = 'scoped memory for ms_block_spike_sepconv.3']
    %13 = vsyncpa [#allocation4], 0
    %s14 = scalar_lea.sflag [#allocation4], 1
    %15 = vsyncpa %s14, 0
    loop: start=0, step=1, limit=4
    $region2: #{ms_block_spike_sepconv.3} parent=1 // loop_pre_header
      _
    $region3: #{ms_block_spike_sepconv.3} parent=1 // loop_header
      %s17 = sphi 0, %s21
      %p18 = scmp.ge.s32.totalorder %s17, 4
      %s27 = sphi 0, %s29
      %s30 = sphi 0, %s27
      %s31 = sphi 0, %s30
      %s47 = sphi 0, %s31
      %s51 = sphi 0, %s51
      %s53 = sphi 0, %s51
      %s54 = sphi 0, %s53
      %s68 = sphi 0, %s54
      %s72 = sphi 0, %s72
      %s74 = sphi 0, %s72
      %s75 = sphi 0, %s74
      %s89 = sphi 0, %s75
      %s93 = sphi 0, %s93
      %s95 = sphi 0, %s93
      %s96 = sphi 0, %s95
      %s110 = sphi 0, %s96
      %s114 = sphi 0, %s114
      %s116 = sphi 0, %s114
      %s117 = sphi 0, %s116
      %s131 = sphi 0, %s117
      %s135 = sphi 0, %s135
      %s137 = sphi 0, %s135
      %s138 = sphi 0, %s137
      %s152 = sphi 0, %s138
      %s156 = sphi 0, %s156
      %s158 = sphi 0, %s156
      %s159 = sphi 0, %s158
      %s173 = sphi 0, %s159
      %s177 = sphi 0, %s177
      %s179 = sphi 0, %s177
      %s180 = sphi 0, %s179
      %s194 = sphi 0, %s180
      %s200 = sphi 0, %s202
      %s203 = sphi 0, %s200
      %s204 = sphi 0, %s203
      %s220 = sphi 0, %s204
    $region4: #{ms_block_spike_sepconv.3} parent=1 // loop_header_branch
      %20 = sbr.rel (%p18) target = $region8
    $region5: #{ms_block_spike_sepconv.3} parent=1 // loop_body
      %s22 = ssub.s32 %s17, 1
      %s23 = ssub.s32 %s17, 2
      %s24 = sadd.s32 %s17, 1
      %s25 = ssub.s32 %s17, %s24
      %p26 = scmp.eq.s32.totalorder %s25, 0
      %s28 = sadd.s32 %s27, 1
      %s29 = scalar_select %p26, %s27, %s28
      %p32 = pneg %p26
      %p33 = scmp.eq.s32.totalorder %s17, 1
      %p34 = por %p32, %p33
      %p35 = scmp.ne.s32.totalorder %s27, %s30
      %p36 = scmp.eq.s32.totalorder %s17, 0
      %p37 = por %p35, %p36
      %p38 = scmp.ne.s32.totalorder %s27, %s30
      %p39 = scmp.eq.s32.totalorder %s22, 1
      %p40 = por %p38, %p39
      %p41 = scmp.ne.s32.totalorder %s30, %s31
      %p42 = scmp.eq.s32.totalorder %s22, 0
      %p43 = por %p41, %p42
      %p44 = scmp.ne.s32.totalorder %s30, %s31
      %p45 = scmp.eq.s32.totalorder %s23, 1
      %p46 = por %p44, %p45
      %p48 = scmp.ne.s32.totalorder %s31, %s47
      %p49 = scmp.eq.s32.totalorder %s23, 0
      %p50 = por %p48, %p49
      %s52 = sadd.s32 %s51, 1
      %p55 = scmp.eq.s32.totalorder %s17, 1
      %p56 = scmp.ne.s32.totalorder %s51, %s53
      %p57 = scmp.eq.s32.totalorder %s17, 0
      %p58 = por %p56, %p57
      %p59 = scmp.ne.s32.totalorder %s51, %s53
      %p60 = scmp.eq.s32.totalorder %s22, 1
      %p61 = por %p59, %p60
      %p62 = scmp.ne.s32.totalorder %s53, %s54
      %p63 = scmp.eq.s32.totalorder %s22, 0
      %p64 = por %p62, %p63
      %p65 = scmp.ne.s32.totalorder %s53, %s54
      %p66 = scmp.eq.s32.totalorder %s23, 1
      %p67 = por %p65, %p66
      %p69 = scmp.ne.s32.totalorder %s54, %s68
      %p70 = scmp.eq.s32.totalorder %s23, 0
      %p71 = por %p69, %p70
      %s73 = sadd.s32 %s72, 1
      %p76 = scmp.eq.s32.totalorder %s17, 1
      %p77 = scmp.ne.s32.totalorder %s72, %s74
      %p78 = scmp.eq.s32.totalorder %s17, 0
      %p79 = por %p77, %p78
      %p80 = scmp.ne.s32.totalorder %s72, %s74
      %p81 = scmp.eq.s32.totalorder %s22, 1
      %p82 = por %p80, %p81
      %p83 = scmp.ne.s32.totalorder %s74, %s75
      %p84 = scmp.eq.s32.totalorder %s22, 0
      %p85 = por %p83, %p84
      %p86 = scmp.ne.s32.totalorder %s74, %s75
      %p87 = scmp.eq.s32.totalorder %s23, 1
      %p88 = por %p86, %p87
      %p90 = scmp.ne.s32.totalorder %s75, %s89
      %p91 = scmp.eq.s32.totalorder %s23, 0
      %p92 = por %p90, %p91
      %s94 = sadd.s32 %s93, 1
      %p97 = scmp.eq.s32.totalorder %s17, 1
      %p98 = scmp.ne.s32.totalorder %s93, %s95
      %p99 = scmp.eq.s32.totalorder %s17, 0
      %p100 = por %p98, %p99
      %p101 = scmp.ne.s32.totalorder %s93, %s95
      %p102 = scmp.eq.s32.totalorder %s22, 1
      %p103 = por %p101, %p102
      %p104 = scmp.ne.s32.totalorder %s95, %s96
      %p105 = scmp.eq.s32.totalorder %s22, 0
      %p106 = por %p104, %p105
      %p107 = scmp.ne.s32.totalorder %s95, %s96
      %p108 = scmp.eq.s32.totalorder %s23, 1
      %p109 = por %p107, %p108
      %p111 = scmp.ne.s32.totalorder %s96, %s110
      %p112 = scmp.eq.s32.totalorder %s23, 0
      %p113 = por %p111, %p112
      %s115 = sadd.s32 %s114, 1
      %p118 = scmp.eq.s32.totalorder %s17, 1
      %p119 = scmp.ne.s32.totalorder %s114, %s116
      %p120 = scmp.eq.s32.totalorder %s17, 0
      %p121 = por %p119, %p120
      %p122 = scmp.ne.s32.totalorder %s114, %s116
      %p123 = scmp.eq.s32.totalorder %s22, 1
      %p124 = por %p122, %p123
      %p125 = scmp.ne.s32.totalorder %s116, %s117
      %p126 = scmp.eq.s32.totalorder %s22, 0
      %p127 = por %p125, %p126
      %p128 = scmp.ne.s32.totalorder %s116, %s117
      %p129 = scmp.eq.s32.totalorder %s23, 1
      %p130 = por %p128, %p129
      %p132 = scmp.ne.s32.totalorder %s117, %s131
      %p133 = scmp.eq.s32.totalorder %s23, 0
      %p134 = por %p132, %p133
      %s136 = sadd.s32 %s135, 1
      %p139 = scmp.eq.s32.totalorder %s17, 1
      %p140 = scmp.ne.s32.totalorder %s135, %s137
      %p141 = scmp.eq.s32.totalorder %s17, 0
      %p142 = por %p140, %p141
      %p143 = scmp.ne.s32.totalorder %s135, %s137
      %p144 = scmp.eq.s32.totalorder %s22, 1
      %p145 = por %p143, %p144
      %p146 = scmp.ne.s32.totalorder %s137, %s138
      %p147 = scmp.eq.s32.totalorder %s22, 0
      %p148 = por %p146, %p147
      %p149 = scmp.ne.s32.totalorder %s137, %s138
      %p150 = scmp.eq.s32.totalorder %s23, 1
      %p151 = por %p149, %p150
      %p153 = scmp.ne.s32.totalorder %s138, %s152
      %p154 = scmp.eq.s32.totalorder %s23, 0
      %p155 = por %p153, %p154
      %s157 = sadd.s32 %s156, 1
      %p160 = scmp.eq.s32.totalorder %s17, 1
      %p161 = scmp.ne.s32.totalorder %s156, %s158
      %p162 = scmp.eq.s32.totalorder %s17, 0
      %p163 = por %p161, %p162
      %p164 = scmp.ne.s32.totalorder %s156, %s158
      %p165 = scmp.eq.s32.totalorder %s22, 1
      %p166 = por %p164, %p165
      %p167 = scmp.ne.s32.totalorder %s158, %s159
      %p168 = scmp.eq.s32.totalorder %s22, 0
      %p169 = por %p167, %p168
      %p170 = scmp.ne.s32.totalorder %s158, %s159
      %p171 = scmp.eq.s32.totalorder %s23, 1
      %p172 = por %p170, %p171
      %p174 = scmp.ne.s32.totalorder %s159, %s173
      %p175 = scmp.eq.s32.totalorder %s23, 0
      %p176 = por %p174, %p175
      %s178 = sadd.s32 %s177, 1
      %p181 = scmp.eq.s32.totalorder %s17, 1
      %p182 = scmp.ne.s32.totalorder %s177, %s179
      %p183 = scmp.eq.s32.totalorder %s17, 0
      %p184 = por %p182, %p183
      %p185 = scmp.ne.s32.totalorder %s177, %s179
      %p186 = scmp.eq.s32.totalorder %s22, 1
      %p187 = por %p185, %p186
      %p188 = scmp.ne.s32.totalorder %s179, %s180
      %p189 = scmp.eq.s32.totalorder %s22, 0
      %p190 = por %p188, %p189
      %p191 = scmp.ne.s32.totalorder %s179, %s180
      %p192 = scmp.eq.s32.totalorder %s23, 1
      %p193 = por %p191, %p192
      %p195 = scmp.ne.s32.totalorder %s180, %s194
      %p196 = scmp.eq.s32.totalorder %s23, 0
      %p197 = por %p195, %p196
      %s198 = ssub.s32 %s17, %s24
      %p199 = scmp.eq.s32.totalorder %s198, 0
      %s201 = sadd.s32 %s200, 1
      %s202 = scalar_select %p199, %s200, %s201
      %p205 = pneg %p199
      %p206 = scmp.eq.s32.totalorder %s17, 1
      %p207 = por %p205, %p206
      %p208 = scmp.ne.s32.totalorder %s200, %s203
      %p209 = scmp.eq.s32.totalorder %s17, 0
      %p210 = por %p208, %p209
      %p211 = scmp.ne.s32.totalorder %s200, %s203
      %p212 = scmp.eq.s32.totalorder %s22, 1
      %p213 = por %p211, %p212
      %p214 = scmp.ne.s32.totalorder %s203, %s204
      %p215 = scmp.eq.s32.totalorder %s22, 0
      %p216 = por %p214, %p215
      %p217 = scmp.ne.s32.totalorder %s203, %s204
      %p218 = scmp.eq.s32.totalorder %s23, 1
      %p219 = por %p217, %p218
      %p221 = scmp.ne.s32.totalorder %s204, %s220
      %p222 = scmp.eq.s32.totalorder %s23, 0
      %p223 = por %p221, %p222
      %p224 = scmp.le.s32.totalorder 1, %s17
      %p225 = scmp.lt.s32.totalorder %s17, 3
      %p226 = pnand %p224, %p225
      %p227 = pneg %p226
      // Predicated region
      $region9: #{ms_block_spike_sepconv.3} parent=5 // pred_check
        _
      $region10: #{ms_block_spike_sepconv.3} parent=5 // pred_check_branch
        %229 = sbr.rel (%p226) target = $region12
      $region11: #{ms_block_spike_sepconv.3} parent=5 // pred_region
        %s230 = ssub.s32 %s17, 1
        // Predicated region
        $region13: #{ms_block_spike_sepconv.3} parent=11 // pred_check
          %p231 = pneg %p64
        $region14: #{ms_block_spike_sepconv.3} parent=11 // pred_check_branch
          %233 = sbr.rel (%p231) target = $region16
        $region15: #{ms_block_spike_sepconv.3} parent=11 // pred_region
          _
        $region16: #{ms_block_spike_sepconv.3} parent=11 // pred_fallthru
          _
        // Predicated region
        $region17: #{ms_block_spike_sepconv.3} parent=11 // pred_check
          %p234 = pneg %p85
        $region18: #{ms_block_spike_sepconv.3} parent=11 // pred_check_branch
          %236 = sbr.rel (%p234) target = $region20
        $region19: #{ms_block_spike_sepconv.3} parent=11 // pred_region
          _
        $region20: #{ms_block_spike_sepconv.3} parent=11 // pred_fallthru
          _
        // Predicated region
        $region21: #{ms_block_spike_sepconv.3} parent=11 // pred_check
          %p237 = pneg %p106
        $region22: #{ms_block_spike_sepconv.3} parent=11 // pred_check_branch
          %239 = sbr.rel (%p237) target = $region24
        $region23: #{ms_block_spike_sepconv.3} parent=11 // pred_region
          _
        $region24: #{ms_block_spike_sepconv.3} parent=11 // pred_fallthru
          _
        // Predicated region
        $region25: #{ms_block_spike_sepconv.3} parent=11 // pred_check
          %p240 = pneg %p127
        $region26: #{ms_block_spike_sepconv.3} parent=11 // pred_check_branch
          %242 = sbr.rel (%p240) target = $region28
        $region27: #{ms_block_spike_sepconv.3} parent=11 // pred_region
          _
        $region28: #{ms_block_spike_sepconv.3} parent=11 // pred_fallthru
          _
        // Predicated region
        $region29: #{ms_block_spike_sepconv.3} parent=11 // pred_check
          %p243 = pneg %p148
        $region30: #{ms_block_spike_sepconv.3} parent=11 // pred_check_branch
          %245 = sbr.rel (%p243) target = $region32
        $region31: #{ms_block_spike_sepconv.3} parent=11 // pred_region
          _
        $region32: #{ms_block_spike_sepconv.3} parent=11 // pred_fallthru
          _
        // Predicated region
        $region33: #{ms_block_spike_sepconv.3} parent=11 // pred_check
          %p246 = pneg %p169
        $region34: #{ms_block_spike_sepconv.3} parent=11 // pred_check_branch
          %248 = sbr.rel (%p246) target = $region36
        $region35: #{ms_block_spike_sepconv.3} parent=11 // pred_region
          _
        $region36: #{ms_block_spike_sepconv.3} parent=11 // pred_fallthru
          _
        // Predicated region
        $region37: #{ms_block_spike_sepconv.3} parent=11 // pred_check
          %p249 = pneg %p190
        $region38: #{ms_block_spike_sepconv.3} parent=11 // pred_check_branch
          %251 = sbr.rel (%p249) target = $region40
        $region39: #{ms_block_spike_sepconv.3} parent=11 // pred_region
          _
        $region40: #{ms_block_spike_sepconv.3} parent=11 // pred_fallthru
          _
      $region12: #{ms_block_spike_sepconv.3} parent=5 // pred_fallthru
        _
      %p252 = scmp.lt.s32.totalorder %s17, 2
      // Predicated region
      $region41: #{ms_block_spike_sepconv.3} parent=5 // pred_check
        %p253 = pneg %p252
      $region42: #{ms_block_spike_sepconv.3} parent=5 // pred_check_branch
        %255 = sbr.rel (%p253) target = $region44
      $region43: #{ms_block_spike_sepconv.3} parent=5 // pred_region
        // Predicated region
        $region45: #{ms_block_spike_sepconv.3} parent=43 // pred_check
          %p256 = pneg %p37
        $region46: #{ms_block_spike_sepconv.3} parent=43 // pred_check_branch
          %258 = sbr.rel (%p256) target = $region48
        $region47: #{ms_block_spike_sepconv.3} parent=43 // pred_region
          %s259 = sand.u32 %s27, 1
          %s260 = scalar_lea.sflag [#allocation4], %s259
          %s261 = sand.u32 %s27, 1
          %s262 = smul.addr %s261, 64
          %s263 = scalar_lea.vmem [#allocation3], %s262
          %265 = vsyncadd %s260, 0
          %s266 = smul.addr %s17, 8
          %s267 = smul.addr %s266, 8
          %s268 = scalar_lea.hbm %s0, %s267
          %s269 = sshll.u32 %s268, 4
          %s270 = int_to_ptr.hbm [resolvable:$true] %s269
          %s271 = sshll.u32 %s263, 4
          %s272 = int_to_ptr.vmem [resolvable:$true] %s271
          %277 = dma.hbm_to_vmem [thread:$0]  %s270, 1024, %s272, %s260, 128, 128, 8
        $region48: #{ms_block_spike_sepconv.3} parent=43 // pred_fallthru
          _
      $region44: #{ms_block_spike_sepconv.3} parent=5 // pred_fallthru
        _
      %p278 = scmp.le.s32.totalorder 1, %s17
      %p279 = scmp.lt.s32.totalorder %s17, 3
      %p280 = pnand %p278, %p279
      %p281 = pneg %p280
      // Predicated region
      $region49: #{ms_block_spike_sepconv.3} parent=5 // pred_check
        _
      $region50: #{ms_block_spike_sepconv.3} parent=5 // pred_check_branch
        %283 = sbr.rel (%p280) target = $region52
      $region51: #{ms_block_spike_sepconv.3} parent=5 // pred_region
        %s284 = ssub.s32 %s17, 1
        %s285 = sand.u32 %s30, 1
        %s286 = scalar_lea.sflag [#allocation4], %s285
        %s287 = sand.u32 %s30, 1
        %s288 = smul.addr %s287, 64
        %s289 = scalar_lea.vmem [#allocation3], %s288
        // Predicated region
        $region53: #{ms_block_spike_sepconv.3} parent=51 // pred_check
          %p290 = pneg %p43
        $region54: #{ms_block_spike_sepconv.3} parent=51 // pred_check_branch
          %292 = sbr.rel (%p290) target = $region56
        $region55: #{ms_block_spike_sepconv.3} parent=51 // pred_region
          %294 = dma.done %s286, 1024
        $region56: #{ms_block_spike_sepconv.3} parent=51 // pred_fallthru
          _
        %s295 = sand.u32 %s30, 1
        %s296 = scalar_lea.sflag [#allocation4], %s295
        %s297 = sand.u32 %s30, 1
        %s298 = smul.addr %s297, 64
        %s299 = scalar_lea.vmem [#allocation3], %s298
        %p300 = pneg %p43
        %p301 = pneg %p40
        %p302 = pneg %p64
        %p303 = pneg %p61
        %p304 = pneg %p85
        %p305 = pneg %p82
        %p306 = pneg %p106
        %p307 = pneg %p103
        %p308 = pneg %p127
        %p309 = pneg %p124
        %p310 = pneg %p148
        %p311 = pneg %p145
        %p312 = pneg %p169
        %p313 = pneg %p166
        %p314 = pneg %p190
        %p315 = pneg %p187
        %p316 = pneg %p216
        %p317 = pneg %p213
        %p318 = scmp.lt.s32.totalorder %s22, 1
        %s319 = scalar_select %p318, %s22, 1
        %s320 = smul.addr %s319, 8
        %s321 = smul.addr %s320, 8
        %s322 = scalar_lea.vmem %s8, %s321
        %p323 = scmp.lt.s32.totalorder %s22, 1
        %s324 = scalar_select %p323, %s22, 1
        %s325 = smul.addr %s324, 8
        %s326 = smul.addr %s325, 8
        %s327 = scalar_lea.vmem %s8, %s326
        %v329 = vld [vmem:[%s289] sm:$0xff]
        %v330 = vld [vmem:[%s289 + $0x8] sm:$0xff]
        %v331 = vld [vmem:[%s289 + $0x10] sm:$0xff]
        %v332 = vld [vmem:[%s289 + $0x18] sm:$0xff]
        %v333 = vld [vmem:[%s289 + $0x20] sm:$0xff]
        %v334 = vld [vmem:[%s289 + $0x28] sm:$0xff]
        %v335 = vld [vmem:[%s289 + $0x30] sm:$0xff]
        %v336 = vld [vmem:[%s289 + $0x38] sm:$0xff]
        %v337 = vmax.f32 %v329, 0.0
        %v338 = vmax.f32 %v330, 0.0
        %v339 = vmax.f32 %v331, 0.0
        %v340 = vmax.f32 %v332, 0.0
        %v341 = vmax.f32 %v333, 0.0
        %v342 = vmax.f32 %v334, 0.0
        %v343 = vmax.f32 %v335, 0.0
        %v344 = vmax.f32 %v336, 0.0
        %v345 = vmin.f32 %v337, 4.0
        %v346 = vmin.f32 %v338, 4.0
        %v347 = vmin.f32 %v339, 4.0
        %v348 = vmin.f32 %v340, 4.0
        %v349 = vmin.f32 %v341, 4.0
        %v350 = vmin.f32 %v342, 4.0
        %v351 = vmin.f32 %v343, 4.0
        %v352 = vmin.f32 %v344, 4.0
        %v353 = vround.ne.pseudo %v345
        %v354 = vround.ne.pseudo %v346
        %v355 = vround.ne.pseudo %v347
        %v356 = vround.ne.pseudo %v348
        %v357 = vround.ne.pseudo %v349
        %v358 = vround.ne.pseudo %v350
        %v359 = vround.ne.pseudo %v351
        %v360 = vround.ne.pseudo %v352
        %v361 = vmul.f32 %v353, 0.25
        %v362 = vmul.f32 %v354, 0.25
        %v363 = vmul.f32 %v355, 0.25
        %v364 = vmul.f32 %v356, 0.25
        %v365 = vmul.f32 %v357, 0.25
        %v366 = vmul.f32 %v358, 0.25
        %v367 = vmul.f32 %v359, 0.25
        %v368 = vmul.f32 %v360, 0.25
        %v369 = vpack.c.bf16 %v362, %v361
        %v370 = vpack.c.bf16 %v364, %v363
        %v371 = vpack.c.bf16 %v366, %v365
        %v372 = vpack.c.bf16 %v368, %v367
        %v373 = vld [vmem:[%s1] sm:$0xf]
        %v374 = vld [vmem:[%s1 + $0x4] sm:$0xf]
        %v375 = vld [vmem:[%s1 + $0x8] sm:$0xf]
        %v376 = vld [vmem:[%s1 + $0xc] sm:$0xf]
        %v377 = vld [vmem:[%s2] sm:$0x1]
        %v379 = vperm.slane %v377, 0
        %v385 = vunpack.c.l.b16 %v373
        %v386 = vunpack.c.l.b16 %v374
        %v387 = vunpack.c.l.b16 %v375
        %v388 = vunpack.c.l.b16 %v376
        %v389 = vpack.c.b16 %v386, %v385
        %v390 = vpack.c.b16 %v388, %v387
        %vm393 = vcmask 261120
        %v395 = vsel %vm393, %v369, 0
        %v398 = vsel %vm393, %v370, 0
        %v401 = vsel %vm393, %v371, 0
        %v404 = vsel %vm393, %v372, 0
        %406 = vmatpush.bf16.msra.mxu0 0
        %407 = vmatpush.bf16.msra.mxu0 0
        %408 = vmatpush.bf16.msra.mxu0 0
        %409 = vmatpush.bf16.msra.mxu0 0
        %410 = vmatpush.bf16.msra.mxu0 0
        %411 = vmatpush.bf16.msra.mxu0 0
        %412 = vmatpush.bf16.msra.mxu0 %v390
        %413 = vmatpush.bf16.msra.mxu0 %v389
        %414 = vmatmul.bf16.gmra.mxu0 %v395
        %v415 = vpop.f32.mrf.mxu0
        %v416 = vadd.f32 %v379, %v415
        %v417 = vpop.f32.mrf.mxu0
        %v418 = vadd.f32 %v379, %v417
        %419 = vmatmul.bf16.gmra.mxu0 %v398
        %v420 = vpop.f32.mrf.mxu0
        %v421 = vadd.f32 %v379, %v420
        %v422 = vpop.f32.mrf.mxu0
        %v423 = vadd.f32 %v379, %v422
        %424 = vmatmul.bf16.gmra.mxu0 %v401
        %v425 = vpop.f32.mrf.mxu0
        %v426 = vadd.f32 %v379, %v425
        %v427 = vpop.f32.mrf.mxu0
        %v428 = vadd.f32 %v379, %v427
        %429 = vmatmul.bf16.gmra.mxu0 %v404
        %v430 = vpop.f32.mrf.mxu0
        %v431 = vadd.f32 %v379, %v430
        %v432 = vpop.f32.mrf.mxu0
        %v433 = vadd.f32 %v379, %v432
        %434 = vdwg.mxu0
        %v435 = vmax.f32 %v416, 0.0
        %v436 = vmax.f32 %v418, 0.0
        %v437 = vmax.f32 %v421, 0.0
        %v438 = vmax.f32 %v423, 0.0
        %v439 = vmax.f32 %v426, 0.0
        %v440 = vmax.f32 %v428, 0.0
        %v441 = vmax.f32 %v431, 0.0
        %v442 = vmax.f32 %v433, 0.0
        %v443 = vmin.f32 %v435, 4.0
        %v444 = vmin.f32 %v436, 4.0
        %v445 = vmin.f32 %v437, 4.0
        %v446 = vmin.f32 %v438, 4.0
        %v447 = vmin.f32 %v439, 4.0
        %v448 = vmin.f32 %v440, 4.0
        %v449 = vmin.f32 %v441, 4.0
        %v450 = vmin.f32 %v442, 4.0
        %v451 = vround.ne.pseudo %v443
        %v452 = vround.ne.pseudo %v444
        %v453 = vround.ne.pseudo %v445
        %v454 = vround.ne.pseudo %v446
        %v455 = vround.ne.pseudo %v447
        %v456 = vround.ne.pseudo %v448
        %v457 = vround.ne.pseudo %v449
        %v458 = vround.ne.pseudo %v450
        %v459 = vmul.f32 %v451, 0.25
        %v460 = vmul.f32 %v452, 0.25
        %v461 = vmul.f32 %v453, 0.25
        %v462 = vmul.f32 %v454, 0.25
        %v463 = vmul.f32 %v455, 0.25
        %v464 = vmul.f32 %v456, 0.25
        %v465 = vmul.f32 %v457, 0.25
        %v466 = vmul.f32 %v458, 0.25
        %vm467 = vcmask 523264
        %468 = vst.msk [vmem:[#allocation2] sm:$0xff] %vm467, 0.0
        %469 = vst.msk [vmem:[#allocation2 + $0x8] sm:$0xff] %vm467, 0.0
        %470 = vst.msk [vmem:[#allocation2 + $0x10] sm:$0xff] %vm467, 0.0
        %471 = vst.msk [vmem:[#allocation2 + $0x18] sm:$0xff] %vm467, 0.0
        %472 = vst.msk [vmem:[#allocation2 + $0x20] sm:$0xff] %vm467, 0.0
        %473 = vst.msk [vmem:[#allocation2 + $0x28] sm:$0xff] %vm467, 0.0
        %474 = vst.msk [vmem:[#allocation2 + $0x30] sm:$0xff] %vm467, 0.0
        %475 = vst.msk [vmem:[#allocation2 + $0x38] sm:$0xff] %vm467, 0.0
        %476 = vst.msk [vmem:[#allocation2 + $0x40] sm:$0xff] %vm467, 0.0
        %477 = vst.msk [vmem:[#allocation2 + $0x48] sm:$0xff] %vm467, 0.0
        %vm478 = vcmask 517120
        %479 = vst.msk [vmem:[#allocation2 + $0x50] sm:$0x3] %vm478, 0.0
        %480 = vst.msk [vmem:[#allocation2 + $0x9] sm:$0xff] %vm467, %v459
        %481 = vst.msk [vmem:[#allocation2 + $0x11] sm:$0xff] %vm467, %v460
        %482 = vst.msk [vmem:[#allocation2 + $0x19] sm:$0xff] %vm467, %v461
        %483 = vst.msk [vmem:[#allocation2 + $0x21] sm:$0xff] %vm467, %v462
        %484 = vst.msk [vmem:[#allocation2 + $0x29] sm:$0xff] %vm467, %v463
        %485 = vst.msk [vmem:[#allocation2 + $0x31] sm:$0xff] %vm467, %v464
        %486 = vst.msk [vmem:[#allocation2 + $0x39] sm:$0xff] %vm467, %v465
        %487 = vst.msk [vmem:[#allocation2 + $0x41] sm:$0xff] %vm467, %v466
        %v488 = vld [vmem:[%s3] sm:$0x7]
        %v489 = vld [vmem:[%s3 + $0x4] sm:$0x7]
        %v490 = vld [vmem:[%s3 + $0x8] sm:$0x7]
        %v491 = vlaneseq
        %v492 = vshrl.u32 %v491, 7
        %v493 = vadd.s32 %v492, 8
        %v494 = vadd.s32 %v492, 16
        %v495 = vadd.s32 %v492, 24
        %v496 = vadd.s32 %v492, 32
        %v497 = vadd.s32 %v492, 40
        %v498 = vadd.s32 %v492, 48
        %v499 = vadd.s32 %v492, 56
        %vm500 = vcmp.lt.s32.totalorder %v492, 0
        %v501 = vsub.s32 0, %v492
        %v502 = vsel %vm500, %v501, %v492
        %v503 = vshrl.u32 %v502, 3
        %v504 = vand.u32 %v502, 7
        %v505 = vsub.s32 0, %v504
        %v506 = vsel %vm500, %v505, %v504
        %vm507 = vcmp.lt.s32.totalorder %v493, 0
        %v508 = vsub.s32 0, %v493
        %v509 = vsel %vm507, %v508, %v493
        %v510 = vshrl.u32 %v509, 3
        %v511 = vand.u32 %v509, 7
        %v512 = vsub.s32 0, %v511
        %v513 = vsel %vm507, %v512, %v511
        %vm514 = vcmp.lt.s32.totalorder %v494, 0
        %v515 = vsub.s32 0, %v494
        %v516 = vsel %vm514, %v515, %v494
        %v517 = vshrl.u32 %v516, 3
        %v518 = vand.u32 %v516, 7
        %v519 = vsub.s32 0, %v518
        %v520 = vsel %vm514, %v519, %v518
        %vm521 = vcmp.lt.s32.totalorder %v495, 0
        %v522 = vsub.s32 0, %v495
        %v523 = vsel %vm521, %v522, %v495
        %v524 = vshrl.u32 %v523, 3
        %v525 = vand.u32 %v523, 7
        %v526 = vsub.s32 0, %v525
        %v527 = vsel %vm521, %v526, %v525
        %vm528 = vcmp.lt.s32.totalorder %v496, 0
        %v529 = vsub.s32 0, %v496
        %v530 = vsel %vm528, %v529, %v496
        %v531 = vshrl.u32 %v530, 3
        %v532 = vand.u32 %v530, 7
        %v533 = vsub.s32 0, %v532
        %v534 = vsel %vm528, %v533, %v532
        %vm535 = vcmp.lt.s32.totalorder %v497, 0
        %v536 = vsub.s32 0, %v497
        %v537 = vsel %vm535, %v536, %v497
        %v538 = vshrl.u32 %v537, 3
        %v539 = vand.u32 %v537, 7
        %v540 = vsub.s32 0, %v539
        %v541 = vsel %vm535, %v540, %v539
        %vm542 = vcmp.lt.s32.totalorder %v498, 0
        %v543 = vsub.s32 0, %v498
        %v544 = vsel %vm542, %v543, %v498
        %v545 = vshrl.u32 %v544, 3
        %v546 = vand.u32 %v544, 7
        %v547 = vsub.s32 0, %v546
        %v548 = vsel %vm542, %v547, %v546
        %vm549 = vcmp.lt.s32.totalorder %v499, 0
        %v550 = vsub.s32 0, %v499
        %v551 = vsel %vm549, %v550, %v499
        %v552 = vshrl.u32 %v551, 3
        %v553 = vand.u32 %v551, 7
        %v554 = vsub.s32 0, %v553
        %v555 = vsel %vm549, %v554, %v553
        %vm556 = vcmp.ne.s32.totalorder %v506, 0
        %vm557 = vcmp.ne.s32.totalorder %v513, 0
        %vm558 = vcmp.ne.s32.totalorder %v520, 0
        %vm559 = vcmp.ne.s32.totalorder %v527, 0
        %vm560 = vcmp.ne.s32.totalorder %v534, 0
        %vm561 = vcmp.ne.s32.totalorder %v541, 0
        %vm562 = vcmp.ne.s32.totalorder %v548, 0
        %vm563 = vcmp.ne.s32.totalorder %v555, 0
        %vm564 = vcmp.lt.s32.totalorder %v506, 0
        %vm565 = vcmp.lt.s32.totalorder %v513, 0
        %vm566 = vcmp.lt.s32.totalorder %v520, 0
        %vm567 = vcmp.lt.s32.totalorder %v527, 0
        %vm568 = vcmp.lt.s32.totalorder %v534, 0
        %vm569 = vcmp.lt.s32.totalorder %v541, 0
        %vm570 = vcmp.lt.s32.totalorder %v548, 0
        %vm571 = vcmp.lt.s32.totalorder %v555, 0
        %vm572 = vmand %vm564, %vm556
        %vm573 = vmand %vm565, %vm557
        %vm574 = vmand %vm566, %vm558
        %vm575 = vmand %vm567, %vm559
        %vm576 = vmand %vm568, %vm560
        %vm577 = vmand %vm569, %vm561
        %vm578 = vmand %vm570, %vm562
        %vm579 = vmand %vm571, %vm563
        %v580 = vadd.s32 %v506, 8
        %v581 = vadd.s32 %v513, 8
        %v582 = vadd.s32 %v520, 8
        %v583 = vadd.s32 %v527, 8
        %v584 = vadd.s32 %v534, 8
        %v585 = vadd.s32 %v541, 8
        %v586 = vadd.s32 %v548, 8
        %v587 = vadd.s32 %v555, 8
        %v588 = vsel %vm572, %v580, %v506
        %v589 = vsel %vm573, %v581, %v513
        %v590 = vsel %vm574, %v582, %v520
        %v591 = vsel %vm575, %v583, %v527
        %v592 = vsel %vm576, %v584, %v534
        %v593 = vsel %vm577, %v585, %v541
        %v594 = vsel %vm578, %v586, %v548
        %v595 = vsel %vm579, %v587, %v555
        %v596 = vld [vmem:[#allocation2] sm:$0xff]
        %v597 = vld [vmem:[#allocation2 + $0x8] sm:$0xff]
        %v598 = vld [vmem:[#allocation2 + $0x10] sm:$0xff]
        %v599 = vld [vmem:[#allocation2 + $0x18] sm:$0xff]
        %v600 = vld [vmem:[#allocation2 + $0x20] sm:$0xff]
        %v601 = vld [vmem:[#allocation2 + $0x28] sm:$0xff]
        %v602 = vld [vmem:[#allocation2 + $0x30] sm:$0xff]
        %v603 = vld [vmem:[#allocation2 + $0x38] sm:$0xff]
        %v604 = vadd.s32 %v588, 4294967295
        %v605 = vadd.s32 %v589, 4294967295
        %v606 = vadd.s32 %v590, 4294967295
        %v607 = vadd.s32 %v591, 4294967295
        %v608 = vadd.s32 %v592, 4294967295
        %v609 = vadd.s32 %v593, 4294967295
        %v610 = vadd.s32 %v594, 4294967295
        %v611 = vadd.s32 %v595, 4294967295
        %vm612 = vcmp.ge.s32.totalorder %v604, 0
        %vm613 = vcmp.ge.s32.totalorder %v605, 0
        %vm614 = vcmp.ge.s32.totalorder %v606, 0
        %vm615 = vcmp.ge.s32.totalorder %v607, 0
        %vm616 = vcmp.ge.s32.totalorder %v608, 0
        %vm617 = vcmp.ge.s32.totalorder %v609, 0
        %vm618 = vcmp.ge.s32.totalorder %v610, 0
        %vm619 = vcmp.ge.s32.totalorder %v611, 0
        %vm620 = vcmp.lt.s32.totalorder %v604, 8
        %vm621 = vcmp.lt.s32.totalorder %v605, 8
        %vm622 = vcmp.lt.s32.totalorder %v606, 8
        %vm623 = vcmp.lt.s32.totalorder %v607, 8
        %vm624 = vcmp.lt.s32.totalorder %v608, 8
        %vm625 = vcmp.lt.s32.totalorder %v609, 8
        %vm626 = vcmp.lt.s32.totalorder %v610, 8
        %vm627 = vcmp.lt.s32.totalorder %v611, 8
        %vm628 = vmand %vm612, %vm620
        %vm629 = vmand %vm613, %vm621
        %vm630 = vmand %vm614, %vm622
        %vm631 = vmand %vm615, %vm623
        %vm632 = vmand %vm616, %vm624
        %vm633 = vmand %vm617, %vm625
        %vm634 = vmand %vm618, %vm626
        %vm635 = vmand %vm619, %vm627
        %v636 = vsel %vm628, 1, 0
        %v637 = vsel %vm629, 1, 0
        %v638 = vsel %vm630, 1, 0
        %v639 = vsel %vm631, 1, 0
        %v640 = vsel %vm632, 1, 0
        %v641 = vsel %vm633, 1, 0
        %v642 = vsel %vm634, 1, 0
        %v643 = vsel %vm635, 1, 0
        %vm644 = vcmp.eq.s32.totalorder %v636, 1
        %vm645 = vcmp.eq.s32.totalorder %v637, 1
        %vm646 = vcmp.eq.s32.totalorder %v638, 1
        %vm647 = vcmp.eq.s32.totalorder %v639, 1
        %vm648 = vcmp.eq.s32.totalorder %v640, 1
        %vm649 = vcmp.eq.s32.totalorder %v641, 1
        %vm650 = vcmp.eq.s32.totalorder %v642, 1
        %vm651 = vcmp.eq.s32.totalorder %v643, 1
        %v652 = vsel %vm644, %v596, 0.0
        %v653 = vsel %vm645, %v597, 0.0
        %v654 = vsel %vm646, %v598, 0.0
        %v655 = vsel %vm647, %v599, 0.0
        %v656 = vsel %vm648, %v600, 0.0
        %v657 = vsel %vm649, %v601, 0.0
        %v658 = vsel %vm650, %v602, 0.0
        %v659 = vsel %vm651, %v603, 0.0
        %v660 = vperm.slane %v488, 0
        %v661 = vmul.f32 %v652, %v660
        %v662 = vmul.f32 %v653, %v660
        %v663 = vmul.f32 %v654, %v660
        %v664 = vmul.f32 %v655, %v660
        %v665 = vmul.f32 %v656, %v660
        %v666 = vmul.f32 %v657, %v660
        %v667 = vmul.f32 %v658, %v660
        %v668 = vmul.f32 %v659, %v660
        %v669 = vadd.f32 %v661, 0.0
        %v670 = vadd.f32 %v662, 0.0
        %v671 = vadd.f32 %v663, 0.0
        %v672 = vadd.f32 %v664, 0.0
        %v673 = vadd.f32 %v665, 0.0
        %v674 = vadd.f32 %v666, 0.0
        %v675 = vadd.f32 %v667, 0.0
        %v676 = vadd.f32 %v668, 0.0
        %v677 = vld [vmem:[#allocation2 + $0x1] sm:$0xff]
        %v678 = vld [vmem:[#allocation2 + $0x9] sm:$0xff]
        %v679 = vld [vmem:[#allocation2 + $0x11] sm:$0xff]
        %v680 = vld [vmem:[#allocation2 + $0x19] sm:$0xff]
        %v681 = vld [vmem:[#allocation2 + $0x21] sm:$0xff]
        %v682 = vld [vmem:[#allocation2 + $0x29] sm:$0xff]
        %v683 = vld [vmem:[#allocation2 + $0x31] sm:$0xff]
        %v684 = vld [vmem:[#allocation2 + $0x39] sm:$0xff]
        %v685 = vperm.slane %v488, 1
        %v686 = vmul.f32 %v677, %v685
        %v687 = vmul.f32 %v678, %v685
        %v688 = vmul.f32 %v679, %v685
        %v689 = vmul.f32 %v680, %v685
        %v690 = vmul.f32 %v681, %v685
        %v691 = vmul.f32 %v682, %v685
        %v692 = vmul.f32 %v683, %v685
        %v693 = vmul.f32 %v684, %v685
        %v694 = vadd.f32 %v669, %v686
        %v695 = vadd.f32 %v670, %v687
        %v696 = vadd.f32 %v671, %v688
        %v697 = vadd.f32 %v672, %v689
        %v698 = vadd.f32 %v673, %v690
        %v699 = vadd.f32 %v674, %v691
        %v700 = vadd.f32 %v675, %v692
        %v701 = vadd.f32 %v676, %v693
        %v702 = vld [vmem:[#allocation2 + $0x2] sm:$0xff]
        %v703 = vld [vmem:[#allocation2 + $0xa] sm:$0xff]
        %v704 = vld [vmem:[#allocation2 + $0x12] sm:$0xff]
        %v705 = vld [vmem:[#allocation2 + $0x1a] sm:$0xff]
        %v706 = vld [vmem:[#allocation2 + $0x22] sm:$0xff]
        %v707 = vld [vmem:[#allocation2 + $0x2a] sm:$0xff]
        %v708 = vld [vmem:[#allocation2 + $0x32] sm:$0xff]
        %v709 = vld [vmem:[#allocation2 + $0x3a] sm:$0xff]
        %v710 = vadd.s32 %v588, 1
        %v711 = vadd.s32 %v589, 1
        %v712 = vadd.s32 %v590, 1
        %v713 = vadd.s32 %v591, 1
        %v714 = vadd.s32 %v592, 1
        %v715 = vadd.s32 %v593, 1
        %v716 = vadd.s32 %v594, 1
        %v717 = vadd.s32 %v595, 1
        %vm718 = vcmp.ge.s32.totalorder %v710, 0
        %vm719 = vcmp.ge.s32.totalorder %v711, 0
        %vm720 = vcmp.ge.s32.totalorder %v712, 0
        %vm721 = vcmp.ge.s32.totalorder %v713, 0
        %vm722 = vcmp.ge.s32.totalorder %v714, 0
        %vm723 = vcmp.ge.s32.totalorder %v715, 0
        %vm724 = vcmp.ge.s32.totalorder %v716, 0
        %vm725 = vcmp.ge.s32.totalorder %v717, 0
        %vm726 = vcmp.lt.s32.totalorder %v710, 8
        %vm727 = vcmp.lt.s32.totalorder %v711, 8
        %vm728 = vcmp.lt.s32.totalorder %v712, 8
        %vm729 = vcmp.lt.s32.totalorder %v713, 8
        %vm730 = vcmp.lt.s32.totalorder %v714, 8
        %vm731 = vcmp.lt.s32.totalorder %v715, 8
        %vm732 = vcmp.lt.s32.totalorder %v716, 8
        %vm733 = vcmp.lt.s32.totalorder %v717, 8
        %vm734 = vmand %vm718, %vm726
        %vm735 = vmand %vm719, %vm727
        %vm736 = vmand %vm720, %vm728
        %vm737 = vmand %vm721, %vm729
        %vm738 = vmand %vm722, %vm730
        %vm739 = vmand %vm723, %vm731
        %vm740 = vmand %vm724, %vm732
        %vm741 = vmand %vm725, %vm733
        %v742 = vsel %vm734, 1, 0
        %v743 = vsel %vm735, 1, 0
        %v744 = vsel %vm736, 1, 0
        %v745 = vsel %vm737, 1, 0
        %v746 = vsel %vm738, 1, 0
        %v747 = vsel %vm739, 1, 0
        %v748 = vsel %vm740, 1, 0
        %v749 = vsel %vm741, 1, 0
        %vm750 = vcmp.eq.s32.totalorder %v742, 1
        %vm751 = vcmp.eq.s32.totalorder %v743, 1
        %vm752 = vcmp.eq.s32.totalorder %v744, 1
        %vm753 = vcmp.eq.s32.totalorder %v745, 1
        %vm754 = vcmp.eq.s32.totalorder %v746, 1
        %vm755 = vcmp.eq.s32.totalorder %v747, 1
        %vm756 = vcmp.eq.s32.totalorder %v748, 1
        %vm757 = vcmp.eq.s32.totalorder %v749, 1
        %v758 = vsel %vm750, %v702, 0.0
        %v759 = vsel %vm751, %v703, 0.0
        %v760 = vsel %vm752, %v704, 0.0
        %v761 = vsel %vm753, %v705, 0.0
        %v762 = vsel %vm754, %v706, 0.0
        %v763 = vsel %vm755, %v707, 0.0
        %v764 = vsel %vm756, %v708, 0.0
        %v765 = vsel %vm757, %v709, 0.0
        %v766 = vperm.slane %v488, 2
        %v767 = vmul.f32 %v758, %v766
        %v768 = vmul.f32 %v759, %v766
        %v769 = vmul.f32 %v760, %v766
        %v770 = vmul.f32 %v761, %v766
        %v771 = vmul.f32 %v762, %v766
        %v772 = vmul.f32 %v763, %v766
        %v773 = vmul.f32 %v764, %v766
        %v774 = vmul.f32 %v765, %v766
        %v775 = vadd.f32 %v694, %v767
        %v776 = vadd.f32 %v695, %v768
        %v777 = vadd.f32 %v696, %v769
        %v778 = vadd.f32 %v697, %v770
        %v779 = vadd.f32 %v698, %v771
        %v780 = vadd.f32 %v699, %v772
        %v781 = vadd.f32 %v700, %v773
        %v782 = vadd.f32 %v701, %v774
        %v783 = vld [vmem:[#allocation2 + $0x40] sm:$0xff]
        %v784 = vsel %vm644, %v597, 0.0
        %v785 = vsel %vm645, %v598, 0.0
        %v786 = vsel %vm646, %v599, 0.0
        %v787 = vsel %vm647, %v600, 0.0
        %v788 = vsel %vm648, %v601, 0.0
        %v789 = vsel %vm649, %v602, 0.0
        %v790 = vsel %vm650, %v603, 0.0
        %v791 = vsel %vm651, %v783, 0.0
        %v792 = vperm.slane %v489, 0
        %v793 = vmul.f32 %v784, %v792
        %v794 = vmul.f32 %v785, %v792
        %v795 = vmul.f32 %v786, %v792
        %v796 = vmul.f32 %v787, %v792
        %v797 = vmul.f32 %v788, %v792
        %v798 = vmul.f32 %v789, %v792
        %v799 = vmul.f32 %v790, %v792
        %v800 = vmul.f32 %v791, %v792
        %v801 = vadd.f32 %v775, %v793
        %v802 = vadd.f32 %v776, %v794
        %v803 = vadd.f32 %v777, %v795
        %v804 = vadd.f32 %v778, %v796
        %v805 = vadd.f32 %v779, %v797
        %v806 = vadd.f32 %v780, %v798
        %v807 = vadd.f32 %v781, %v799
        %v808 = vadd.f32 %v782, %v800
        %v809 = vld [vmem:[#allocation2 + $0x41] sm:$0xff]
        %v810 = vperm.slane %v489, 1
        %v811 = vmul.f32 %v678, %v810
        %v812 = vmul.f32 %v679, %v810
        %v813 = vmul.f32 %v680, %v810
        %v814 = vmul.f32 %v681, %v810
        %v815 = vmul.f32 %v682, %v810
        %v816 = vmul.f32 %v683, %v810
        %v817 = vmul.f32 %v684, %v810
        %v818 = vmul.f32 %v809, %v810
        %v819 = vadd.f32 %v801, %v811
        %v820 = vadd.f32 %v802, %v812
        %v821 = vadd.f32 %v803, %v813
        %v822 = vadd.f32 %v804, %v814
        %v823 = vadd.f32 %v805, %v815
        %v824 = vadd.f32 %v806, %v816
        %v825 = vadd.f32 %v807, %v817
        %v826 = vadd.f32 %v808, %v818
        %v827 = vld [vmem:[#allocation2 + $0x42] sm:$0xff]
        %v828 = vsel %vm750, %v703, 0.0
        %v829 = vsel %vm751, %v704, 0.0
        %v830 = vsel %vm752, %v705, 0.0
        %v831 = vsel %vm753, %v706, 0.0
        %v832 = vsel %vm754, %v707, 0.0
        %v833 = vsel %vm755, %v708, 0.0
        %v834 = vsel %vm756, %v709, 0.0
        %v835 = vsel %vm757, %v827, 0.0
        %v836 = vperm.slane %v489, 2
        %v837 = vmul.f32 %v828, %v836
        %v838 = vmul.f32 %v829, %v836
        %v839 = vmul.f32 %v830, %v836
        %v840 = vmul.f32 %v831, %v836
        %v841 = vmul.f32 %v832, %v836
        %v842 = vmul.f32 %v833, %v836
        %v843 = vmul.f32 %v834, %v836
        %v844 = vmul.f32 %v835, %v836
        %v845 = vadd.f32 %v819, %v837
        %v846 = vadd.f32 %v820, %v838
        %v847 = vadd.f32 %v821, %v839
        %v848 = vadd.f32 %v822, %v840
        %v849 = vadd.f32 %v823, %v841
        %v850 = vadd.f32 %v824, %v842
        %v851 = vadd.f32 %v825, %v843
        %v852 = vadd.f32 %v826, %v844
        %v853 = vld [vmem:[#allocation2 + $0x48] sm:$0xff]
        %v854 = vsel %vm644, %v598, 0.0
        %v855 = vsel %vm645, %v599, 0.0
        %v856 = vsel %vm646, %v600, 0.0
        %v857 = vsel %vm647, %v601, 0.0
        %v858 = vsel %vm648, %v602, 0.0
        %v859 = vsel %vm649, %v603, 0.0
        %v860 = vsel %vm650, %v783, 0.0
        %v861 = vsel %vm651, %v853, 0.0
        %v862 = vperm.slane %v490, 0
        %v863 = vmul.f32 %v854, %v862
        %v864 = vmul.f32 %v855, %v862
        %v865 = vmul.f32 %v856, %v862
        %v866 = vmul.f32 %v857, %v862
        %v867 = vmul.f32 %v858, %v862
        %v868 = vmul.f32 %v859, %v862
        %v869 = vmul.f32 %v860, %v862
        %v870 = vmul.f32 %v861, %v862
        %v871 = vadd.f32 %v845, %v863
        %v872 = vadd.f32 %v846, %v864
        %v873 = vadd.f32 %v847, %v865
        %v874 = vadd.f32 %v848, %v866
        %v875 = vadd.f32 %v849, %v867
        %v876 = vadd.f32 %v850, %v868
        %v877 = vadd.f32 %v851, %v869
        %v878 = vadd.f32 %v852, %v870
        %v879 = vld [vmem:[#allocation2 + $0x49] sm:$0xff]
        %v880 = vperm.slane %v490, 1
        %v881 = vmul.f32 %v679, %v880
        %v882 = vmul.f32 %v680, %v880
        %v883 = vmul.f32 %v681, %v880
        %v884 = vmul.f32 %v682, %v880
        %v885 = vmul.f32 %v683, %v880
        %v886 = vmul.f32 %v684, %v880
        %v887 = vmul.f32 %v809, %v880
        %v888 = vmul.f32 %v879, %v880
        %v889 = vadd.f32 %v871, %v881
        %v890 = vadd.f32 %v872, %v882
        %v891 = vadd.f32 %v873, %v883
        %v892 = vadd.f32 %v874, %v884
        %v893 = vadd.f32 %v875, %v885
        %v894 = vadd.f32 %v876, %v886
        %v895 = vadd.f32 %v877, %v887
        %v896 = vadd.f32 %v878, %v888
        %v897 = vld [vmem:[#allocation2 + $0x4a] sm:$0xff]
        %v898 = vsel %vm750, %v704, 0.0
        %v899 = vsel %vm751, %v705, 0.0
        %v900 = vsel %vm752, %v706, 0.0
        %v901 = vsel %vm753, %v707, 0.0
        %v902 = vsel %vm754, %v708, 0.0
        %v903 = vsel %vm755, %v709, 0.0
        %v904 = vsel %vm756, %v827, 0.0
        %v905 = vsel %vm757, %v897, 0.0
        %v906 = vperm.slane %v490, 2
        %v907 = vmul.f32 %v898, %v906
        %v908 = vmul.f32 %v899, %v906
        %v909 = vmul.f32 %v900, %v906
        %v910 = vmul.f32 %v901, %v906
        %v911 = vmul.f32 %v902, %v906
        %v912 = vmul.f32 %v903, %v906
        %v913 = vmul.f32 %v904, %v906
        %v914 = vmul.f32 %v905, %v906
        %v915 = vadd.f32 %v889, %v907
        %v916 = vadd.f32 %v890, %v908
        %v917 = vadd.f32 %v891, %v909
        %v918 = vadd.f32 %v892, %v910
        %v919 = vadd.f32 %v893, %v911
        %v920 = vadd.f32 %v894, %v912
        %v921 = vadd.f32 %v895, %v913
        %v922 = vadd.f32 %v896, %v914
        %v923 = vld [vmem:[%s4] sm:$0x1]
        %v925 = vperm.slane %v923, 0
        %v927 = vmul.f32 %v915, %v925
        %v928 = vmul.f32 %v916, %v925
        %v929 = vmul.f32 %v917, %v925
        %v930 = vmul.f32 %v918, %v925
        %v931 = vmul.f32 %v919, %v925
        %v932 = vmul.f32 %v920, %v925
        %v933 = vmul.f32 %v921, %v925
        %v934 = vmul.f32 %v922, %v925
        %v935 = vld [vmem:[%s5] sm:$0x1]
        %v937 = vperm.slane %v935, 0
        %v939 = vadd.f32 %v927, %v937
        %v940 = vadd.f32 %v928, %v937
        %v941 = vadd.f32 %v929, %v937
        %v942 = vadd.f32 %v930, %v937
        %v943 = vadd.f32 %v931, %v937
        %v944 = vadd.f32 %v932, %v937
        %v945 = vadd.f32 %v933, %v937
        %v946 = vadd.f32 %v934, %v937
        %v947 = vmax.f32 %v939, 0.0
        %v948 = vmax.f32 %v940, 0.0
        %v949 = vmax.f32 %v941, 0.0
        %v950 = vmax.f32 %v942, 0.0
        %v951 = vmax.f32 %v943, 0.0
        %v952 = vmax.f32 %v944, 0.0
        %v953 = vmax.f32 %v945, 0.0
        %v954 = vmax.f32 %v946, 0.0
        %v955 = vmin.f32 %v947, 4.0
        %v956 = vmin.f32 %v948, 4.0
        %v957 = vmin.f32 %v949, 4.0
        %v958 = vmin.f32 %v950, 4.0
        %v959 = vmin.f32 %v951, 4.0
        %v960 = vmin.f32 %v952, 4.0
        %v961 = vmin.f32 %v953, 4.0
        %v962 = vmin.f32 %v954, 4.0
        %v963 = vround.ne.pseudo %v955
        %v964 = vround.ne.pseudo %v956
        %v965 = vround.ne.pseudo %v957
        %v966 = vround.ne.pseudo %v958
        %v967 = vround.ne.pseudo %v959
        %v968 = vround.ne.pseudo %v960
        %v969 = vround.ne.pseudo %v961
        %v970 = vround.ne.pseudo %v962
        %v971 = vmul.f32 %v963, 0.25
        %v972 = vmul.f32 %v964, 0.25
        %v973 = vmul.f32 %v965, 0.25
        %v974 = vmul.f32 %v966, 0.25
        %v975 = vmul.f32 %v967, 0.25
        %v976 = vmul.f32 %v968, 0.25
        %v977 = vmul.f32 %v969, 0.25
        %v978 = vmul.f32 %v970, 0.25
        %v979 = vpack.c.bf16 %v972, %v971
        %v980 = vpack.c.bf16 %v974, %v973
        %v981 = vpack.c.bf16 %v976, %v975
        %v982 = vpack.c.bf16 %v978, %v977
        %v983 = vld [vmem:[%s6] sm:$0xf]
        %v984 = vld [vmem:[%s6 + $0x4] sm:$0xf]
        %v985 = vld [vmem:[%s6 + $0x8] sm:$0xf]
        %v986 = vld [vmem:[%s6 + $0xc] sm:$0xf]
        %v987 = vld [vmem:[%s6 + $0x10] sm:$0xf]
        %v988 = vld [vmem:[%s6 + $0x14] sm:$0xf]
        %v989 = vld [vmem:[%s6 + $0x18] sm:$0xf]
        %v990 = vld [vmem:[%s6 + $0x1c] sm:$0xf]
        %v991 = vld [vmem:[%s7] sm:$0x1]
        %v993 = vperm.slane %v991, 0
        %v1003 = vunpack.c.l.b16 %v983
        %v1004 = vunpack.c.l.b16 %v984
        %v1005 = vunpack.c.l.b16 %v985
        %v1006 = vunpack.c.l.b16 %v986
        %v1007 = vunpack.c.l.b16 %v987
        %v1008 = vunpack.c.l.b16 %v988
        %v1009 = vunpack.c.l.b16 %v989
        %v1010 = vunpack.c.l.b16 %v990
        %v1011 = vpack.c.b16 %v1004, %v1003
        %v1012 = vpack.c.b16 %v1006, %v1005
        %v1013 = vpack.c.b16 %v1008, %v1007
        %v1014 = vpack.c.b16 %v1010, %v1009
        %v1020 = vsel %vm467, %v979, 0
        %v1023 = vsel %vm467, %v980, 0
        %v1026 = vsel %vm467, %v981, 0
        %v1029 = vsel %vm467, %v982, 0
        %1031 = vmatpush.bf16.msra.mxu0 0
        %1032 = vmatpush.bf16.msra.mxu0 0
        %1033 = vmatpush.bf16.msra.mxu0 0
        %1034 = vmatpush.bf16.msra.mxu0 0
        %1035 = vmatpush.bf16.msra.mxu0 %v1014
        %1036 = vmatpush.bf16.msra.mxu0 %v1013
        %1037 = vmatpush.bf16.msra.mxu0 %v1012
        %1038 = vmatpush.bf16.msra.mxu0 %v1011
        %1039 = vmatmul.bf16.gmra.mxu0 %v1020
        %v1040 = vpop.f32.mrf.mxu0
        %v1041 = vadd.f32 %v993, %v1040
        %v1042 = vpop.f32.mrf.mxu0
        %v1043 = vadd.f32 %v993, %v1042
        %1044 = vmatmul.bf16.gmra.mxu0 %v1023
        %v1045 = vpop.f32.mrf.mxu0
        %v1046 = vadd.f32 %v993, %v1045
        %v1047 = vpop.f32.mrf.mxu0
        %v1048 = vadd.f32 %v993, %v1047
        %1049 = vmatmul.bf16.gmra.mxu0 %v1026
        %v1050 = vpop.f32.mrf.mxu0
        %v1051 = vadd.f32 %v993, %v1050
        %v1052 = vpop.f32.mrf.mxu0
        %v1053 = vadd.f32 %v993, %v1052
        %1054 = vmatmul.bf16.gmra.mxu0 %v1029
        %v1055 = vpop.f32.mrf.mxu0
        %v1056 = vadd.f32 %v993, %v1055
        %v1057 = vpop.f32.mrf.mxu0
        %v1058 = vadd.f32 %v993, %v1057
        %1059 = vdwg.mxu0
        %v1060 = vadd.f32 %v329, %v1041
        %v1061 = vadd.f32 %v330, %v1043
        %v1062 = vadd.f32 %v331, %v1046
        %v1063 = vadd.f32 %v332, %v1048
        %v1064 = vadd.f32 %v333, %v1051
        %v1065 = vadd.f32 %v334, %v1053
        %v1066 = vadd.f32 %v335, %v1056
        %v1067 = vadd.f32 %v336, %v1058
        %1068 = vst.msk [vmem:[%s327] sm:$0xff] %vm393, %v1060
        %1069 = vst.msk [vmem:[%s327 + $0x8] sm:$0xff] %vm393, %v1061
        %1070 = vst.msk [vmem:[%s327 + $0x10] sm:$0xff] %vm393, %v1062
        %1071 = vst.msk [vmem:[%s327 + $0x18] sm:$0xff] %vm393, %v1063
        %1072 = vst.msk [vmem:[%s327 + $0x20] sm:$0xff] %vm393, %v1064
        %1073 = vst.msk [vmem:[%s327 + $0x28] sm:$0xff] %vm393, %v1065
        %1074 = vst.msk [vmem:[%s327 + $0x30] sm:$0xff] %vm393, %v1066
        %1075 = vst.msk [vmem:[%s327 + $0x38] sm:$0xff] %vm393, %v1067
        %p1076 = scmp.lt.s32.totalorder %s22, 1
        %s1077 = scalar_select %p1076, %s22, 1
        %s1078 = smul.addr %s1077, 8
        %s1079 = smul.addr %s1078, 8
        %s1080 = scalar_lea.vmem %s8, %s1079
        // Predicated region
        $region57: #{ms_block_spike_sepconv.3} parent=51 // pred_check
          %p1081 = pneg %p213
        $region58: #{ms_block_spike_sepconv.3} parent=51 // pred_check_branch
          %1083 = sbr.rel (%p1081) target = $region60
        $region59: #{ms_block_spike_sepconv.3} parent=51 // pred_region
          _
        $region60: #{ms_block_spike_sepconv.3} parent=51 // pred_fallthru
          _
      $region52: #{ms_block_spike_sepconv.3} parent=5 // pred_fallthru
        _
      %p1084 = scmp.le.s32.totalorder 2, %s17
      // Predicated region
      $region61: #{ms_block_spike_sepconv.3} parent=5 // pred_check
        %p1085 = pneg %p1084
      $region62: #{ms_block_spike_sepconv.3} parent=5 // pred_check_branch
        %1087 = sbr.rel (%p1085) target = $region64
      $region63: #{ms_block_spike_sepconv.3} parent=5 // pred_region
        %s1088 = ssub.s32 %s17, 2
        // Predicated region
        $region65: #{ms_block_spike_sepconv.3} parent=63 // pred_check
          %p1089 = pneg %p219
        $region66: #{ms_block_spike_sepconv.3} parent=63 // pred_check_branch
          %1091 = sbr.rel (%p1089) target = $region68
        $region67: #{ms_block_spike_sepconv.3} parent=63 // pred_region
          %p1092 = scmp.lt.s32.totalorder %s23, 1
          %s1093 = scalar_select %p1092, %s23, 1
          %s1094 = smul.addr %s1093, 8
          %s1095 = smul.addr %s1094, 8
          %s1096 = scalar_lea.vmem %s8, %s1095
        $region68: #{ms_block_spike_sepconv.3} parent=63 // pred_fallthru
          _
      $region64: #{ms_block_spike_sepconv.3} parent=5 // pred_fallthru
        _
    $region6: #{ms_block_spike_sepconv.3} parent=1 // loop_footer
      %s21 = sadd.s32 1, %s17
    $region7: #{ms_block_spike_sepconv.3} parent=1 // loop_footer_branch
      %16 = sbr.rel target = $region3
    $region8: #{ms_block_spike_sepconv.3} parent=1 // loop_exit
      _
    %1097 = vsyncpa [#allocation4], 1
    %s1098 = scalar_lea.sflag [#allocation4], 1
    %1099 = vsyncpa %s1098, 1

// kernel: ms_block_spike_sepconv.4
$region0: #{ms_block_spike_sepconv.4}
  #allocation0 [shape = 'u32[]', space=smem, size = 0x4, offset = 0x4, fixed_abs, tag = 'smem constant byte address 0x4 - core index']
  #allocation1 [shape = 'u32[72,128]{1,0:T(1,128)}', space=vmem, size = 0x9000, scoped, tag = 'internal scratch']
  #allocation2 [shape = 'f32[64,192]{1,0:T(8,128)}', space=vmem, size = 0x10000, scoped, tag = 'scratch operand']
  #allocation3 [shape = 'f32[64,128]{1,0:T(8,128)}', space=vmem, size = 0x8000, scoped, tag = 'scratch operand']
  %s0 = inlined_call_operand.vmem [shape: f32[2,64,32], index: 0, kind: input, shape index: {}]
  %s1 = inlined_call_operand.vmem [shape: bf16[32,192], index: 1, kind: input, shape index: {}]
  %s2 = inlined_call_operand.vmem [shape: f32[1,192], index: 2, kind: input, shape index: {}]
  %s3 = inlined_call_operand.vmem [shape: bf16[128,32], index: 3, kind: input, shape index: {}]
  %s4 = inlined_call_operand.vmem [shape: f32[1,32], index: 4, kind: input, shape index: {}]
  %s5 = inlined_call_operand.vmem [shape: f32[2,64,32], index: 5, kind: output, shape index: {}]
  %s6 = sld [smem:[#allocation0]]
  $region53: #{ms_block_spike_sepconv.4} parent=0
    _
  %s8 = ssub.s32 1, %s6
  %s9 = scalar_select 0, %s8, %s6
  loop: start=0, step=1, limit=4
  $region2: #{ms_block_spike_sepconv.4} parent=0 // loop_pre_header
    _
  $region3: #{ms_block_spike_sepconv.4} parent=0 // loop_header
    %s11 = sphi 0, %s15
    %p12 = scmp.ge.s32.totalorder %s11, 4
    %s21 = sphi 0, %s23
    %s24 = sphi 0, %s21
    %s25 = sphi 0, %s24
    %s41 = sphi 0, %s25
    %s45 = sphi 0, %s45
    %s47 = sphi 0, %s45
    %s48 = sphi 0, %s47
    %s62 = sphi 0, %s48
    %s66 = sphi 0, %s66
    %s68 = sphi 0, %s66
    %s69 = sphi 0, %s68
    %s83 = sphi 0, %s69
    %s87 = sphi 0, %s87
    %s89 = sphi 0, %s87
    %s90 = sphi 0, %s89
    %s104 = sphi 0, %s90
    %s108 = sphi 0, %s108
    %s110 = sphi 0, %s108
    %s111 = sphi 0, %s110
    %s125 = sphi 0, %s111
    %s131 = sphi 0, %s133
    %s134 = sphi 0, %s131
    %s135 = sphi 0, %s134
    %s151 = sphi 0, %s135
  $region4: #{ms_block_spike_sepconv.4} parent=0 // loop_header_branch
    %14 = sbr.rel (%p12) target = $region8
  $region5: #{ms_block_spike_sepconv.4} parent=0 // loop_body
    %s16 = ssub.s32 %s11, 1
    %s17 = ssub.s32 %s11, 2
    %s18 = sadd.s32 %s11, 1
    %s19 = ssub.s32 %s11, %s18
    %p20 = scmp.eq.s32.totalorder %s19, 0
    %s22 = sadd.s32 %s21, 1
    %s23 = scalar_select %p20, %s21, %s22
    %p26 = pneg %p20
    %p27 = scmp.eq.s32.totalorder %s11, 1
    %p28 = por %p26, %p27
    %p29 = scmp.ne.s32.totalorder %s21, %s24
    %p30 = scmp.eq.s32.totalorder %s11, 0
    %p31 = por %p29, %p30
    %p32 = scmp.ne.s32.totalorder %s21, %s24
    %p33 = scmp.eq.s32.totalorder %s16, 1
    %p34 = por %p32, %p33
    %p35 = scmp.ne.s32.totalorder %s24, %s25
    %p36 = scmp.eq.s32.totalorder %s16, 0
    %p37 = por %p35, %p36
    %p38 = scmp.ne.s32.totalorder %s24, %s25
    %p39 = scmp.eq.s32.totalorder %s17, 1
    %p40 = por %p38, %p39
    %p42 = scmp.ne.s32.totalorder %s25, %s41
    %p43 = scmp.eq.s32.totalorder %s17, 0
    %p44 = por %p42, %p43
    %s46 = sadd.s32 %s45, 1
    %p49 = scmp.eq.s32.totalorder %s11, 1
    %p50 = scmp.ne.s32.totalorder %s45, %s47
    %p51 = scmp.eq.s32.totalorder %s11, 0
    %p52 = por %p50, %p51
    %p53 = scmp.ne.s32.totalorder %s45, %s47
    %p54 = scmp.eq.s32.totalorder %s16, 1
    %p55 = por %p53, %p54
    %p56 = scmp.ne.s32.totalorder %s47, %s48
    %p57 = scmp.eq.s32.totalorder %s16, 0
    %p58 = por %p56, %p57
    %p59 = scmp.ne.s32.totalorder %s47, %s48
    %p60 = scmp.eq.s32.totalorder %s17, 1
    %p61 = por %p59, %p60
    %p63 = scmp.ne.s32.totalorder %s48, %s62
    %p64 = scmp.eq.s32.totalorder %s17, 0
    %p65 = por %p63, %p64
    %s67 = sadd.s32 %s66, 1
    %p70 = scmp.eq.s32.totalorder %s11, 1
    %p71 = scmp.ne.s32.totalorder %s66, %s68
    %p72 = scmp.eq.s32.totalorder %s11, 0
    %p73 = por %p71, %p72
    %p74 = scmp.ne.s32.totalorder %s66, %s68
    %p75 = scmp.eq.s32.totalorder %s16, 1
    %p76 = por %p74, %p75
    %p77 = scmp.ne.s32.totalorder %s68, %s69
    %p78 = scmp.eq.s32.totalorder %s16, 0
    %p79 = por %p77, %p78
    %p80 = scmp.ne.s32.totalorder %s68, %s69
    %p81 = scmp.eq.s32.totalorder %s17, 1
    %p82 = por %p80, %p81
    %p84 = scmp.ne.s32.totalorder %s69, %s83
    %p85 = scmp.eq.s32.totalorder %s17, 0
    %p86 = por %p84, %p85
    %s88 = sadd.s32 %s87, 1
    %p91 = scmp.eq.s32.totalorder %s11, 1
    %p92 = scmp.ne.s32.totalorder %s87, %s89
    %p93 = scmp.eq.s32.totalorder %s11, 0
    %p94 = por %p92, %p93
    %p95 = scmp.ne.s32.totalorder %s87, %s89
    %p96 = scmp.eq.s32.totalorder %s16, 1
    %p97 = por %p95, %p96
    %p98 = scmp.ne.s32.totalorder %s89, %s90
    %p99 = scmp.eq.s32.totalorder %s16, 0
    %p100 = por %p98, %p99
    %p101 = scmp.ne.s32.totalorder %s89, %s90
    %p102 = scmp.eq.s32.totalorder %s17, 1
    %p103 = por %p101, %p102
    %p105 = scmp.ne.s32.totalorder %s90, %s104
    %p106 = scmp.eq.s32.totalorder %s17, 0
    %p107 = por %p105, %p106
    %s109 = sadd.s32 %s108, 1
    %p112 = scmp.eq.s32.totalorder %s11, 1
    %p113 = scmp.ne.s32.totalorder %s108, %s110
    %p114 = scmp.eq.s32.totalorder %s11, 0
    %p115 = por %p113, %p114
    %p116 = scmp.ne.s32.totalorder %s108, %s110
    %p117 = scmp.eq.s32.totalorder %s16, 1
    %p118 = por %p116, %p117
    %p119 = scmp.ne.s32.totalorder %s110, %s111
    %p120 = scmp.eq.s32.totalorder %s16, 0
    %p121 = por %p119, %p120
    %p122 = scmp.ne.s32.totalorder %s110, %s111
    %p123 = scmp.eq.s32.totalorder %s17, 1
    %p124 = por %p122, %p123
    %p126 = scmp.ne.s32.totalorder %s111, %s125
    %p127 = scmp.eq.s32.totalorder %s17, 0
    %p128 = por %p126, %p127
    %s129 = ssub.s32 %s11, %s18
    %p130 = scmp.eq.s32.totalorder %s129, 0
    %s132 = sadd.s32 %s131, 1
    %s133 = scalar_select %p130, %s131, %s132
    %p136 = pneg %p130
    %p137 = scmp.eq.s32.totalorder %s11, 1
    %p138 = por %p136, %p137
    %p139 = scmp.ne.s32.totalorder %s131, %s134
    %p140 = scmp.eq.s32.totalorder %s11, 0
    %p141 = por %p139, %p140
    %p142 = scmp.ne.s32.totalorder %s131, %s134
    %p143 = scmp.eq.s32.totalorder %s16, 1
    %p144 = por %p142, %p143
    %p145 = scmp.ne.s32.totalorder %s134, %s135
    %p146 = scmp.eq.s32.totalorder %s16, 0
    %p147 = por %p145, %p146
    %p148 = scmp.ne.s32.totalorder %s134, %s135
    %p149 = scmp.eq.s32.totalorder %s17, 1
    %p150 = por %p148, %p149
    %p152 = scmp.ne.s32.totalorder %s135, %s151
    %p153 = scmp.eq.s32.totalorder %s17, 0
    %p154 = por %p152, %p153
    %p155 = scmp.le.s32.totalorder 1, %s11
    %p156 = scmp.lt.s32.totalorder %s11, 3
    %p157 = pnand %p155, %p156
    %p158 = pneg %p157
    // Predicated region
    $region9: #{ms_block_spike_sepconv.4} parent=5 // pred_check
      _
    $region10: #{ms_block_spike_sepconv.4} parent=5 // pred_check_branch
      %160 = sbr.rel (%p157) target = $region12
    $region11: #{ms_block_spike_sepconv.4} parent=5 // pred_region
      %s161 = ssub.s32 %s11, 1
      // Predicated region
      $region13: #{ms_block_spike_sepconv.4} parent=11 // pred_check
        %p162 = pneg %p58
      $region14: #{ms_block_spike_sepconv.4} parent=11 // pred_check_branch
        %164 = sbr.rel (%p162) target = $region16
      $region15: #{ms_block_spike_sepconv.4} parent=11 // pred_region
        _
      $region16: #{ms_block_spike_sepconv.4} parent=11 // pred_fallthru
        _
      // Predicated region
      $region17: #{ms_block_spike_sepconv.4} parent=11 // pred_check
        %p165 = pneg %p79
      $region18: #{ms_block_spike_sepconv.4} parent=11 // pred_check_branch
        %167 = sbr.rel (%p165) target = $region20
      $region19: #{ms_block_spike_sepconv.4} parent=11 // pred_region
        _
      $region20: #{ms_block_spike_sepconv.4} parent=11 // pred_fallthru
        _
      // Predicated region
      $region21: #{ms_block_spike_sepconv.4} parent=11 // pred_check
        %p168 = pneg %p100
      $region22: #{ms_block_spike_sepconv.4} parent=11 // pred_check_branch
        %170 = sbr.rel (%p168) target = $region24
      $region23: #{ms_block_spike_sepconv.4} parent=11 // pred_region
        _
      $region24: #{ms_block_spike_sepconv.4} parent=11 // pred_fallthru
        _
      // Predicated region
      $region25: #{ms_block_spike_sepconv.4} parent=11 // pred_check
        %p171 = pneg %p121
      $region26: #{ms_block_spike_sepconv.4} parent=11 // pred_check_branch
        %173 = sbr.rel (%p171) target = $region28
      $region27: #{ms_block_spike_sepconv.4} parent=11 // pred_region
        _
      $region28: #{ms_block_spike_sepconv.4} parent=11 // pred_fallthru
        _
    $region12: #{ms_block_spike_sepconv.4} parent=5 // pred_fallthru
      _
    %p174 = scmp.lt.s32.totalorder %s11, 2
    // Predicated region
    $region29: #{ms_block_spike_sepconv.4} parent=5 // pred_check
      %p175 = pneg %p174
    $region30: #{ms_block_spike_sepconv.4} parent=5 // pred_check_branch
      %177 = sbr.rel (%p175) target = $region32
    $region31: #{ms_block_spike_sepconv.4} parent=5 // pred_region
      // Predicated region
      $region33: #{ms_block_spike_sepconv.4} parent=31 // pred_check
        %p178 = pneg %p31
      $region34: #{ms_block_spike_sepconv.4} parent=31 // pred_check_branch
        %180 = sbr.rel (%p178) target = $region36
      $region35: #{ms_block_spike_sepconv.4} parent=31 // pred_region
        %p181 = scmp.lt.s32.totalorder %s11, 1
        %s182 = scalar_select %p181, %s11, 1
        %s183 = smul.addr %s182, 8
        %s184 = smul.addr %s183, 8
        %s185 = scalar_lea.vmem %s0, %s184
      $region36: #{ms_block_spike_sepconv.4} parent=31 // pred_fallthru
        _
    $region32: #{ms_block_spike_sepconv.4} parent=5 // pred_fallthru
      _
    %p186 = scmp.le.s32.totalorder 1, %s11
    %p187 = scmp.lt.s32.totalorder %s11, 3
    %p188 = pnand %p186, %p187
    %p189 = pneg %p188
    // Predicated region
    $region37: #{ms_block_spike_sepconv.4} parent=5 // pred_check
      _
    $region38: #{ms_block_spike_sepconv.4} parent=5 // pred_check_branch
      %191 = sbr.rel (%p188) target = $region40
    $region39: #{ms_block_spike_sepconv.4} parent=5 // pred_region
      %s192 = ssub.s32 %s11, 1
      %p193 = scmp.lt.s32.totalorder %s16, 1
      %s194 = scalar_select %p193, %s16, 1
      %s195 = smul.addr %s194, 8
      %s196 = smul.addr %s195, 8
      %s197 = scalar_lea.vmem %s0, %s196
      %p198 = pneg %p37
      %p199 = pneg %p34
      %p200 = pneg %p58
      %p201 = pneg %p55
      %p202 = pneg %p79
      %p203 = pneg %p76
      %p204 = pneg %p100
      %p205 = pneg %p97
      %p206 = pneg %p121
      %p207 = pneg %p118
      %p208 = pneg %p147
      %p209 = pneg %p144
      %p210 = scmp.lt.s32.totalorder %s16, 1
      %s211 = scalar_select %p210, %s16, 1
      %s212 = smul.addr %s211, 8
      %s213 = smul.addr %s212, 8
      %s214 = scalar_lea.vmem %s5, %s213
      %p215 = scmp.lt.s32.totalorder %s16, 1
      %s216 = scalar_select %p215, %s16, 1
      %s217 = smul.addr %s216, 8
      %s218 = smul.addr %s217, 8
      %s219 = scalar_lea.vmem %s0, %s218
      %p220 = scmp.lt.s32.totalorder %s16, 1
      %s221 = scalar_select %p220, %s16, 1
      %s222 = smul.addr %s221, 8
      %s223 = smul.addr %s222, 8
      %s224 = scalar_lea.vmem %s5, %s223
      %v226 = vld [vmem:[%s219] sm:$0xff]
      %v227 = vld [vmem:[%s219 + $0x8] sm:$0xff]
      %v228 = vld [vmem:[%s219 + $0x10] sm:$0xff]
      %v229 = vld [vmem:[%s219 + $0x18] sm:$0xff]
      %v230 = vld [vmem:[%s219 + $0x20] sm:$0xff]
      %v231 = vld [vmem:[%s219 + $0x28] sm:$0xff]
      %v232 = vld [vmem:[%s219 + $0x30] sm:$0xff]
      %v233 = vld [vmem:[%s219 + $0x38] sm:$0xff]
      %v234 = vmax.f32 %v226, 0.0
      %v235 = vmax.f32 %v227, 0.0
      %v236 = vmax.f32 %v228, 0.0
      %v237 = vmax.f32 %v229, 0.0
      %v238 = vmax.f32 %v230, 0.0
      %v239 = vmax.f32 %v231, 0.0
      %v240 = vmax.f32 %v232, 0.0
      %v241 = vmax.f32 %v233, 0.0
      %v242 = vmin.f32 %v234, 4.0
      %v243 = vmin.f32 %v235, 4.0
      %v244 = vmin.f32 %v236, 4.0
      %v245 = vmin.f32 %v237, 4.0
      %v246 = vmin.f32 %v238, 4.0
      %v247 = vmin.f32 %v239, 4.0
      %v248 = vmin.f32 %v240, 4.0
      %v249 = vmin.f32 %v241, 4.0
      %v250 = vround.ne.pseudo %v242
      %v251 = vround.ne.pseudo %v243
      %v252 = vround.ne.pseudo %v244
      %v253 = vround.ne.pseudo %v245
      %v254 = vround.ne.pseudo %v246
      %v255 = vround.ne.pseudo %v247
      %v256 = vround.ne.pseudo %v248
      %v257 = vround.ne.pseudo %v249
      %v258 = vmul.f32 %v250, 0.25
      %v259 = vmul.f32 %v251, 0.25
      %v260 = vmul.f32 %v252, 0.25
      %v261 = vmul.f32 %v253, 0.25
      %v262 = vmul.f32 %v254, 0.25
      %v263 = vmul.f32 %v255, 0.25
      %v264 = vmul.f32 %v256, 0.25
      %v265 = vmul.f32 %v257, 0.25
      %v266 = vpack.c.bf16 %v259, %v258
      %v267 = vpack.c.bf16 %v261, %v260
      %v268 = vpack.c.bf16 %v263, %v262
      %v269 = vpack.c.bf16 %v265, %v264
      %v270 = vld [vmem:[%s1] sm:$0xff]
      %v271 = vld [vmem:[%s1 + $0x8] sm:$0xff]
      %v272 = vld [vmem:[%s1 + $0x10] sm:$0xff]
      %v273 = vld [vmem:[%s1 + $0x18] sm:$0xff]
      %v274 = vld [vmem:[%s2] sm:$0x3]
      %v276 = vperm.slane %v274, 0
      %v277 = vperm.slane %v274, 1
      %v284 = vunpack.c.l.b16 %v270
      %v285 = vunpack.c.h.b16 %v270
      %v286 = vunpack.c.l.b16 %v271
      %v287 = vunpack.c.h.b16 %v271
      %v288 = vunpack.c.l.b16 %v272
      %v289 = vunpack.c.h.b16 %v272
      %v290 = vunpack.c.l.b16 %v273
      %v291 = vunpack.c.h.b16 %v273
      %v292 = vpack.c.b16 %v286, %v284
      %v293 = vpack.c.b16 %v287, %v285
      %v294 = vpack.c.b16 %v290, %v288
      %v295 = vpack.c.b16 %v291, %v289
      %vm300 = vcmask 261120
      %v302 = vsel %vm300, %v266, 0
      %v305 = vsel %vm300, %v267, 0
      %v308 = vsel %vm300, %v268, 0
      %v311 = vsel %vm300, %v269, 0
      %313 = vmatpush.bf16.msra.mxu0 0
      %314 = vmatpush.bf16.msra.mxu0 0
      %315 = vmatpush.bf16.msra.mxu0 0
      %316 = vmatpush.bf16.msra.mxu0 0
      %317 = vmatpush.bf16.msra.mxu0 0
      %318 = vmatpush.bf16.msra.mxu0 0
      %319 = vmatpush.bf16.msra.mxu0 %v294
      %320 = vmatpush.bf16.msra.mxu0 %v292
      %321 = vmatmul.bf16.gmra.mxu0 %v302
      %v322 = vpop.f32.mrf.mxu0
      %v323 = vadd.f32 %v276, %v322
      %v324 = vpop.f32.mrf.mxu0
      %v325 = vadd.f32 %v276, %v324
      %326 = vmatmul.bf16.gmra.mxu0 %v305
      %v327 = vpop.f32.mrf.mxu0
      %v328 = vadd.f32 %v276, %v327
      %v329 = vpop.f32.mrf.mxu0
      %v330 = vadd.f32 %v276, %v329
      %331 = vmatmul.bf16.gmra.mxu0 %v308
      %v332 = vpop.f32.mrf.mxu0
      %v333 = vadd.f32 %v276, %v332
      %v334 = vpop.f32.mrf.mxu0
      %v335 = vadd.f32 %v276, %v334
      %336 = vmatmul.bf16.gmra.mxu0 %v311
      %v337 = vpop.f32.mrf.mxu0
      %v338 = vadd.f32 %v276, %v337
      %v339 = vpop.f32.mrf.mxu0
      %v340 = vadd.f32 %v276, %v339
      %341 = vdwg.mxu0
      %342 = vmatpush.bf16.msra.mxu0 0
      %343 = vmatpush.bf16.msra.mxu0 0
      %344 = vmatpush.bf16.msra.mxu0 0
      %345 = vmatpush.bf16.msra.mxu0 0
      %346 = vmatpush.bf16.msra.mxu0 0
      %347 = vmatpush.bf16.msra.mxu0 0
      %348 = vmatpush.bf16.msra.mxu0 %v295
      %349 = vmatpush.bf16.msra.mxu0 %v293
      %350 = vmatmul.bf16.gmra.mxu0 %v302
      %v351 = vpop.f32.mrf.mxu0
      %v352 = vadd.f32 %v277, %v351
      %v353 = vpop.f32.mrf.mxu0
      %v354 = vadd.f32 %v277, %v353
      %355 = vmatmul.bf16.gmra.mxu0 %v305
      %v356 = vpop.f32.mrf.mxu0
      %v357 = vadd.f32 %v277, %v356
      %v358 = vpop.f32.mrf.mxu0
      %v359 = vadd.f32 %v277, %v358
      %360 = vmatmul.bf16.gmra.mxu0 %v308
      %v361 = vpop.f32.mrf.mxu0
      %v362 = vadd.f32 %v277, %v361
      %v363 = vpop.f32.mrf.mxu0
      %v364 = vadd.f32 %v277, %v363
      %365 = vmatmul.bf16.gmra.mxu0 %v311
      %v366 = vpop.f32.mrf.mxu0
      %v367 = vadd.f32 %v277, %v366
      %v368 = vpop.f32.mrf.mxu0
      %v369 = vadd.f32 %v277, %v368
      %370 = vdwg.mxu0
      %371 = vst [vmem:[#allocation2] sm:$0xff] %v323
      %vm372 = vcmask 523264
      %373 = vst.msk [vmem:[#allocation2 + $0x8] sm:$0xff] %vm372, %v352
      %374 = vst [vmem:[#allocation2 + $0x10] sm:$0xff] %v325
      %375 = vst.msk [vmem:[#allocation2 + $0x18] sm:$0xff] %vm372, %v354
      %376 = vst [vmem:[#allocation2 + $0x20] sm:$0xff] %v328
      %377 = vst.msk [vmem:[#allocation2 + $0x28] sm:$0xff] %vm372, %v357
      %378 = vst [vmem:[#allocation2 + $0x30] sm:$0xff] %v330
      %379 = vst.msk [vmem:[#allocation2 + $0x38] sm:$0xff] %vm372, %v359
      %380 = vst [vmem:[#allocation2 + $0x40] sm:$0xff] %v333
      %381 = vst.msk [vmem:[#allocation2 + $0x48] sm:$0xff] %vm372, %v362
      %382 = vst [vmem:[#allocation2 + $0x50] sm:$0xff] %v335
      %383 = vst.msk [vmem:[#allocation2 + $0x58] sm:$0xff] %vm372, %v364
      %384 = vst [vmem:[#allocation2 + $0x60] sm:$0xff] %v338
      %385 = vst.msk [vmem:[#allocation2 + $0x68] sm:$0xff] %vm372, %v367
      %386 = vst [vmem:[#allocation2 + $0x70] sm:$0xff] %v340
      %387 = vst.msk [vmem:[#allocation2 + $0x78] sm:$0xff] %vm372, %v369
      %v388 = vld [vmem:[#allocation2] sm:$0xff]
      %v389 = vld [vmem:[#allocation2 + $0x10] sm:$0xff]
      %v390 = vld [vmem:[#allocation2 + $0x20] sm:$0xff]
      %v391 = vld [vmem:[#allocation2 + $0x30] sm:$0xff]
      %v392 = vld [vmem:[#allocation2 + $0x40] sm:$0xff]
      %v393 = vld [vmem:[#allocation2 + $0x50] sm:$0xff]
      %v394 = vld [vmem:[#allocation2 + $0x60] sm:$0xff]
      %v395 = vld [vmem:[#allocation2 + $0x70] sm:$0xff]
      %v396 = vmax.f32 %v388, 0.0
      %v397 = vmax.f32 %v389, 0.0
      %v398 = vmax.f32 %v390, 0.0
      %v399 = vmax.f32 %v391, 0.0
      %v400 = vmax.f32 %v392, 0.0
      %v401 = vmax.f32 %v393, 0.0
      %v402 = vmax.f32 %v394, 0.0
      %v403 = vmax.f32 %v395, 0.0
      %v404 = vmin.f32 %v396, 4.0
      %v405 = vmin.f32 %v397, 4.0
      %v406 = vmin.f32 %v398, 4.0
      %v407 = vmin.f32 %v399, 4.0
      %v408 = vmin.f32 %v400, 4.0
      %v409 = vmin.f32 %v401, 4.0
      %v410 = vmin.f32 %v402, 4.0
      %v411 = vmin.f32 %v403, 4.0
      %v412 = vround.ne.pseudo %v404
      %v413 = vround.ne.pseudo %v405
      %v414 = vround.ne.pseudo %v406
      %v415 = vround.ne.pseudo %v407
      %v416 = vround.ne.pseudo %v408
      %v417 = vround.ne.pseudo %v409
      %v418 = vround.ne.pseudo %v410
      %v419 = vround.ne.pseudo %v411
      %v420 = vmul.f32 %v412, 0.25
      %v421 = vmul.f32 %v413, 0.25
      %v422 = vmul.f32 %v414, 0.25
      %v423 = vmul.f32 %v415, 0.25
      %v424 = vmul.f32 %v416, 0.25
      %v425 = vmul.f32 %v417, 0.25
      %v426 = vmul.f32 %v418, 0.25
      %v427 = vmul.f32 %v419, 0.25
      %436 = vrot.lane.b32.xlu0 %v420, 96
      %v437 = vpop.permute.xlu0 %436
      %438 = vrot.lane.b32.xlu0 %v421, 96
      %v439 = vpop.permute.xlu0 %438
      %440 = vrot.lane.b32.xlu0 %v422, 96
      %v441 = vpop.permute.xlu0 %440
      %442 = vrot.lane.b32.xlu0 %v423, 96
      %v443 = vpop.permute.xlu0 %442
      %444 = vrot.lane.b32.xlu0 %v424, 96
      %v445 = vpop.permute.xlu0 %444
      %446 = vrot.lane.b32.xlu0 %v425, 96
      %v447 = vpop.permute.xlu0 %446
      %448 = vrot.lane.b32.xlu0 %v426, 96
      %v449 = vpop.permute.xlu0 %448
      %450 = vrot.lane.b32.xlu0 %v427, 96
      %v451 = vpop.permute.xlu0 %450
      %460 = vxpose.xlu0.b32.start [1/16] %v437, 128
      %461 = vxpose.xlu0.b32.cont [2/16] %v439, 128
      %462 = vxpose.xlu0.b32.cont [3/16] %v441, 128
      %463 = vxpose.xlu0.b32.cont [4/16] %v443, 128
      %464 = vxpose.xlu0.b32.cont [5/16] %v445, 128
      %465 = vxpose.xlu0.b32.cont [6/16] %v447, 128
      %466 = vxpose.xlu0.b32.cont [7/16] %v449, 128
      %467 = vxpose.xlu0.b32.cont [8/16] %v451, 128
      %468 = vxpose.xlu0.b32.cont [9/16] 0.0, 128
      %469 = vxpose.xlu0.b32.cont [10/16] 0.0, 128
      %470 = vxpose.xlu0.b32.cont [11/16] 0.0, 128
      %471 = vxpose.xlu0.b32.cont [12/16] 0.0, 128
      %472 = vxpose.xlu0.b32.cont [13/16] 0.0, 128
      %473 = vxpose.xlu0.b32.cont [14/16] 0.0, 128
      %474 = vxpose.xlu0.b32.cont [15/16] 0.0, 128
      %475 = vxpose.xlu0.b32.end [16/16] 0.0, 128
      %v476 = vpop.trf.xlu0
      %v477 = vpop.trf.xlu0
      %v478 = vpop.trf.xlu0
      %v479 = vpop.trf.xlu0
      %v480 = vpop.trf.xlu0
      %v481 = vpop.trf.xlu0
      %v482 = vpop.trf.xlu0
      %v483 = vpop.trf.xlu0
      %v484 = vpop.trf.xlu0
      %v485 = vpop.trf.xlu0
      %v486 = vpop.trf.xlu0
      %v487 = vpop.trf.xlu0
      %v488 = vpop.trf.xlu0
      %v489 = vpop.trf.xlu0
      %v490 = vpop.trf.xlu0
      %v491 = vpop.trf.xlu0
      %492 = vrot.lane.b32.xlu0 %v420, 64
      %v493 = vpop.permute.xlu0 %492
      %494 = vrot.lane.b32.xlu0 %v421, 64
      %v495 = vpop.permute.xlu0 %494
      %496 = vrot.lane.b32.xlu0 %v422, 64
      %v497 = vpop.permute.xlu0 %496
      %498 = vrot.lane.b32.xlu0 %v423, 64
      %v499 = vpop.permute.xlu0 %498
      %500 = vrot.lane.b32.xlu0 %v424, 64
      %v501 = vpop.permute.xlu0 %500
      %502 = vrot.lane.b32.xlu0 %v425, 64
      %v503 = vpop.permute.xlu0 %502
      %504 = vrot.lane.b32.xlu0 %v426, 64
      %v505 = vpop.permute.xlu0 %504
      %506 = vrot.lane.b32.xlu0 %v427, 64
      %v507 = vpop.permute.xlu0 %506
      %v517 = vsel %vm372, %v476, 0
      %519 = vmatpush.msra.mxu0 0.0
      %520 = vmatpush.msra.mxu0 0.0
      %521 = vmatpush.msra.mxu0 0.0
      %522 = vmatpush.msra.mxu0 0.0
      %523 = vmatpush.msra.mxu0 0.0
      %524 = vmatpush.msra.mxu0 0.0
      %525 = vmatpush.msra.mxu0 0.0
      %526 = vmatpush.msra.mxu0 0.0
      %527 = vmatpush.msra.mxu0 %v507
      %528 = vmatpush.msra.mxu0 %v505
      %529 = vmatpush.msra.mxu0 %v503
      %530 = vmatpush.msra.mxu0 %v501
      %531 = vmatpush.msra.mxu0 %v499
      %532 = vmatpush.msra.mxu0 %v497
      %533 = vmatpush.msra.mxu0 %v495
      %534 = vmatpush.msra.mxu0 %v493
      %535 = vmatmul.f32.gmra.mxu0 %v517
      %v536 = vpop.f32.mrf.mxu0
      %v537 = vadd.f32 0.0, %v536
      %538 = vdwg.mxu0
      %vm539 = vcmask 64512
      %v540 = vsel %vm539, %v420, 0
      %v542 = vsel %vm539, %v421, 0
      %v544 = vsel %vm539, %v422, 0
      %v546 = vsel %vm539, %v423, 0
      %v548 = vsel %vm539, %v424, 0
      %v550 = vsel %vm539, %v425, 0
      %v552 = vsel %vm539, %v426, 0
      %v554 = vsel %vm539, %v427, 0
      %556 = vmatpush.msra.mxu0 0.0
      %557 = vmatpush.msra.mxu0 0.0
      %558 = vmatpush.msra.mxu0 0.0
      %559 = vmatpush.msra.mxu0 0.0
      %560 = vmatpush.msra.mxu0 0.0
      %561 = vmatpush.msra.mxu0 0.0
      %562 = vmatpush.msra.mxu0 0.0
      %563 = vmatpush.msra.mxu0 0.0
      %564 = vmatpush.msra.mxu0 0.0
      %565 = vmatpush.msra.mxu0 0.0
      %566 = vmatpush.msra.mxu0 0.0
      %567 = vmatpush.msra.mxu0 0.0
      %568 = vmatpush.msra.mxu0 0.0
      %569 = vmatpush.msra.mxu0 0.0
      %570 = vmatpush.msra.mxu0 0.0
      %571 = vmatpush.msra.mxu0 %v537
      %572 = vmatmul.f32.gmra.mxu0 %v540
      %v573 = vpop.f32.mrf.mxu0
      %v574 = vadd.f32 0.0, %v573
      %575 = vmatmul.f32.gmra.mxu0 %v542
      %v576 = vpop.f32.mrf.mxu0
      %v577 = vadd.f32 0.0, %v576
      %578 = vmatmul.f32.gmra.mxu0 %v544
      %v579 = vpop.f32.mrf.mxu0
      %v580 = vadd.f32 0.0, %v579
      %581 = vmatmul.f32.gmra.mxu0 %v546
      %v582 = vpop.f32.mrf.mxu0
      %v583 = vadd.f32 0.0, %v582
      %584 = vmatmul.f32.gmra.mxu0 %v548
      %v585 = vpop.f32.mrf.mxu0
      %v586 = vadd.f32 0.0, %v585
      %587 = vmatmul.f32.gmra.mxu0 %v550
      %v588 = vpop.f32.mrf.mxu0
      %v589 = vadd.f32 0.0, %v588
      %590 = vmatmul.f32.gmra.mxu0 %v552
      %v591 = vpop.f32.mrf.mxu0
      %v592 = vadd.f32 0.0, %v591
      %593 = vmatmul.f32.gmra.mxu0 %v554
      %v594 = vpop.f32.mrf.mxu0
      %v595 = vadd.f32 0.0, %v594
      %596 = vdwg.mxu0
      %v597 = vmul.f32 %v574, 0.70710677
      %v598 = vmul.f32 %v577, 0.70710677
      %v599 = vmul.f32 %v580, 0.70710677
      %v600 = vmul.f32 %v583, 0.70710677
      %v601 = vmul.f32 %v586, 0.70710677
      %v602 = vmul.f32 %v589, 0.70710677
      %v603 = vmul.f32 %v592, 0.70710677
      %v604 = vmul.f32 %v595, 0.70710677
      %v605 = vmax.f32 %v597, 0.0
      %v606 = vmax.f32 %v598, 0.0
      %v607 = vmax.f32 %v599, 0.0
      %v608 = vmax.f32 %v600, 0.0
      %v609 = vmax.f32 %v601, 0.0
      %v610 = vmax.f32 %v602, 0.0
      %v611 = vmax.f32 %v603, 0.0
      %v612 = vmax.f32 %v604, 0.0
      %v613 = vmin.f32 %v605, 4.0
      %v614 = vmin.f32 %v606, 4.0
      %v615 = vmin.f32 %v607, 4.0
      %v616 = vmin.f32 %v608, 4.0
      %v617 = vmin.f32 %v609, 4.0
      %v618 = vmin.f32 %v610, 4.0
      %v619 = vmin.f32 %v611, 4.0
      %v620 = vmin.f32 %v612, 4.0
      %v621 = vround.ne.pseudo %v613
      %v622 = vround.ne.pseudo %v614
      %v623 = vround.ne.pseudo %v615
      %v624 = vround.ne.pseudo %v616
      %v625 = vround.ne.pseudo %v617
      %v626 = vround.ne.pseudo %v618
      %v627 = vround.ne.pseudo %v619
      %v628 = vround.ne.pseudo %v620
      %v629 = vmul.f32 %v621, 0.25
      %v630 = vmul.f32 %v622, 0.25
      %v631 = vmul.f32 %v623, 0.25
      %v632 = vmul.f32 %v624, 0.25
      %v633 = vmul.f32 %v625, 0.25
      %v634 = vmul.f32 %v626, 0.25
      %v635 = vmul.f32 %v627, 0.25
      %v636 = vmul.f32 %v628, 0.25
      %637 = vst.msk [vmem:[#allocation3] sm:$0xff] %vm300, %v629
      %638 = vst.msk [vmem:[#allocation3 + $0x8] sm:$0xff] %vm300, %v630
      %639 = vst.msk [vmem:[#allocation3 + $0x10] sm:$0xff] %vm300, %v631
      %640 = vst.msk [vmem:[#allocation3 + $0x18] sm:$0xff] %vm300, %v632
      %641 = vst.msk [vmem:[#allocation3 + $0x20] sm:$0xff] %vm300, %v633
      %642 = vst.msk [vmem:[#allocation3 + $0x28] sm:$0xff] %vm300, %v634
      %643 = vst.msk [vmem:[#allocation3 + $0x30] sm:$0xff] %vm300, %v635
      %644 = vst.msk [vmem:[#allocation3 + $0x38] sm:$0xff] %vm300, %v636
      %v645 = vld [vmem:[#allocation2] sm:$0xff]
      %v646 = vld [vmem:[#allocation2 + $0x10] sm:$0xff]
      %v647 = vld [vmem:[#allocation2 + $0x20] sm:$0xff]
      %v648 = vld [vmem:[#allocation2 + $0x30] sm:$0xff]
      %v649 = vld [vmem:[#allocation2 + $0x40] sm:$0xff]
      %v650 = vld [vmem:[#allocation2 + $0x50] sm:$0xff]
      %v651 = vld [vmem:[#allocation2 + $0x60] sm:$0xff]
      %v652 = vld [vmem:[#allocation2 + $0x70] sm:$0xff]
      %v653 = vmax.f32 %v645, 0.0
      %v654 = vmax.f32 %v646, 0.0
      %v655 = vmax.f32 %v647, 0.0
      %v656 = vmax.f32 %v648, 0.0
      %v657 = vmax.f32 %v649, 0.0
      %v658 = vmax.f32 %v650, 0.0
      %v659 = vmax.f32 %v651, 0.0
      %v660 = vmax.f32 %v652, 0.0
      %v661 = vmin.f32 %v653, 4.0
      %v662 = vmin.f32 %v654, 4.0
      %v663 = vmin.f32 %v655, 4.0
      %v664 = vmin.f32 %v656, 4.0
      %v665 = vmin.f32 %v657, 4.0
      %v666 = vmin.f32 %v658, 4.0
      %v667 = vmin.f32 %v659, 4.0
      %v668 = vmin.f32 %v660, 4.0
      %v669 = vround.ne.pseudo %v661
      %v670 = vround.ne.pseudo %v662
      %v671 = vround.ne.pseudo %v663
      %v672 = vround.ne.pseudo %v664
      %v673 = vround.ne.pseudo %v665
      %v674 = vround.ne.pseudo %v666
      %v675 = vround.ne.pseudo %v667
      %v676 = vround.ne.pseudo %v668
      %v677 = vmul.f32 %v669, 0.25
      %v678 = vmul.f32 %v670, 0.25
      %v679 = vmul.f32 %v671, 0.25
      %v680 = vmul.f32 %v672, 0.25
      %v681 = vmul.f32 %v673, 0.25
      %v682 = vmul.f32 %v674, 0.25
      %v683 = vmul.f32 %v675, 0.25
      %v684 = vmul.f32 %v676, 0.25
      %693 = vrot.lane.b32.xlu0 %v677, 88
      %v694 = vpop.permute.xlu0 %693
      %695 = vrot.lane.b32.xlu0 %v678, 88
      %v696 = vpop.permute.xlu0 %695
      %697 = vrot.lane.b32.xlu0 %v679, 88
      %v698 = vpop.permute.xlu0 %697
      %699 = vrot.lane.b32.xlu0 %v680, 88
      %v700 = vpop.permute.xlu0 %699
      %701 = vrot.lane.b32.xlu0 %v681, 88
      %v702 = vpop.permute.xlu0 %701
      %703 = vrot.lane.b32.xlu0 %v682, 88
      %v704 = vpop.permute.xlu0 %703
      %705 = vrot.lane.b32.xlu0 %v683, 88
      %v706 = vpop.permute.xlu0 %705
      %707 = vrot.lane.b32.xlu0 %v684, 88
      %v708 = vpop.permute.xlu0 %707
      %717 = vxpose.xlu0.b32.start [1/16] %v694, 128
      %718 = vxpose.xlu0.b32.cont [2/16] %v696, 128
      %719 = vxpose.xlu0.b32.cont [3/16] %v698, 128
      %720 = vxpose.xlu0.b32.cont [4/16] %v700, 128
      %721 = vxpose.xlu0.b32.cont [5/16] %v702, 128
      %722 = vxpose.xlu0.b32.cont [6/16] %v704, 128
      %723 = vxpose.xlu0.b32.cont [7/16] %v706, 128
      %724 = vxpose.xlu0.b32.cont [8/16] %v708, 128
      %725 = vxpose.xlu0.b32.cont [9/16] 0.0, 128
      %726 = vxpose.xlu0.b32.cont [10/16] 0.0, 128
      %727 = vxpose.xlu0.b32.cont [11/16] 0.0, 128
      %728 = vxpose.xlu0.b32.cont [12/16] 0.0, 128
      %729 = vxpose.xlu0.b32.cont [13/16] 0.0, 128
      %730 = vxpose.xlu0.b32.cont [14/16] 0.0, 128
      %731 = vxpose.xlu0.b32.cont [15/16] 0.0, 128
      %732 = vxpose.xlu0.b32.end [16/16] 0.0, 128
      %v733 = vpop.trf.xlu0
      %v734 = vpop.trf.xlu0
      %v735 = vpop.trf.xlu0
      %v736 = vpop.trf.xlu0
      %v737 = vpop.trf.xlu0
      %v738 = vpop.trf.xlu0
      %v739 = vpop.trf.xlu0
      %v740 = vpop.trf.xlu0
      %v741 = vpop.trf.xlu0
      %v742 = vpop.trf.xlu0
      %v743 = vpop.trf.xlu0
      %v744 = vpop.trf.xlu0
      %v745 = vpop.trf.xlu0
      %v746 = vpop.trf.xlu0
      %v747 = vpop.trf.xlu0
      %v748 = vpop.trf.xlu0
      %749 = vrot.lane.b32.xlu0 %v677, 32
      %v750 = vpop.permute.xlu0 %749
      %751 = vrot.lane.b32.xlu0 %v678, 32
      %v752 = vpop.permute.xlu0 %751
      %753 = vrot.lane.b32.xlu0 %v679, 32
      %v754 = vpop.permute.xlu0 %753
      %755 = vrot.lane.b32.xlu0 %v680, 32
      %v756 = vpop.permute.xlu0 %755
      %757 = vrot.lane.b32.xlu0 %v681, 32
      %v758 = vpop.permute.xlu0 %757
      %759 = vrot.lane.b32.xlu0 %v682, 32
      %v760 = vpop.permute.xlu0 %759
      %761 = vrot.lane.b32.xlu0 %v683, 32
      %v762 = vpop.permute.xlu0 %761
      %763 = vrot.lane.b32.xlu0 %v684, 32
      %v764 = vpop.permute.xlu0 %763
      %v774 = vsel %vm372, %v733, 0
      %776 = vmatpush.msra.mxu0 0.0
      %777 = vmatpush.msra.mxu0 0.0
      %778 = vmatpush.msra.mxu0 0.0
      %779 = vmatpush.msra.mxu0 0.0
      %780 = vmatpush.msra.mxu0 0.0
      %781 = vmatpush.msra.mxu0 0.0
      %782 = vmatpush.msra.mxu0 0.0
      %783 = vmatpush.msra.mxu0 0.0
      %784 = vmatpush.msra.mxu0 %v764
      %785 = vmatpush.msra.mxu0 %v762
      %786 = vmatpush.msra.mxu0 %v760
      %787 = vmatpush.msra.mxu0 %v758
      %788 = vmatpush.msra.mxu0 %v756
      %789 = vmatpush.msra.mxu0 %v754
      %790 = vmatpush.msra.mxu0 %v752
      %791 = vmatpush.msra.mxu0 %v750
      %792 = vmatmul.f32.gmra.mxu0 %v774
      %v793 = vpop.f32.mrf.mxu0
      %v794 = vadd.f32 0.0, %v793
      %795 = vdwg.mxu0
      %796 = vrot.lane.b32.xlu0 %v677, 120
      %v797 = vpop.permute.xlu0 %796
      %798 = vrot.lane.b32.xlu0 %v678, 120
      %v799 = vpop.permute.xlu0 %798
      %800 = vrot.lane.b32.xlu0 %v679, 120
      %v801 = vpop.permute.xlu0 %800
      %802 = vrot.lane.b32.xlu0 %v680, 120
      %v803 = vpop.permute.xlu0 %802
      %804 = vrot.lane.b32.xlu0 %v681, 120
      %v805 = vpop.permute.xlu0 %804
      %806 = vrot.lane.b32.xlu0 %v682, 120
      %v807 = vpop.permute.xlu0 %806
      %808 = vrot.lane.b32.xlu0 %v683, 120
      %v809 = vpop.permute.xlu0 %808
      %810 = vrot.lane.b32.xlu0 %v684, 120
      %v811 = vpop.permute.xlu0 %810
      %v812 = vsel %vm539, %v797, 0
      %v814 = vsel %vm539, %v799, 0
      %v816 = vsel %vm539, %v801, 0
      %v818 = vsel %vm539, %v803, 0
      %v820 = vsel %vm539, %v805, 0
      %v822 = vsel %vm539, %v807, 0
      %v824 = vsel %vm539, %v809, 0
      %v826 = vsel %vm539, %v811, 0
      %828 = vmatpush.msra.mxu0 0.0
      %829 = vmatpush.msra.mxu0 0.0
      %830 = vmatpush.msra.mxu0 0.0
      %831 = vmatpush.msra.mxu0 0.0
      %832 = vmatpush.msra.mxu0 0.0
      %833 = vmatpush.msra.mxu0 0.0
      %834 = vmatpush.msra.mxu0 0.0
      %835 = vmatpush.msra.mxu0 0.0
      %836 = vmatpush.msra.mxu0 0.0
      %837 = vmatpush.msra.mxu0 0.0
      %838 = vmatpush.msra.mxu0 0.0
      %839 = vmatpush.msra.mxu0 0.0
      %840 = vmatpush.msra.mxu0 0.0
      %841 = vmatpush.msra.mxu0 0.0
      %842 = vmatpush.msra.mxu0 0.0
      %843 = vmatpush.msra.mxu0 %v794
      %844 = vmatmul.f32.gmra.mxu0 %v812
      %v845 = vpop.f32.mrf.mxu0
      %v846 = vadd.f32 0.0, %v845
      %847 = vmatmul.f32.gmra.mxu0 %v814
      %v848 = vpop.f32.mrf.mxu0
      %v849 = vadd.f32 0.0, %v848
      %850 = vmatmul.f32.gmra.mxu0 %v816
      %v851 = vpop.f32.mrf.mxu0
      %v852 = vadd.f32 0.0, %v851
      %853 = vmatmul.f32.gmra.mxu0 %v818
      %v854 = vpop.f32.mrf.mxu0
      %v855 = vadd.f32 0.0, %v854
      %856 = vmatmul.f32.gmra.mxu0 %v820
      %v857 = vpop.f32.mrf.mxu0
      %v858 = vadd.f32 0.0, %v857
      %859 = vmatmul.f32.gmra.mxu0 %v822
      %v860 = vpop.f32.mrf.mxu0
      %v861 = vadd.f32 0.0, %v860
      %862 = vmatmul.f32.gmra.mxu0 %v824
      %v863 = vpop.f32.mrf.mxu0
      %v864 = vadd.f32 0.0, %v863
      %865 = vmatmul.f32.gmra.mxu0 %v826
      %v866 = vpop.f32.mrf.mxu0
      %v867 = vadd.f32 0.0, %v866
      %868 = vdwg.mxu0
      %v869 = vmul.f32 %v846, 0.70710677
      %v870 = vmul.f32 %v849, 0.70710677
      %v871 = vmul.f32 %v852, 0.70710677
      %v872 = vmul.f32 %v855, 0.70710677
      %v873 = vmul.f32 %v858, 0.70710677
      %v874 = vmul.f32 %v861, 0.70710677
      %v875 = vmul.f32 %v864, 0.70710677
      %v876 = vmul.f32 %v867, 0.70710677
      %v877 = vmax.f32 %v869, 0.0
      %v878 = vmax.f32 %v870, 0.0
      %v879 = vmax.f32 %v871, 0.0
      %v880 = vmax.f32 %v872, 0.0
      %v881 = vmax.f32 %v873, 0.0
      %v882 = vmax.f32 %v874, 0.0
      %v883 = vmax.f32 %v875, 0.0
      %v884 = vmax.f32 %v876, 0.0
      %v885 = vmin.f32 %v877, 4.0
      %v886 = vmin.f32 %v878, 4.0
      %v887 = vmin.f32 %v879, 4.0
      %v888 = vmin.f32 %v880, 4.0
      %v889 = vmin.f32 %v881, 4.0
      %v890 = vmin.f32 %v882, 4.0
      %v891 = vmin.f32 %v883, 4.0
      %v892 = vmin.f32 %v884, 4.0
      %v893 = vround.ne.pseudo %v885
      %v894 = vround.ne.pseudo %v886
      %v895 = vround.ne.pseudo %v887
      %v896 = vround.ne.pseudo %v888
      %v897 = vround.ne.pseudo %v889
      %v898 = vround.ne.pseudo %v890
      %v899 = vround.ne.pseudo %v891
      %v900 = vround.ne.pseudo %v892
      %v901 = vmul.f32 %v893, 0.25
      %v902 = vmul.f32 %v894, 0.25
      %v903 = vmul.f32 %v895, 0.25
      %v904 = vmul.f32 %v896, 0.25
      %v905 = vmul.f32 %v897, 0.25
      %v906 = vmul.f32 %v898, 0.25
      %v907 = vmul.f32 %v899, 0.25
      %v908 = vmul.f32 %v900, 0.25
      %917 = vrot.lane.b32.xlu0 %v901, 32
      %v918 = vpop.permute.xlu0 %917
      %919 = vrot.lane.b32.xlu0 %v902, 32
      %v920 = vpop.permute.xlu0 %919
      %921 = vrot.lane.b32.xlu0 %v903, 32
      %v922 = vpop.permute.xlu0 %921
      %923 = vrot.lane.b32.xlu0 %v904, 32
      %v924 = vpop.permute.xlu0 %923
      %925 = vrot.lane.b32.xlu0 %v905, 32
      %v926 = vpop.permute.xlu0 %925
      %927 = vrot.lane.b32.xlu0 %v906, 32
      %v928 = vpop.permute.xlu0 %927
      %929 = vrot.lane.b32.xlu0 %v907, 32
      %v930 = vpop.permute.xlu0 %929
      %931 = vrot.lane.b32.xlu0 %v908, 32
      %v932 = vpop.permute.xlu0 %931
      %vm941 = vcmask 523520
      %942 = vst.msk [vmem:[#allocation3] sm:$0xff] %vm941, %v918
      %943 = vst.msk [vmem:[#allocation3 + $0x8] sm:$0xff] %vm941, %v920
      %944 = vst.msk [vmem:[#allocation3 + $0x10] sm:$0xff] %vm941, %v922
      %945 = vst.msk [vmem:[#allocation3 + $0x18] sm:$0xff] %vm941, %v924
      %946 = vst.msk [vmem:[#allocation3 + $0x20] sm:$0xff] %vm941, %v926
      %947 = vst.msk [vmem:[#allocation3 + $0x28] sm:$0xff] %vm941, %v928
      %948 = vst.msk [vmem:[#allocation3 + $0x30] sm:$0xff] %vm941, %v930
      %949 = vst.msk [vmem:[#allocation3 + $0x38] sm:$0xff] %vm941, %v932
      %v950 = vld [vmem:[#allocation2] sm:$0xff]
      %v951 = vld [vmem:[#allocation2 + $0x10] sm:$0xff]
      %v952 = vld [vmem:[#allocation2 + $0x20] sm:$0xff]
      %v953 = vld [vmem:[#allocation2 + $0x30] sm:$0xff]
      %v954 = vld [vmem:[#allocation2 + $0x40] sm:$0xff]
      %v955 = vld [vmem:[#allocation2 + $0x50] sm:$0xff]
      %v956 = vld [vmem:[#allocation2 + $0x60] sm:$0xff]
      %v957 = vld [vmem:[#allocation2 + $0x70] sm:$0xff]
      %v958 = vmax.f32 %v950, 0.0
      %v959 = vmax.f32 %v951, 0.0
      %v960 = vmax.f32 %v952, 0.0
      %v961 = vmax.f32 %v953, 0.0
      %v962 = vmax.f32 %v954, 0.0
      %v963 = vmax.f32 %v955, 0.0
      %v964 = vmax.f32 %v956, 0.0
      %v965 = vmax.f32 %v957, 0.0
      %v966 = vmin.f32 %v958, 4.0
      %v967 = vmin.f32 %v959, 4.0
      %v968 = vmin.f32 %v960, 4.0
      %v969 = vmin.f32 %v961, 4.0
      %v970 = vmin.f32 %v962, 4.0
      %v971 = vmin.f32 %v963, 4.0
      %v972 = vmin.f32 %v964, 4.0
      %v973 = vmin.f32 %v965, 4.0
      %v974 = vround.ne.pseudo %v966
      %v975 = vround.ne.pseudo %v967
      %v976 = vround.ne.pseudo %v968
      %v977 = vround.ne.pseudo %v969
      %v978 = vround.ne.pseudo %v970
      %v979 = vround.ne.pseudo %v971
      %v980 = vround.ne.pseudo %v972
      %v981 = vround.ne.pseudo %v973
      %v982 = vmul.f32 %v974, 0.25
      %v983 = vmul.f32 %v975, 0.25
      %v984 = vmul.f32 %v976, 0.25
      %v985 = vmul.f32 %v977, 0.25
      %v986 = vmul.f32 %v978, 0.25
      %v987 = vmul.f32 %v979, 0.25
      %v988 = vmul.f32 %v980, 0.25
      %v989 = vmul.f32 %v981, 0.25
      %v990 = vld [vmem:[#allocation2 + $0x8] sm:$0xff]
      %v991 = vld [vmem:[#allocation2 + $0x18] sm:$0xff]
      %v992 = vld [vmem:[#allocation2 + $0x28] sm:$0xff]
      %v993 = vld [vmem:[#allocation2 + $0x38] sm:$0xff]
      %v994 = vld [vmem:[#allocation2 + $0x48] sm:$0xff]
      %v995 = vld [vmem:[#allocation2 + $0x58] sm:$0xff]
      %v996 = vld [vmem:[#allocation2 + $0x68] sm:$0xff]
      %v997 = vld [vmem:[#allocation2 + $0x78] sm:$0xff]
      %v998 = vmax.f32 %v990, 0.0
      %v999 = vmax.f32 %v991, 0.0
      %v1000 = vmax.f32 %v992, 0.0
      %v1001 = vmax.f32 %v993, 0.0
      %v1002 = vmax.f32 %v994, 0.0
      %v1003 = vmax.f32 %v995, 0.0
      %v1004 = vmax.f32 %v996, 0.0
      %v1005 = vmax.f32 %v997, 0.0
      %v1006 = vmin.f32 %v998, 4.0
      %v1007 = vmin.f32 %v999, 4.0
      %v1008 = vmin.f32 %v1000, 4.0
      %v1009 = vmin.f32 %v1001, 4.0
      %v1010 = vmin.f32 %v1002, 4.0
      %v1011 = vmin.f32 %v1003, 4.0
      %v1012 = vmin.f32 %v1004, 4.0
      %v1013 = vmin.f32 %v1005, 4.0
      %v1014 = vround.ne.pseudo %v1006
      %v1015 = vround.ne.pseudo %v1007
      %v1016 = vround.ne.pseudo %v1008
      %v1017 = vround.ne.pseudo %v1009
      %v1018 = vround.ne.pseudo %v1010
      %v1019 = vround.ne.pseudo %v1011
      %v1020 = vround.ne.pseudo %v1012
      %v1021 = vround.ne.pseudo %v1013
      %v1022 = vmul.f32 %v1014, 0.25
      %v1023 = vmul.f32 %v1015, 0.25
      %v1024 = vmul.f32 %v1016, 0.25
      %v1025 = vmul.f32 %v1017, 0.25
      %v1026 = vmul.f32 %v1018, 0.25
      %v1027 = vmul.f32 %v1019, 0.25
      %v1028 = vmul.f32 %v1020, 0.25
      %v1029 = vmul.f32 %v1021, 0.25
      %1038 = vrot.lane.b32.xlu0 %v982, 80
      %v1039 = vpop.permute.xlu0 %1038
      %1040 = vrot.lane.b32.xlu0 %v983, 80
      %v1041 = vpop.permute.xlu0 %1040
      %1042 = vrot.lane.b32.xlu0 %v984, 80
      %v1043 = vpop.permute.xlu0 %1042
      %1044 = vrot.lane.b32.xlu0 %v985, 80
      %v1045 = vpop.permute.xlu0 %1044
      %1046 = vrot.lane.b32.xlu0 %v986, 80
      %v1047 = vpop.permute.xlu0 %1046
      %1048 = vrot.lane.b32.xlu0 %v987, 80
      %v1049 = vpop.permute.xlu0 %1048
      %1050 = vrot.lane.b32.xlu0 %v988, 80
      %v1051 = vpop.permute.xlu0 %1050
      %1052 = vrot.lane.b32.xlu0 %v989, 80
      %v1053 = vpop.permute.xlu0 %1052
      %1062 = vxpose.xlu0.b32.start [1/16] %v1039, 128
      %1063 = vxpose.xlu0.b32.cont [2/16] %v1041, 128
      %1064 = vxpose.xlu0.b32.cont [3/16] %v1043, 128
      %1065 = vxpose.xlu0.b32.cont [4/16] %v1045, 128
      %1066 = vxpose.xlu0.b32.cont [5/16] %v1047, 128
      %1067 = vxpose.xlu0.b32.cont [6/16] %v1049, 128
      %1068 = vxpose.xlu0.b32.cont [7/16] %v1051, 128
      %1069 = vxpose.xlu0.b32.cont [8/16] %v1053, 128
      %1070 = vxpose.xlu0.b32.cont [9/16] 0.0, 128
      %1071 = vxpose.xlu0.b32.cont [10/16] 0.0, 128
      %1072 = vxpose.xlu0.b32.cont [11/16] 0.0, 128
      %1073 = vxpose.xlu0.b32.cont [12/16] 0.0, 128
      %1074 = vxpose.xlu0.b32.cont [13/16] 0.0, 128
      %1075 = vxpose.xlu0.b32.cont [14/16] 0.0, 128
      %1076 = vxpose.xlu0.b32.cont [15/16] 0.0, 128
      %1077 = vxpose.xlu0.b32.end [16/16] 0.0, 128
      %v1078 = vpop.trf.xlu0
      %v1079 = vpop.trf.xlu0
      %v1080 = vpop.trf.xlu0
      %v1081 = vpop.trf.xlu0
      %v1082 = vpop.trf.xlu0
      %v1083 = vpop.trf.xlu0
      %v1084 = vpop.trf.xlu0
      %v1085 = vpop.trf.xlu0
      %v1086 = vpop.trf.xlu0
      %v1087 = vpop.trf.xlu0
      %v1088 = vpop.trf.xlu0
      %v1089 = vpop.trf.xlu0
      %v1090 = vpop.trf.xlu0
      %v1091 = vpop.trf.xlu0
      %v1092 = vpop.trf.xlu0
      %v1093 = vpop.trf.xlu0
      %v1095 = vsel %vm372, %v1078, 0
      %1097 = vmatpush.msra.mxu0 0.0
      %1098 = vmatpush.msra.mxu0 0.0
      %1099 = vmatpush.msra.mxu0 0.0
      %1100 = vmatpush.msra.mxu0 0.0
      %1101 = vmatpush.msra.mxu0 0.0
      %1102 = vmatpush.msra.mxu0 0.0
      %1103 = vmatpush.msra.mxu0 0.0
      %1104 = vmatpush.msra.mxu0 0.0
      %1105 = vmatpush.msra.mxu0 %v1029
      %1106 = vmatpush.msra.mxu0 %v1028
      %1107 = vmatpush.msra.mxu0 %v1027
      %1108 = vmatpush.msra.mxu0 %v1026
      %1109 = vmatpush.msra.mxu0 %v1025
      %1110 = vmatpush.msra.mxu0 %v1024
      %1111 = vmatpush.msra.mxu0 %v1023
      %1112 = vmatpush.msra.mxu0 %v1022
      %1113 = vmatmul.f32.gmra.mxu0 %v1095
      %v1114 = vpop.f32.mrf.mxu0
      %v1115 = vadd.f32 0.0, %v1114
      %1116 = vdwg.mxu0
      %1117 = vrot.lane.b32.xlu0 %v982, 112
      %v1118 = vpop.permute.xlu0 %1117
      %1119 = vrot.lane.b32.xlu0 %v983, 112
      %v1120 = vpop.permute.xlu0 %1119
      %1121 = vrot.lane.b32.xlu0 %v984, 112
      %v1122 = vpop.permute.xlu0 %1121
      %1123 = vrot.lane.b32.xlu0 %v985, 112
      %v1124 = vpop.permute.xlu0 %1123
      %1125 = vrot.lane.b32.xlu0 %v986, 112
      %v1126 = vpop.permute.xlu0 %1125
      %1127 = vrot.lane.b32.xlu0 %v987, 112
      %v1128 = vpop.permute.xlu0 %1127
      %1129 = vrot.lane.b32.xlu0 %v988, 112
      %v1130 = vpop.permute.xlu0 %1129
      %1131 = vrot.lane.b32.xlu0 %v989, 112
      %v1132 = vpop.permute.xlu0 %1131
      %v1133 = vsel %vm539, %v1118, 0
      %v1135 = vsel %vm539, %v1120, 0
      %v1137 = vsel %vm539, %v1122, 0
      %v1139 = vsel %vm539, %v1124, 0
      %v1141 = vsel %vm539, %v1126, 0
      %v1143 = vsel %vm539, %v1128, 0
      %v1145 = vsel %vm539, %v1130, 0
      %v1147 = vsel %vm539, %v1132, 0
      %1149 = vmatpush.msra.mxu0 0.0
      %1150 = vmatpush.msra.mxu0 0.0
      %1151 = vmatpush.msra.mxu0 0.0
      %1152 = vmatpush.msra.mxu0 0.0
      %1153 = vmatpush.msra.mxu0 0.0
      %1154 = vmatpush.msra.mxu0 0.0
      %1155 = vmatpush.msra.mxu0 0.0
      %1156 = vmatpush.msra.mxu0 0.0
      %1157 = vmatpush.msra.mxu0 0.0
      %1158 = vmatpush.msra.mxu0 0.0
      %1159 = vmatpush.msra.mxu0 0.0
      %1160 = vmatpush.msra.mxu0 0.0
      %1161 = vmatpush.msra.mxu0 0.0
      %1162 = vmatpush.msra.mxu0 0.0
      %1163 = vmatpush.msra.mxu0 0.0
      %1164 = vmatpush.msra.mxu0 %v1115
      %1165 = vmatmul.f32.gmra.mxu0 %v1133
      %v1166 = vpop.f32.mrf.mxu0
      %v1167 = vadd.f32 0.0, %v1166
      %1168 = vmatmul.f32.gmra.mxu0 %v1135
      %v1169 = vpop.f32.mrf.mxu0
      %v1170 = vadd.f32 0.0, %v1169
      %1171 = vmatmul.f32.gmra.mxu0 %v1137
      %v1172 = vpop.f32.mrf.mxu0
      %v1173 = vadd.f32 0.0, %v1172
      %1174 = vmatmul.f32.gmra.mxu0 %v1139
      %v1175 = vpop.f32.mrf.mxu0
      %v1176 = vadd.f32 0.0, %v1175
      %1177 = vmatmul.f32.gmra.mxu0 %v1141
      %v1178 = vpop.f32.mrf.mxu0
      %v1179 = vadd.f32 0.0, %v1178
      %1180 = vmatmul.f32.gmra.mxu0 %v1143
      %v1181 = vpop.f32.mrf.mxu0
      %v1182 = vadd.f32 0.0, %v1181
      %1183 = vmatmul.f32.gmra.mxu0 %v1145
      %v1184 = vpop.f32.mrf.mxu0
      %v1185 = vadd.f32 0.0, %v1184
      %1186 = vmatmul.f32.gmra.mxu0 %v1147
      %v1187 = vpop.f32.mrf.mxu0
      %v1188 = vadd.f32 0.0, %v1187
      %1189 = vdwg.mxu0
      %v1190 = vmul.f32 %v1167, 0.70710677
      %v1191 = vmul.f32 %v1170, 0.70710677
      %v1192 = vmul.f32 %v1173, 0.70710677
      %v1193 = vmul.f32 %v1176, 0.70710677
      %v1194 = vmul.f32 %v1179, 0.70710677
      %v1195 = vmul.f32 %v1182, 0.70710677
      %v1196 = vmul.f32 %v1185, 0.70710677
      %v1197 = vmul.f32 %v1188, 0.70710677
      %v1198 = vmax.f32 %v1190, 0.0
      %v1199 = vmax.f32 %v1191, 0.0
      %v1200 = vmax.f32 %v1192, 0.0
      %v1201 = vmax.f32 %v1193, 0.0
      %v1202 = vmax.f32 %v1194, 0.0
      %v1203 = vmax.f32 %v1195, 0.0
      %v1204 = vmax.f32 %v1196, 0.0
      %v1205 = vmax.f32 %v1197, 0.0
      %v1206 = vmin.f32 %v1198, 4.0
      %v1207 = vmin.f32 %v1199, 4.0
      %v1208 = vmin.f32 %v1200, 4.0
      %v1209 = vmin.f32 %v1201, 4.0
      %v1210 = vmin.f32 %v1202, 4.0
      %v1211 = vmin.f32 %v1203, 4.0
      %v1212 = vmin.f32 %v1204, 4.0
      %v1213 = vmin.f32 %v1205, 4.0
      %v1214 = vround.ne.pseudo %v1206
      %v1215 = vround.ne.pseudo %v1207
      %v1216 = vround.ne.pseudo %v1208
      %v1217 = vround.ne.pseudo %v1209
      %v1218 = vround.ne.pseudo %v1210
      %v1219 = vround.ne.pseudo %v1211
      %v1220 = vround.ne.pseudo %v1212
      %v1221 = vround.ne.pseudo %v1213
      %v1222 = vmul.f32 %v1214, 0.25
      %v1223 = vmul.f32 %v1215, 0.25
      %v1224 = vmul.f32 %v1216, 0.25
      %v1225 = vmul.f32 %v1217, 0.25
      %v1226 = vmul.f32 %v1218, 0.25
      %v1227 = vmul.f32 %v1219, 0.25
      %v1228 = vmul.f32 %v1220, 0.25
      %v1229 = vmul.f32 %v1221, 0.25
      %1238 = vrot.lane.b32.xlu0 %v1222, 64
      %v1239 = vpop.permute.xlu0 %1238
      %1240 = vrot.lane.b32.xlu0 %v1223, 64
      %v1241 = vpop.permute.xlu0 %1240
      %1242 = vrot.lane.b32.xlu0 %v1224, 64
      %v1243 = vpop.permute.xlu0 %1242
      %1244 = vrot.lane.b32.xlu0 %v1225, 64
      %v1245 = vpop.permute.xlu0 %1244
      %1246 = vrot.lane.b32.xlu0 %v1226, 64
      %v1247 = vpop.permute.xlu0 %1246
      %1248 = vrot.lane.b32.xlu0 %v1227, 64
      %v1249 = vpop.permute.xlu0 %1248
      %1250 = vrot.lane.b32.xlu0 %v1228, 64
      %v1251 = vpop.permute.xlu0 %1250
      %1252 = vrot.lane.b32.xlu0 %v1229, 64
      %v1253 = vpop.permute.xlu0 %1252
      %vm1262 = vcmask 785920
      %1263 = vst.msk [vmem:[#allocation3] sm:$0xff] %vm1262, %v1239
      %1264 = vst.msk [vmem:[#allocation3 + $0x8] sm:$0xff] %vm1262, %v1241
      %1265 = vst.msk [vmem:[#allocation3 + $0x10] sm:$0xff] %vm1262, %v1243
      %1266 = vst.msk [vmem:[#allocation3 + $0x18] sm:$0xff] %vm1262, %v1245
      %1267 = vst.msk [vmem:[#allocation3 + $0x20] sm:$0xff] %vm1262, %v1247
      %1268 = vst.msk [vmem:[#allocation3 + $0x28] sm:$0xff] %vm1262, %v1249
      %1269 = vst.msk [vmem:[#allocation3 + $0x30] sm:$0xff] %vm1262, %v1251
      %1270 = vst.msk [vmem:[#allocation3 + $0x38] sm:$0xff] %vm1262, %v1253
      %v1271 = vld [vmem:[#allocation2] sm:$0xff]
      %v1272 = vld [vmem:[#allocation2 + $0x10] sm:$0xff]
      %v1273 = vld [vmem:[#allocation2 + $0x20] sm:$0xff]
      %v1274 = vld [vmem:[#allocation2 + $0x30] sm:$0xff]
      %v1275 = vld [vmem:[#allocation2 + $0x40] sm:$0xff]
      %v1276 = vld [vmem:[#allocation2 + $0x50] sm:$0xff]
      %v1277 = vld [vmem:[#allocation2 + $0x60] sm:$0xff]
      %v1278 = vld [vmem:[#allocation2 + $0x70] sm:$0xff]
      %v1279 = vmax.f32 %v1271, 0.0
      %v1280 = vmax.f32 %v1272, 0.0
      %v1281 = vmax.f32 %v1273, 0.0
      %v1282 = vmax.f32 %v1274, 0.0
      %v1283 = vmax.f32 %v1275, 0.0
      %v1284 = vmax.f32 %v1276, 0.0
      %v1285 = vmax.f32 %v1277, 0.0
      %v1286 = vmax.f32 %v1278, 0.0
      %v1287 = vmin.f32 %v1279, 4.0
      %v1288 = vmin.f32 %v1280, 4.0
      %v1289 = vmin.f32 %v1281, 4.0
      %v1290 = vmin.f32 %v1282, 4.0
      %v1291 = vmin.f32 %v1283, 4.0
      %v1292 = vmin.f32 %v1284, 4.0
      %v1293 = vmin.f32 %v1285, 4.0
      %v1294 = vmin.f32 %v1286, 4.0
      %v1295 = vround.ne.pseudo %v1287
      %v1296 = vround.ne.pseudo %v1288
      %v1297 = vround.ne.pseudo %v1289
      %v1298 = vround.ne.pseudo %v1290
      %v1299 = vround.ne.pseudo %v1291
      %v1300 = vround.ne.pseudo %v1292
      %v1301 = vround.ne.pseudo %v1293
      %v1302 = vround.ne.pseudo %v1294
      %v1303 = vmul.f32 %v1295, 0.25
      %v1304 = vmul.f32 %v1296, 0.25
      %v1305 = vmul.f32 %v1297, 0.25
      %v1306 = vmul.f32 %v1298, 0.25
      %v1307 = vmul.f32 %v1299, 0.25
      %v1308 = vmul.f32 %v1300, 0.25
      %v1309 = vmul.f32 %v1301, 0.25
      %v1310 = vmul.f32 %v1302, 0.25
      %v1311 = vld [vmem:[#allocation2 + $0x8] sm:$0xff]
      %v1312 = vld [vmem:[#allocation2 + $0x18] sm:$0xff]
      %v1313 = vld [vmem:[#allocation2 + $0x28] sm:$0xff]
      %v1314 = vld [vmem:[#allocation2 + $0x38] sm:$0xff]
      %v1315 = vld [vmem:[#allocation2 + $0x48] sm:$0xff]
      %v1316 = vld [vmem:[#allocation2 + $0x58] sm:$0xff]
      %v1317 = vld [vmem:[#allocation2 + $0x68] sm:$0xff]
      %v1318 = vld [vmem:[#allocation2 + $0x78] sm:$0xff]
      %v1319 = vmax.f32 %v1311, 0.0
      %v1320 = vmax.f32 %v1312, 0.0
      %v1321 = vmax.f32 %v1313, 0.0
      %v1322 = vmax.f32 %v1314, 0.0
      %v1323 = vmax.f32 %v1315, 0.0
      %v1324 = vmax.f32 %v1316, 0.0
      %v1325 = vmax.f32 %v1317, 0.0
      %v1326 = vmax.f32 %v1318, 0.0
      %v1327 = vmin.f32 %v1319, 4.0
      %v1328 = vmin.f32 %v1320, 4.0
      %v1329 = vmin.f32 %v1321, 4.0
      %v1330 = vmin.f32 %v1322, 4.0
      %v1331 = vmin.f32 %v1323, 4.0
      %v1332 = vmin.f32 %v1324, 4.0
      %v1333 = vmin.f32 %v1325, 4.0
      %v1334 = vmin.f32 %v1326, 4.0
      %v1335 = vround.ne.pseudo %v1327
      %v1336 = vround.ne.pseudo %v1328
      %v1337 = vround.ne.pseudo %v1329
      %v1338 = vround.ne.pseudo %v1330
      %v1339 = vround.ne.pseudo %v1331
      %v1340 = vround.ne.pseudo %v1332
      %v1341 = vround.ne.pseudo %v1333
      %v1342 = vround.ne.pseudo %v1334
      %v1343 = vmul.f32 %v1335, 0.25
      %v1344 = vmul.f32 %v1336, 0.25
      %v1345 = vmul.f32 %v1337, 0.25
      %v1346 = vmul.f32 %v1338, 0.25
      %v1347 = vmul.f32 %v1339, 0.25
      %v1348 = vmul.f32 %v1340, 0.25
      %v1349 = vmul.f32 %v1341, 0.25
      %v1350 = vmul.f32 %v1342, 0.25
      %1359 = vrot.lane.b32.xlu0 %v1303, 72
      %v1360 = vpop.permute.xlu0 %1359
      %1361 = vrot.lane.b32.xlu0 %v1304, 72
      %v1362 = vpop.permute.xlu0 %1361
      %1363 = vrot.lane.b32.xlu0 %v1305, 72
      %v1364 = vpop.permute.xlu0 %1363
      %1365 = vrot.lane.b32.xlu0 %v1306, 72
      %v1366 = vpop.permute.xlu0 %1365
      %1367 = vrot.lane.b32.xlu0 %v1307, 72
      %v1368 = vpop.permute.xlu0 %1367
      %1369 = vrot.lane.b32.xlu0 %v1308, 72
      %v1370 = vpop.permute.xlu0 %1369
      %1371 = vrot.lane.b32.xlu0 %v1309, 72
      %v1372 = vpop.permute.xlu0 %1371
      %1373 = vrot.lane.b32.xlu0 %v1310, 72
      %v1374 = vpop.permute.xlu0 %1373
      %1383 = vxpose.xlu0.b32.start [1/16] %v1360, 128
      %1384 = vxpose.xlu0.b32.cont [2/16] %v1362, 128
      %1385 = vxpose.xlu0.b32.cont [3/16] %v1364, 128
      %1386 = vxpose.xlu0.b32.cont [4/16] %v1366, 128
      %1387 = vxpose.xlu0.b32.cont [5/16] %v1368, 128
      %1388 = vxpose.xlu0.b32.cont [6/16] %v1370, 128
      %1389 = vxpose.xlu0.b32.cont [7/16] %v1372, 128
      %1390 = vxpose.xlu0.b32.cont [8/16] %v1374, 128
      %1391 = vxpose.xlu0.b32.cont [9/16] 0.0, 128
      %1392 = vxpose.xlu0.b32.cont [10/16] 0.0, 128
      %1393 = vxpose.xlu0.b32.cont [11/16] 0.0, 128
      %1394 = vxpose.xlu0.b32.cont [12/16] 0.0, 128
      %1395 = vxpose.xlu0.b32.cont [13/16] 0.0, 128
      %1396 = vxpose.xlu0.b32.cont [14/16] 0.0, 128
      %1397 = vxpose.xlu0.b32.cont [15/16] 0.0, 128
      %1398 = vxpose.xlu0.b32.end [16/16] 0.0, 128
      %v1399 = vpop.trf.xlu0
      %v1400 = vpop.trf.xlu0
      %v1401 = vpop.trf.xlu0
      %v1402 = vpop.trf.xlu0
      %v1403 = vpop.trf.xlu0
      %v1404 = vpop.trf.xlu0
      %v1405 = vpop.trf.xlu0
      %v1406 = vpop.trf.xlu0
      %v1407 = vpop.trf.xlu0
      %v1408 = vpop.trf.xlu0
      %v1409 = vpop.trf.xlu0
      %v1410 = vpop.trf.xlu0
      %v1411 = vpop.trf.xlu0
      %v1412 = vpop.trf.xlu0
      %v1413 = vpop.trf.xlu0
      %v1414 = vpop.trf.xlu0
      %1423 = vrot.lane.b32.xlu0 %v1343, 96
      %v1424 = vpop.permute.xlu0 %1423
      %1425 = vrot.lane.b32.xlu0 %v1344, 96
      %v1426 = vpop.permute.xlu0 %1425
      %1427 = vrot.lane.b32.xlu0 %v1345, 96
      %v1428 = vpop.permute.xlu0 %1427
      %1429 = vrot.lane.b32.xlu0 %v1346, 96
      %v1430 = vpop.permute.xlu0 %1429
      %1431 = vrot.lane.b32.xlu0 %v1347, 96
      %v1432 = vpop.permute.xlu0 %1431
      %1433 = vrot.lane.b32.xlu0 %v1348, 96
      %v1434 = vpop.permute.xlu0 %1433
      %1435 = vrot.lane.b32.xlu0 %v1349, 96
      %v1436 = vpop.permute.xlu0 %1435
      %1437 = vrot.lane.b32.xlu0 %v1350, 96
      %v1438 = vpop.permute.xlu0 %1437
      %v1448 = vsel %vm372, %v1399, 0
      %1450 = vmatpush.msra.mxu0 0.0
      %1451 = vmatpush.msra.mxu0 0.0
      %1452 = vmatpush.msra.mxu0 0.0
      %1453 = vmatpush.msra.mxu0 0.0
      %1454 = vmatpush.msra.mxu0 0.0
      %1455 = vmatpush.msra.mxu0 0.0
      %1456 = vmatpush.msra.mxu0 0.0
      %1457 = vmatpush.msra.mxu0 0.0
      %1458 = vmatpush.msra.mxu0 %v1438
      %1459 = vmatpush.msra.mxu0 %v1436
      %1460 = vmatpush.msra.mxu0 %v1434
      %1461 = vmatpush.msra.mxu0 %v1432
      %1462 = vmatpush.msra.mxu0 %v1430
      %1463 = vmatpush.msra.mxu0 %v1428
      %1464 = vmatpush.msra.mxu0 %v1426
      %1465 = vmatpush.msra.mxu0 %v1424
      %1466 = vmatmul.f32.gmra.mxu0 %v1448
      %v1467 = vpop.f32.mrf.mxu0
      %v1468 = vadd.f32 0.0, %v1467
      %1469 = vdwg.mxu0
      %1470 = vrot.lane.b32.xlu0 %v1303, 104
      %v1471 = vpop.permute.xlu0 %1470
      %1472 = vrot.lane.b32.xlu0 %v1304, 104
      %v1473 = vpop.permute.xlu0 %1472
      %1474 = vrot.lane.b32.xlu0 %v1305, 104
      %v1475 = vpop.permute.xlu0 %1474
      %1476 = vrot.lane.b32.xlu0 %v1306, 104
      %v1477 = vpop.permute.xlu0 %1476
      %1478 = vrot.lane.b32.xlu0 %v1307, 104
      %v1479 = vpop.permute.xlu0 %1478
      %1480 = vrot.lane.b32.xlu0 %v1308, 104
      %v1481 = vpop.permute.xlu0 %1480
      %1482 = vrot.lane.b32.xlu0 %v1309, 104
      %v1483 = vpop.permute.xlu0 %1482
      %1484 = vrot.lane.b32.xlu0 %v1310, 104
      %v1485 = vpop.permute.xlu0 %1484
      %v1486 = vsel %vm539, %v1471, 0
      %v1488 = vsel %vm539, %v1473, 0
      %v1490 = vsel %vm539, %v1475, 0
      %v1492 = vsel %vm539, %v1477, 0
      %v1494 = vsel %vm539, %v1479, 0
      %v1496 = vsel %vm539, %v1481, 0
      %v1498 = vsel %vm539, %v1483, 0
      %v1500 = vsel %vm539, %v1485, 0
      %1502 = vmatpush.msra.mxu0 0.0
      %1503 = vmatpush.msra.mxu0 0.0
      %1504 = vmatpush.msra.mxu0 0.0
      %1505 = vmatpush.msra.mxu0 0.0
      %1506 = vmatpush.msra.mxu0 0.0
      %1507 = vmatpush.msra.mxu0 0.0
      %1508 = vmatpush.msra.mxu0 0.0
      %1509 = vmatpush.msra.mxu0 0.0
      %1510 = vmatpush.msra.mxu0 0.0
      %1511 = vmatpush.msra.mxu0 0.0
      %1512 = vmatpush.msra.mxu0 0.0
      %1513 = vmatpush.msra.mxu0 0.0
      %1514 = vmatpush.msra.mxu0 0.0
      %1515 = vmatpush.msra.mxu0 0.0
      %1516 = vmatpush.msra.mxu0 0.0
      %1517 = vmatpush.msra.mxu0 %v1468
      %1518 = vmatmul.f32.gmra.mxu0 %v1486
      %v1519 = vpop.f32.mrf.mxu0
      %v1520 = vadd.f32 0.0, %v1519
      %1521 = vmatmul.f32.gmra.mxu0 %v1488
      %v1522 = vpop.f32.mrf.mxu0
      %v1523 = vadd.f32 0.0, %v1522
      %1524 = vmatmul.f32.gmra.mxu0 %v1490
      %v1525 = vpop.f32.mrf.mxu0
      %v1526 = vadd.f32 0.0, %v1525
      %1527 = vmatmul.f32.gmra.mxu0 %v1492
      %v1528 = vpop.f32.mrf.mxu0
      %v1529 = vadd.f32 0.0, %v1528
      %1530 = vmatmul.f32.gmra.mxu0 %v1494
      %v1531 = vpop.f32.mrf.mxu0
      %v1532 = vadd.f32 0.0, %v1531
      %1533 = vmatmul.f32.gmra.mxu0 %v1496
      %v1534 = vpop.f32.mrf.mxu0
      %v1535 = vadd.f32 0.0, %v1534
      %1536 = vmatmul.f32.gmra.mxu0 %v1498
      %v1537 = vpop.f32.mrf.mxu0
      %v1538 = vadd.f32 0.0, %v1537
      %1539 = vmatmul.f32.gmra.mxu0 %v1500
      %v1540 = vpop.f32.mrf.mxu0
      %v1541 = vadd.f32 0.0, %v1540
      %1542 = vdwg.mxu0
      %v1543 = vmul.f32 %v1520, 0.70710677
      %v1544 = vmul.f32 %v1523, 0.70710677
      %v1545 = vmul.f32 %v1526, 0.70710677
      %v1546 = vmul.f32 %v1529, 0.70710677
      %v1547 = vmul.f32 %v1532, 0.70710677
      %v1548 = vmul.f32 %v1535, 0.70710677
      %v1549 = vmul.f32 %v1538, 0.70710677
      %v1550 = vmul.f32 %v1541, 0.70710677
      %v1551 = vmax.f32 %v1543, 0.0
      %v1552 = vmax.f32 %v1544, 0.0
      %v1553 = vmax.f32 %v1545, 0.0
      %v1554 = vmax.f32 %v1546, 0.0
      %v1555 = vmax.f32 %v1547, 0.0
      %v1556 = vmax.f32 %v1548, 0.0
      %v1557 = vmax.f32 %v1549, 0.0
      %v1558 = vmax.f32 %v1550, 0.0
      %v1559 = vmin.f32 %v1551, 4.0
      %v1560 = vmin.f32 %v1552, 4.0
      %v1561 = vmin.f32 %v1553, 4.0
      %v1562 = vmin.f32 %v1554, 4.0
      %v1563 = vmin.f32 %v1555, 4.0
      %v1564 = vmin.f32 %v1556, 4.0
      %v1565 = vmin.f32 %v1557, 4.0
      %v1566 = vmin.f32 %v1558, 4.0
      %v1567 = vround.ne.pseudo %v1559
      %v1568 = vround.ne.pseudo %v1560
      %v1569 = vround.ne.pseudo %v1561
      %v1570 = vround.ne.pseudo %v1562
      %v1571 = vround.ne.pseudo %v1563
      %v1572 = vround.ne.pseudo %v1564
      %v1573 = vround.ne.pseudo %v1565
      %v1574 = vround.ne.pseudo %v1566
      %v1575 = vmul.f32 %v1567, 0.25
      %v1576 = vmul.f32 %v1568, 0.25
      %v1577 = vmul.f32 %v1569, 0.25
      %v1578 = vmul.f32 %v1570, 0.25
      %v1579 = vmul.f32 %v1571, 0.25
      %v1580 = vmul.f32 %v1572, 0.25
      %v1581 = vmul.f32 %v1573, 0.25
      %v1582 = vmul.f32 %v1574, 0.25
      %1591 = vrot.lane.b32.xlu0 %v1575, 96
      %v1592 = vpop.permute.xlu0 %1591
      %1593 = vrot.lane.b32.xlu0 %v1576, 96
      %v1594 = vpop.permute.xlu0 %1593
      %1595 = vrot.lane.b32.xlu0 %v1577, 96
      %v1596 = vpop.permute.xlu0 %1595
      %1597 = vrot.lane.b32.xlu0 %v1578, 96
      %v1598 = vpop.permute.xlu0 %1597
      %1599 = vrot.lane.b32.xlu0 %v1579, 96
      %v1600 = vpop.permute.xlu0 %1599
      %1601 = vrot.lane.b32.xlu0 %v1580, 96
      %v1602 = vpop.permute.xlu0 %1601
      %1603 = vrot.lane.b32.xlu0 %v1581, 96
      %v1604 = vpop.permute.xlu0 %1603
      %1605 = vrot.lane.b32.xlu0 %v1582, 96
      %v1606 = vpop.permute.xlu0 %1605
      %vm1615 = vcmask 1048320
      %1616 = vst.msk [vmem:[#allocation3] sm:$0xff] %vm1615, %v1592
      %1617 = vst.msk [vmem:[#allocation3 + $0x8] sm:$0xff] %vm1615, %v1594
      %1618 = vst.msk [vmem:[#allocation3 + $0x10] sm:$0xff] %vm1615, %v1596
      %1619 = vst.msk [vmem:[#allocation3 + $0x18] sm:$0xff] %vm1615, %v1598
      %1620 = vst.msk [vmem:[#allocation3 + $0x20] sm:$0xff] %vm1615, %v1600
      %1621 = vst.msk [vmem:[#allocation3 + $0x28] sm:$0xff] %vm1615, %v1602
      %1622 = vst.msk [vmem:[#allocation3 + $0x30] sm:$0xff] %vm1615, %v1604
      %1623 = vst.msk [vmem:[#allocation3 + $0x38] sm:$0xff] %vm1615, %v1606
      %v1624 = vld [vmem:[#allocation3] sm:$0xff]
      %v1625 = vld [vmem:[#allocation3 + $0x8] sm:$0xff]
      %v1626 = vld [vmem:[#allocation3 + $0x10] sm:$0xff]
      %v1627 = vld [vmem:[#allocation3 + $0x18] sm:$0xff]
      %v1628 = vld [vmem:[#allocation3 + $0x20] sm:$0xff]
      %v1629 = vld [vmem:[#allocation3 + $0x28] sm:$0xff]
      %v1630 = vld [vmem:[#allocation3 + $0x30] sm:$0xff]
      %v1631 = vld [vmem:[#allocation3 + $0x38] sm:$0xff]
      %v1632 = vpack.c.bf16 %v1625, %v1624
      %v1633 = vpack.c.bf16 %v1627, %v1626
      %v1634 = vpack.c.bf16 %v1629, %v1628
      %v1635 = vpack.c.bf16 %v1631, %v1630
      %v1636 = vld [vmem:[%s3] sm:$0xf]
      %v1637 = vld [vmem:[%s3 + $0x4] sm:$0xf]
      %v1638 = vld [vmem:[%s3 + $0x8] sm:$0xf]
      %v1639 = vld [vmem:[%s3 + $0xc] sm:$0xf]
      %v1640 = vld [vmem:[%s3 + $0x10] sm:$0xf]
      %v1641 = vld [vmem:[%s3 + $0x14] sm:$0xf]
      %v1642 = vld [vmem:[%s3 + $0x18] sm:$0xf]
      %v1643 = vld [vmem:[%s3 + $0x1c] sm:$0xf]
      %v1644 = vld [vmem:[%s3 + $0x20] sm:$0xf]
      %v1645 = vld [vmem:[%s3 + $0x24] sm:$0xf]
      %v1646 = vld [vmem:[%s3 + $0x28] sm:$0xf]
      %v1647 = vld [vmem:[%s3 + $0x2c] sm:$0xf]
      %v1648 = vld [vmem:[%s3 + $0x30] sm:$0xf]
      %v1649 = vld [vmem:[%s3 + $0x34] sm:$0xf]
      %v1650 = vld [vmem:[%s3 + $0x38] sm:$0xf]
      %v1651 = vld [vmem:[%s3 + $0x3c] sm:$0xf]
      %v1652 = vld [vmem:[%s4] sm:$0x1]
      %v1654 = vperm.slane %v1652, 0
      %v1672 = vunpack.c.l.b16 %v1636
      %v1673 = vunpack.c.l.b16 %v1637
      %v1674 = vunpack.c.l.b16 %v1638
      %v1675 = vunpack.c.l.b16 %v1639
      %v1676 = vunpack.c.l.b16 %v1640
      %v1677 = vunpack.c.l.b16 %v1641
      %v1678 = vunpack.c.l.b16 %v1642
      %v1679 = vunpack.c.l.b16 %v1643
      %v1680 = vunpack.c.l.b16 %v1644
      %v1681 = vunpack.c.l.b16 %v1645
      %v1682 = vunpack.c.l.b16 %v1646
      %v1683 = vunpack.c.l.b16 %v1647
      %v1684 = vunpack.c.l.b16 %v1648
      %v1685 = vunpack.c.l.b16 %v1649
      %v1686 = vunpack.c.l.b16 %v1650
      %v1687 = vunpack.c.l.b16 %v1651
      %v1688 = vpack.c.b16 %v1673, %v1672
      %v1689 = vpack.c.b16 %v1675, %v1674
      %v1690 = vpack.c.b16 %v1677, %v1676
      %v1691 = vpack.c.b16 %v1679, %v1678
      %v1692 = vpack.c.b16 %v1681, %v1680
      %v1693 = vpack.c.b16 %v1683, %v1682
      %v1694 = vpack.c.b16 %v1685, %v1684
      %v1695 = vpack.c.b16 %v1687, %v1686
      %1704 = vmatpush.bf16.msra.mxu0 %v1695
      %1705 = vmatpush.bf16.msra.mxu0 %v1694
      %1706 = vmatpush.bf16.msra.mxu0 %v1693
      %1707 = vmatpush.bf16.msra.mxu0 %v1692
      %1708 = vmatpush.bf16.msra.mxu0 %v1691
      %1709 = vmatpush.bf16.msra.mxu0 %v1690
      %1710 = vmatpush.bf16.msra.mxu0 %v1689
      %1711 = vmatpush.bf16.msra.mxu0 %v1688
      %1712 = vmatmul.bf16.gmra.mxu0 %v1632
      %v1713 = vpop.f32.mrf.mxu0
      %v1714 = vadd.f32 %v1654, %v1713
      %v1715 = vpop.f32.mrf.mxu0
      %v1716 = vadd.f32 %v1654, %v1715
      %1717 = vmatmul.bf16.gmra.mxu0 %v1633
      %v1718 = vpop.f32.mrf.mxu0
      %v1719 = vadd.f32 %v1654, %v1718
      %v1720 = vpop.f32.mrf.mxu0
      %v1721 = vadd.f32 %v1654, %v1720
      %1722 = vmatmul.bf16.gmra.mxu0 %v1634
      %v1723 = vpop.f32.mrf.mxu0
      %v1724 = vadd.f32 %v1654, %v1723
      %v1725 = vpop.f32.mrf.mxu0
      %v1726 = vadd.f32 %v1654, %v1725
      %1727 = vmatmul.bf16.gmra.mxu0 %v1635
      %v1728 = vpop.f32.mrf.mxu0
      %v1729 = vadd.f32 %v1654, %v1728
      %v1730 = vpop.f32.mrf.mxu0
      %v1731 = vadd.f32 %v1654, %v1730
      %1732 = vdwg.mxu0
      %v1733 = vadd.f32 %v226, %v1714
      %v1734 = vadd.f32 %v227, %v1716
      %v1735 = vadd.f32 %v228, %v1719
      %v1736 = vadd.f32 %v229, %v1721
      %v1737 = vadd.f32 %v230, %v1724
      %v1738 = vadd.f32 %v231, %v1726
      %v1739 = vadd.f32 %v232, %v1729
      %v1740 = vadd.f32 %v233, %v1731
      %1741 = vst.msk [vmem:[%s224] sm:$0xff] %vm300, %v1733
      %1742 = vst.msk [vmem:[%s224 + $0x8] sm:$0xff] %vm300, %v1734
      %1743 = vst.msk [vmem:[%s224 + $0x10] sm:$0xff] %vm300, %v1735
      %1744 = vst.msk [vmem:[%s224 + $0x18] sm:$0xff] %vm300, %v1736
      %1745 = vst.msk [vmem:[%s224 + $0x20] sm:$0xff] %vm300, %v1737
      %1746 = vst.msk [vmem:[%s224 + $0x28] sm:$0xff] %vm300, %v1738
      %1747 = vst.msk [vmem:[%s224 + $0x30] sm:$0xff] %vm300, %v1739
      %1748 = vst.msk [vmem:[%s224 + $0x38] sm:$0xff] %vm300, %v1740
      %p1749 = scmp.lt.s32.totalorder %s16, 1
      %s1750 = scalar_select %p1749, %s16, 1
      %s1751 = smul.addr %s1750, 8
      %s1752 = smul.addr %s1751, 8
      %s1753 = scalar_lea.vmem %s5, %s1752
      // Predicated region
      $region41: #{ms_block_spike_sepconv.4} parent=39 // pred_check
        %p1754 = pneg %p144
      $region42: #{ms_block_spike_sepconv.4} parent=39 // pred_check_branch
        %1756 = sbr.rel (%p1754) target = $region44
      $region43: #{ms_block_spike_sepconv.4} parent=39 // pred_region
        _
      $region44: #{ms_block_spike_sepconv.4} parent=39 // pred_fallthru
        _
    $region40: #{ms_block_spike_sepconv.4} parent=5 // pred_fallthru
      _
    %p1757 = scmp.le.s32.totalorder 2, %s11
    // Predicated region
    $region45: #{ms_block_spike_sepconv.4} parent=5 // pred_check
      %p1758 = pneg %p1757
    $region46: #{ms_block_spike_sepconv.4} parent=5 // pred_check_branch
      %1760 = sbr.rel (%p1758) target = $region48
    $region47: #{ms_block_spike_sepconv.4} parent=5 // pred_region
      %s1761 = ssub.s32 %s11, 2
      // Predicated region
      $region49: #{ms_block_spike_sepconv.4} parent=47 // pred_check
        %p1762 = pneg %p150
      $region50: #{ms_block_spike_sepconv.4} parent=47 // pred_check_branch
        %1764 = sbr.rel (%p1762) target = $region52
      $region51: #{ms_block_spike_sepconv.4} parent=47 // pred_region
        %p1765 = scmp.lt.s32.totalorder %s17, 1
        %s1766 = scalar_select %p1765, %s17, 1
        %s1767 = smul.addr %s1766, 8
        %s1768 = smul.addr %s1767, 8
        %s1769 = scalar_lea.vmem %s5, %s1768
      $region52: #{ms_block_spike_sepconv.4} parent=47 // pred_fallthru
        _
    $region48: #{ms_block_spike_sepconv.4} parent=5 // pred_fallthru
      _
  $region6: #{ms_block_spike_sepconv.4} parent=0 // loop_footer
    %s15 = sadd.s32 1, %s11
  $region7: #{ms_block_spike_sepconv.4} parent=0 // loop_footer_branch
    %10 = sbr.rel target = $region3
  $region8: #{ms_block_spike_sepconv.4} parent=0 // loop_exit
    _

</llo_original>
